<compile_context>
chip_gen: v7x
topology: tpu7x:2x2x1
jax: 0.10.0
libtpu: 0.0.40
codegen_flags: <defaults>
</compile_context>

<pallas_src>
import math

import jax
import jax.numpy as jnp
from jax.experimental import pallas as pl
from jax.experimental.pallas import tpu as pltpu

D_MODEL = 32
N_HEADS = 4
HEAD_DIM = D_MODEL // N_HEADS
FF_DIM = 2048
LN_EPS = 1e-5
NEG_INF = -1e30


# ---------------------------------------------------------------------------
# In-kernel helpers (traced inside the Pallas kernel body).
# ---------------------------------------------------------------------------
def _layer_norm(v, g, b):
    mu = jnp.mean(v, axis=-1, keepdims=True)
    c = v - mu
    var = jnp.mean(c * c, axis=-1, keepdims=True)
    return c * jax.lax.rsqrt(var + LN_EPS) * g + b


def _mha(q_in, kv_in, w_qkv, b_qkv, wo, bo, bias):
    """Head-major multi-head attention on (L, D) slabs.

    w_qkv : (3, H, D, Dh) bf16   stacked Q/K/V projections (Q pre-scaled)
    b_qkv : (3, H, 1, Dh) f32
    wo    : (H, Dh, D)    bf16   per-head rows of the output projection
    bias  : (L, L) additive mask or None
    Heads live on a leading axis (free indexing); no lane-axis slices.
    """
    L = q_in.shape[0]
    qb = jnp.broadcast_to(q_in.astype(jnp.bfloat16)[None], (N_HEADS, L, D_MODEL))
    kb = jnp.broadcast_to(kv_in.astype(jnp.bfloat16)[None], (N_HEADS, L, D_MODEL))

    q = jnp.einsum('hnd,hdk->hnk', qb, w_qkv[0],
                   preferred_element_type=jnp.float32) + b_qkv[0]
    k = jnp.einsum('hnd,hdk->hnk', kb, w_qkv[1],
                   preferred_element_type=jnp.float32) + b_qkv[1]
    v = jnp.einsum('hnd,hdk->hnk', kb, w_qkv[2],
                   preferred_element_type=jnp.float32) + b_qkv[2]

    # scores (H, L, L); 1/sqrt(Dh) already folded into the Q projection
    s = jnp.einsum('hnk,hmk->hnm', q.astype(jnp.bfloat16), k.astype(jnp.bfloat16),
                   preferred_element_type=jnp.float32)
    if bias is not None:
        s = s + bias[None]
    s = s - jnp.max(s, axis=-1, keepdims=True)
    e = jnp.exp(s)
    p = e * pl.reciprocal(jnp.sum(e, axis=-1, keepdims=True), approx=True)

    ctx = jnp.einsum('hnm,hmk->hnk', p.astype(jnp.bfloat16), v.astype(jnp.bfloat16),
                     preferred_element_type=jnp.float32)          # (H, L, Dh)
    out = jnp.einsum('hnk,hkd->hnd', ctx.astype(jnp.bfloat16), wo,
                     preferred_element_type=jnp.float32)          # (H, L, D)
    return jnp.sum(out, axis=0) + bo                              # (L, D)


# ---------------------------------------------------------------------------
# Fused decoder kernel: one grid step == one batch element (L, D).
# ---------------------------------------------------------------------------
def decoder_kernel(x_ref, y_ref,
                   w_qkv1_ref, b_qkv1_ref, wo1_ref,
                   w_qkv2_ref, b_qkv2_ref, wo2_ref,
                   wf1_ref, bf1_ref, wf2_ref, small_ref,
                   out_ref):
    x = x_ref[...]                 # (L, D) encoder output ("input" in PyTorch)
    y = y_ref[...]                 # (L, D) shifted decoder outputs
    L = y.shape[0]

    small = small_ref[...]         # packed (9, 32): biases + LayerNorm params
    bo1, g1, be1 = small[0:1], small[1:2], small[2:3]
    bo2, g2, be2 = small[3:4], small[4:5], small[5:6]
    bf2, g3, be3 = small[6:7], small[7:8], small[8:9]

    # Causal additive bias (L, L), generated in-kernel (torch.tril equivalent).
    row = jax.lax.broadcasted_iota(jnp.int32, (L, L), 0)
    col = jax.lax.broadcasted_iota(jnp.int32, (L, L), 1)
    causal_bias = jnp.where(row >= col, jnp.float32(0.0), jnp.float32(NEG_INF))

    # 1) masked self-attention + residual + LayerNorm1
    attn = _mha(y, y, w_qkv1_ref[...], b_qkv1_ref[...], wo1_ref[...], bo1,
                causal_bias)
    y = _layer_norm(attn + y, g1, be1)

    # 2) cross-attention (Q from decoder, K/V from encoder) + residual + LN2.
    #    Within one batch element every query may attend to every encoder
    #    position, so no mask is needed.
    attn = _mha(y, x, w_qkv2_ref[...], b_qkv2_ref[...], wo2_ref[...], bo2, None)
    y = _layer_norm(attn + y, g2, be2)

    # 3) feed-forward: bf16 MXU operands, f32 accumulation & VPU math.
    h = jnp.dot(y.astype(jnp.bfloat16), wf1_ref[...],
                preferred_element_type=jnp.float32) + bf1_ref[...]
    h = jnp.maximum(h, 0.0)
    f = jnp.dot(h.astype(jnp.bfloat16), wf2_ref[...],
                preferred_element_type=jnp.float32) + bf2
    y = _layer_norm(f + y, g3, be3)

    # TODO(synk): pack the (L, 32) output into a 128-lane-dense slab
    # wrapper-side once B*L grows (minor at this size).
    out_ref[...] = y.astype(out_ref.dtype)


# ---------------------------------------------------------------------------
# Wrapper: grid over batch, weights resident (constant index_maps).
# ---------------------------------------------------------------------------
def decoder_forward(x, y, params):
    """x: encoder output [B, L, D]; y: shifted decoder outputs [B, L, D]."""
    B, L, D = y.shape

    act_spec = pl.BlockSpec((None, L, D), lambda b: (b, 0, 0))
    # Weights: full-array blocks with constant index maps -> DMA'd once,
    # resident in VMEM for the whole batch grid.
    weight_specs = [
        pl.BlockSpec(p.shape, lambda b, _nd=p.ndim: (0,) * _nd) for p in params
    ]

    out = pl.pallas_call(
        decoder_kernel,
        out_shape=jax.ShapeDtypeStruct((B, L, D), jnp.float32),
        grid=(B,),
        in_specs=[act_spec, act_spec] + weight_specs,
        out_specs=pl.BlockSpec((None, L, D), lambda b: (b, 0, 0)),
        compiler_params=pltpu.CompilerParams(
            dimension_semantics=("parallel",)),   # both TCs on v7x
    )(x, y, *params)
    return out


# ---------------------------------------------------------------------------
# Deterministic parameter initialization (head-major / packed layout).
# ---------------------------------------------------------------------------
def init_params(key):
    keys = iter(jax.random.split(key, 20))

    def w(shape, scale=0.05):
        return scale * jax.random.normal(next(keys), shape, jnp.float32)

    def b(d, scale=0.01):
        return scale * jax.random.normal(next(keys), (1, d), jnp.float32)

    inv = 1.0 / math.sqrt(HEAD_DIM)              # softmax scale, folded into Q
    ones = jnp.ones((1, D_MODEL), jnp.float32)   # nn.LayerNorm default weight
    zeros = jnp.zeros((1, D_MODEL), jnp.float32)  # nn.LayerNorm default bias

    def head_major_w(W):   # (D, D) -> (H, D, Dh)
        return W.reshape(D_MODEL, N_HEADS, HEAD_DIM).transpose(1, 0, 2)

    def head_major_b(bv):  # (1, D) -> (H, 1, Dh)
        return bv.reshape(1, N_HEADS, HEAD_DIM).transpose(1, 0, 2)

    def attn_params():
        wq, wk, wv = (w((D_MODEL, D_MODEL)), w((D_MODEL, D_MODEL)),
                      w((D_MODEL, D_MODEL)))
        bq, bk, bv = b(D_MODEL), b(D_MODEL), b(D_MODEL)
        w_qkv = jnp.stack([head_major_w(wq * inv),
                           head_major_w(wk),
                           head_major_w(wv)], axis=0).astype(jnp.bfloat16)
        b_qkv = jnp.stack([head_major_b(bq * inv),
                           head_major_b(bk),
                           head_major_b(bv)], axis=0)          # f32
        wo = w((D_MODEL, D_MODEL)).reshape(
            N_HEADS, HEAD_DIM, D_MODEL).astype(jnp.bfloat16)
        bo = b(D_MODEL)
        return w_qkv, b_qkv, wo, bo

    w_qkv1, b_qkv1, wo1, bo1 = attn_params()     # masked self-attention
    w_qkv2, b_qkv2, wo2, bo2 = attn_params()     # cross-attention

    # feed-forward: weights in bf16 (native MXU rate), biases f32
    wf1 = w((D_MODEL, FF_DIM)).astype(jnp.bfloat16)
    bf1 = b(FF_DIM)
    wf2 = w((FF_DIM, D_MODEL)).astype(jnp.bfloat16)
    bf2 = b(D_MODEL)

    # pack all (1, 32) vectors into a single (9, 32) f32 array
    small = jnp.concatenate(
        [bo1, ones, zeros,          # 0: bo1   1: ln1_g  2: ln1_b
         bo2, ones, zeros,          # 3: bo2   4: ln2_g  5: ln2_b
         bf2, ones, zeros],         # 6: bf2   7: ln3_g  8: ln3_b
        axis=0)

    return [w_qkv1, b_qkv1, wo1, w_qkv2, b_qkv2, wo2, wf1, bf1, wf2, small]


if __name__ == "__main__":
    key = jax.random.PRNGKey(0)
    kx, ky, kp = jax.random.split(key, 3)

    B, L = 2, 8
    x = jax.random.normal(kx, (B, L, D_MODEL), jnp.float32)   # encoder output
    y = jax.random.normal(ky, (B, L, D_MODEL), jnp.float32)   # shifted outputs
    params = init_params(kp)

    out = decoder_forward(x, y, params)
    out = jax.block_until_ready(out)
    assert out.shape == (B, L, D_MODEL)
    assert bool(jnp.all(jnp.isfinite(out)))
    print("KERNEL_OK")
</pallas_src>

<mosaic_0001>
module attributes {stable_mosaic.version = 11 : i64} {
  func.func @decoder_kernel(%arg0: i32, %arg1: memref<1x8x32xf32, #tpu.memory_space<vmem>>, %arg2: memref<1x8x32xf32, #tpu.memory_space<vmem>>, %arg3: memref<3x4x32x8xbf16, #tpu.memory_space<vmem>>, %arg4: memref<3x4x1x8xf32, #tpu.memory_space<vmem>>, %arg5: memref<4x8x32xbf16, #tpu.memory_space<vmem>>, %arg6: memref<3x4x32x8xbf16, #tpu.memory_space<vmem>>, %arg7: memref<3x4x1x8xf32, #tpu.memory_space<vmem>>, %arg8: memref<4x8x32xbf16, #tpu.memory_space<vmem>>, %arg9: memref<32x2048xbf16, #tpu.memory_space<vmem>>, %arg10: memref<1x2048xf32, #tpu.memory_space<vmem>>, %arg11: memref<2048x32xbf16, #tpu.memory_space<vmem>>, %arg12: memref<9x32xf32, #tpu.memory_space<vmem>>, %arg13: memref<1x8x32xf32, #tpu.memory_space<vmem>>) attributes {dimension_semantics = [#tpu.dimension_semantics<parallel>], iteration_bounds = array<i64: 2>, scalar_prefetch = 0 : i64, scratch_operands = 0 : i64, tpu.core_type = #tpu.core_type<tc>, window_params = [{transform_indices = @transform_0, window_bounds = array<i64: 1, 8, 32>}, {transform_indices = @transform_1, window_bounds = array<i64: 1, 8, 32>}, {pipeline_mode = #tpu.pipeline_mode<synchronous>, transform_indices = @transform_2, window_bounds = array<i64: 3, 4, 32, 8>}, {pipeline_mode = #tpu.pipeline_mode<synchronous>, transform_indices = @transform_3, window_bounds = array<i64: 3, 4, 1, 8>}, {pipeline_mode = #tpu.pipeline_mode<synchronous>, transform_indices = @transform_4, window_bounds = array<i64: 4, 8, 32>}, {pipeline_mode = #tpu.pipeline_mode<synchronous>, transform_indices = @transform_5, window_bounds = array<i64: 3, 4, 32, 8>}, {pipeline_mode = #tpu.pipeline_mode<synchronous>, transform_indices = @transform_6, window_bounds = array<i64: 3, 4, 1, 8>}, {pipeline_mode = #tpu.pipeline_mode<synchronous>, transform_indices = @transform_7, window_bounds = array<i64: 4, 8, 32>}, {pipeline_mode = #tpu.pipeline_mode<synchronous>, transform_indices = @transform_8, window_bounds = array<i64: 32, 2048>}, {pipeline_mode = #tpu.pipeline_mode<synchronous>, transform_indices = @transform_9, window_bounds = array<i64: 1, 2048>}, {pipeline_mode = #tpu.pipeline_mode<synchronous>, transform_indices = @transform_10, window_bounds = array<i64: 2048, 32>}, {pipeline_mode = #tpu.pipeline_mode<synchronous>, transform_indices = @transform_11, window_bounds = array<i64: 9, 32>}, {transform_indices = @transform_12, window_bounds = array<i64: 1, 8, 32>}]} {
    %c0 = arith.constant 0 : index
    %c0_0 = arith.constant 0 : index
    %c0_1 = arith.constant 0 : index
    %0 = vector.load %arg1[%c0, %c0_0, %c0_1] : memref<1x8x32xf32, #tpu.memory_space<vmem>>, vector<1x8x32xf32>
    %1 = vector.shape_cast %0 : vector<1x8x32xf32> to vector<8x32xf32>
    %c0_2 = arith.constant 0 : index
    %c0_3 = arith.constant 0 : index
    %c0_4 = arith.constant 0 : index
    %2 = vector.load %arg2[%c0_2, %c0_3, %c0_4] : memref<1x8x32xf32, #tpu.memory_space<vmem>>, vector<1x8x32xf32>
    %3 = vector.shape_cast %2 : vector<1x8x32xf32> to vector<8x32xf32>
    %c0_5 = arith.constant 0 : index
    %c0_6 = arith.constant 0 : index
    %4 = vector.load %arg12[%c0_5, %c0_6] : memref<9x32xf32, #tpu.memory_space<vmem>>, vector<9x32xf32>
    %5 = vector.extract_strided_slice %4 {offsets = [0, 0], sizes = [1, 32], strides = [1, 1]} : vector<9x32xf32> to vector<1x32xf32>
    %6 = vector.extract_strided_slice %4 {offsets = [1, 0], sizes = [1, 32], strides = [1, 1]} : vector<9x32xf32> to vector<1x32xf32>
    %7 = vector.extract_strided_slice %4 {offsets = [2, 0], sizes = [1, 32], strides = [1, 1]} : vector<9x32xf32> to vector<1x32xf32>
    %8 = vector.extract_strided_slice %4 {offsets = [3, 0], sizes = [1, 32], strides = [1, 1]} : vector<9x32xf32> to vector<1x32xf32>
    %9 = vector.extract_strided_slice %4 {offsets = [4, 0], sizes = [1, 32], strides = [1, 1]} : vector<9x32xf32> to vector<1x32xf32>
    %10 = vector.extract_strided_slice %4 {offsets = [5, 0], sizes = [1, 32], strides = [1, 1]} : vector<9x32xf32> to vector<1x32xf32>
    %11 = vector.extract_strided_slice %4 {offsets = [6, 0], sizes = [1, 32], strides = [1, 1]} : vector<9x32xf32> to vector<1x32xf32>
    %12 = vector.extract_strided_slice %4 {offsets = [7, 0], sizes = [1, 32], strides = [1, 1]} : vector<9x32xf32> to vector<1x32xf32>
    %13 = vector.extract_strided_slice %4 {offsets = [8, 0], sizes = [1, 32], strides = [1, 1]} : vector<9x32xf32> to vector<1x32xf32>
    %14 = tpu.iota {dimensions = array<i32: 0>} : vector<8x8xi32>
    %15 = tpu.iota {dimensions = array<i32: 1>} : vector<8x8xi32>
    %16 = arith.cmpi sge, %14, %15 : vector<8x8xi32>
    %cst = arith.constant 0.000000e+00 : f32
    %cst_7 = arith.constant -1.000000e+30 : f32
    %17 = vector.broadcast %cst : f32 to vector<8x8xf32>
    %18 = vector.broadcast %cst_7 : f32 to vector<8x8xf32>
    %19 = arith.select %16, %17, %18 : vector<8x8xi1>, vector<8x8xf32>
    %c0_8 = arith.constant 0 : index
    %c0_9 = arith.constant 0 : index
    %c0_10 = arith.constant 0 : index
    %c0_11 = arith.constant 0 : index
    %20 = vector.load %arg3[%c0_8, %c0_9, %c0_10, %c0_11] : memref<3x4x32x8xbf16, #tpu.memory_space<vmem>>, vector<3x4x32x8xbf16>
    %c0_12 = arith.constant 0 : index
    %c0_13 = arith.constant 0 : index
    %c0_14 = arith.constant 0 : index
    %c0_15 = arith.constant 0 : index
    %21 = vector.load %arg4[%c0_12, %c0_13, %c0_14, %c0_15] : memref<3x4x1x8xf32, #tpu.memory_space<vmem>>, vector<3x4x1x8xf32>
    %c0_16 = arith.constant 0 : index
    %c0_17 = arith.constant 0 : index
    %c0_18 = arith.constant 0 : index
    %22 = vector.load %arg5[%c0_16, %c0_17, %c0_18] : memref<4x8x32xbf16, #tpu.memory_space<vmem>>, vector<4x8x32xbf16>
    %23 = arith.truncf %3 : vector<8x32xf32> to vector<8x32xbf16>
    %24 = vector.shape_cast %23 : vector<8x32xbf16> to vector<1x8x32xbf16>
    %25 = vector.shape_cast %24 : vector<1x8x32xbf16> to vector<1x8x32xbf16>
    %26 = vector.broadcast %25 : vector<1x8x32xbf16> to vector<4x8x32xbf16>
    %27 = arith.truncf %3 : vector<8x32xf32> to vector<8x32xbf16>
    %28 = vector.shape_cast %27 : vector<8x32xbf16> to vector<1x8x32xbf16>
    %29 = vector.shape_cast %28 : vector<1x8x32xbf16> to vector<1x8x32xbf16>
    %30 = vector.broadcast %29 : vector<1x8x32xbf16> to vector<4x8x32xbf16>
    %31 = vector.extract_strided_slice %20 {offsets = [0, 0, 0, 0], sizes = [1, 4, 32, 8], strides = [1, 1, 1, 1]} : vector<3x4x32x8xbf16> to vector<1x4x32x8xbf16>
    %32 = vector.shape_cast %31 : vector<1x4x32x8xbf16> to vector<4x32x8xbf16>
    "tpu.trace_start"() <{level = 10 : i32, message = "hnd,hdk->hnk"}> : () -> ()
    %cst_19 = arith.constant dense<0.000000e+00> : vector<4x8x8xf32>
    %33 = tpu.matmul %26, %32, %cst_19 {dimension_numbers = #tpu.dot_dimension_numbers<[2], [1], [1], [2], [0, 0, 0, 1, 1, 2], [0], [0]>} : vector<4x8x32xbf16>, vector<4x32x8xbf16>, vector<4x8x8xf32> -> vector<4x8x8xf32>
    "tpu.trace_stop"() : () -> ()
    %34 = vector.extract_strided_slice %21 {offsets = [0, 0, 0, 0], sizes = [1, 4, 1, 8], strides = [1, 1, 1, 1]} : vector<3x4x1x8xf32> to vector<1x4x1x8xf32>
    %35 = vector.shape_cast %34 : vector<1x4x1x8xf32> to vector<4x1x8xf32>
    %36 = vector.broadcast %35 : vector<4x1x8xf32> to vector<4x8x8xf32>
    %37 = arith.addf %33, %36 : vector<4x8x8xf32>
    %38 = vector.extract_strided_slice %20 {offsets = [1, 0, 0, 0], sizes = [1, 4, 32, 8], strides = [1, 1, 1, 1]} : vector<3x4x32x8xbf16> to vector<1x4x32x8xbf16>
    %39 = vector.shape_cast %38 : vector<1x4x32x8xbf16> to vector<4x32x8xbf16>
    "tpu.trace_start"() <{level = 10 : i32, message = "hnd,hdk->hnk"}> : () -> ()
    %cst_20 = arith.constant dense<0.000000e+00> : vector<4x8x8xf32>
    %40 = tpu.matmul %30, %39, %cst_20 {dimension_numbers = #tpu.dot_dimension_numbers<[2], [1], [1], [2], [0, 0, 0, 1, 1, 2], [0], [0]>} : vector<4x8x32xbf16>, vector<4x32x8xbf16>, vector<4x8x8xf32> -> vector<4x8x8xf32>
    "tpu.trace_stop"() : () -> ()
    %41 = vector.extract_strided_slice %21 {offsets = [1, 0, 0, 0], sizes = [1, 4, 1, 8], strides = [1, 1, 1, 1]} : vector<3x4x1x8xf32> to vector<1x4x1x8xf32>
    %42 = vector.shape_cast %41 : vector<1x4x1x8xf32> to vector<4x1x8xf32>
    %43 = vector.broadcast %42 : vector<4x1x8xf32> to vector<4x8x8xf32>
    %44 = arith.addf %40, %43 : vector<4x8x8xf32>
    %45 = vector.extract_strided_slice %20 {offsets = [2, 0, 0, 0], sizes = [1, 4, 32, 8], strides = [1, 1, 1, 1]} : vector<3x4x32x8xbf16> to vector<1x4x32x8xbf16>
    %46 = vector.shape_cast %45 : vector<1x4x32x8xbf16> to vector<4x32x8xbf16>
    "tpu.trace_start"() <{level = 10 : i32, message = "hnd,hdk->hnk"}> : () -> ()
    %cst_21 = arith.constant dense<0.000000e+00> : vector<4x8x8xf32>
    %47 = tpu.matmul %30, %46, %cst_21 {dimension_numbers = #tpu.dot_dimension_numbers<[2], [1], [1], [2], [0, 0, 0, 1, 1, 2], [0], [0]>} : vector<4x8x32xbf16>, vector<4x32x8xbf16>, vector<4x8x8xf32> -> vector<4x8x8xf32>
    "tpu.trace_stop"() : () -> ()
    %48 = vector.extract_strided_slice %21 {offsets = [2, 0, 0, 0], sizes = [1, 4, 1, 8], strides = [1, 1, 1, 1]} : vector<3x4x1x8xf32> to vector<1x4x1x8xf32>
    %49 = vector.shape_cast %48 : vector<1x4x1x8xf32> to vector<4x1x8xf32>
    %50 = vector.broadcast %49 : vector<4x1x8xf32> to vector<4x8x8xf32>
    %51 = arith.addf %47, %50 : vector<4x8x8xf32>
    %52 = arith.truncf %37 : vector<4x8x8xf32> to vector<4x8x8xbf16>
    %53 = arith.truncf %44 : vector<4x8x8xf32> to vector<4x8x8xbf16>
    "tpu.trace_start"() <{level = 10 : i32, message = "hnk,hmk->hnm"}> : () -> ()
    %cst_22 = arith.constant dense<0.000000e+00> : vector<4x8x8xf32>
    %54 = tpu.matmul %52, %53, %cst_22 {dimension_numbers = #tpu.dot_dimension_numbers<[2], [2], [1], [1], [0, 0, 0, 1, 1, 1], [0], [0]>} : vector<4x8x8xbf16>, vector<4x8x8xbf16>, vector<4x8x8xf32> -> vector<4x8x8xf32>
    "tpu.trace_stop"() : () -> ()
    %55 = vector.shape_cast %19 : vector<8x8xf32> to vector<1x8x8xf32>
    %56 = vector.broadcast %55 : vector<1x8x8xf32> to vector<4x8x8xf32>
    %57 = arith.addf %54, %56 : vector<4x8x8xf32>
    %cst_23 = arith.constant dense<0xFF800000> : vector<4x8xf32>
    %58 = vector.multi_reduction <maximumf>, %57, %cst_23 [2] : vector<4x8x8xf32> to vector<4x8xf32>
    %59 = vector.shape_cast %58 : vector<4x8xf32> to vector<4x8x1xf32>
    %60 = vector.broadcast %59 : vector<4x8x1xf32> to vector<4x8x8xf32>
    %61 = arith.subf %57, %60 : vector<4x8x8xf32>
    %62 = math.exp %61 : vector<4x8x8xf32>
    %cst_24 = arith.constant dense<0.000000e+00> : vector<4x8xf32>
    %63 = vector.multi_reduction <add>, %62, %cst_24 [2] : vector<4x8x8xf32> to vector<4x8xf32>
    %64 = vector.shape_cast %63 : vector<4x8xf32> to vector<4x8x1xf32>
    %65 = tpu.reciprocal %64 {approx = true} : vector<4x8x1xf32> -> vector<4x8x1xf32>
    %66 = vector.broadcast %65 : vector<4x8x1xf32> to vector<4x8x8xf32>
    %67 = arith.mulf %62, %66 : vector<4x8x8xf32>
    %68 = arith.truncf %67 : vector<4x8x8xf32> to vector<4x8x8xbf16>
    %69 = arith.truncf %51 : vector<4x8x8xf32> to vector<4x8x8xbf16>
    "tpu.trace_start"() <{level = 10 : i32, message = "hnm,hmk->hnk"}> : () -> ()
    %cst_25 = arith.constant dense<0.000000e+00> : vector<4x8x8xf32>
    %70 = tpu.matmul %68, %69, %cst_25 {dimension_numbers = #tpu.dot_dimension_numbers<[2], [1], [1], [2], [0, 0, 0, 1, 1, 2], [0], [0]>} : vector<4x8x8xbf16>, vector<4x8x8xbf16>, vector<4x8x8xf32> -> vector<4x8x8xf32>
    "tpu.trace_stop"() : () -> ()
    %71 = arith.truncf %70 : vector<4x8x8xf32> to vector<4x8x8xbf16>
    "tpu.trace_start"() <{level = 10 : i32, message = "hnk,hkd->hnd"}> : () -> ()
    %cst_26 = arith.constant dense<0.000000e+00> : vector<4x8x32xf32>
    %72 = tpu.matmul %71, %22, %cst_26 {dimension_numbers = #tpu.dot_dimension_numbers<[2], [1], [1], [2], [0, 0, 0, 1, 1, 2], [0], [0]>} : vector<4x8x8xbf16>, vector<4x8x32xbf16>, vector<4x8x32xf32> -> vector<4x8x32xf32>
    "tpu.trace_stop"() : () -> ()
    %cst_27 = arith.constant dense<0.000000e+00> : vector<8x32xf32>
    %73 = vector.multi_reduction <add>, %72, %cst_27 [0] : vector<4x8x32xf32> to vector<8x32xf32>
    %74 = vector.broadcast %5 : vector<1x32xf32> to vector<8x32xf32>
    %75 = arith.addf %73, %74 : vector<8x32xf32>
    %76 = arith.addf %75, %3 : vector<8x32xf32>
    %cst_28 = arith.constant dense<0.000000e+00> : vector<8xf32>
    %77 = vector.multi_reduction <add>, %76, %cst_28 [1] : vector<8x32xf32> to vector<8xf32>
    %78 = vector.shape_cast %77 : vector<8xf32> to vector<8x1xf32>
    %cst_29 = arith.constant 3.200000e+01 : f32
    %79 = vector.broadcast %cst_29 : f32 to vector<8x1xf32>
    %80 = arith.divf %78, %79 : vector<8x1xf32>
    %81 = vector.broadcast %80 : vector<8x1xf32> to vector<8x32xf32>
    %82 = arith.subf %76, %81 : vector<8x32xf32>
    %83 = arith.mulf %82, %82 : vector<8x32xf32>
    %cst_30 = arith.constant dense<0.000000e+00> : vector<8xf32>
    %84 = vector.multi_reduction <add>, %83, %cst_30 [1] : vector<8x32xf32> to vector<8xf32>
    %85 = vector.shape_cast %84 : vector<8xf32> to vector<8x1xf32>
    %cst_31 = arith.constant 3.200000e+01 : f32
    %86 = vector.broadcast %cst_31 : f32 to vector<8x1xf32>
    %87 = arith.divf %85, %86 : vector<8x1xf32>
    %cst_32 = arith.constant 9.99999974E-6 : f32
    %88 = vector.broadcast %cst_32 : f32 to vector<8x1xf32>
    %89 = arith.addf %87, %88 : vector<8x1xf32>
    %90 = math.rsqrt %89 : vector<8x1xf32>
    %91 = vector.broadcast %90 : vector<8x1xf32> to vector<8x32xf32>
    %92 = arith.mulf %82, %91 : vector<8x32xf32>
    %93 = vector.broadcast %6 : vector<1x32xf32> to vector<8x32xf32>
    %94 = arith.mulf %92, %93 : vector<8x32xf32>
    %95 = vector.broadcast %7 : vector<1x32xf32> to vector<8x32xf32>
    %96 = arith.addf %94, %95 : vector<8x32xf32>
    %c0_33 = arith.constant 0 : index
    %c0_34 = arith.constant 0 : index
    %c0_35 = arith.constant 0 : index
    %c0_36 = arith.constant 0 : index
    %97 = vector.load %arg6[%c0_33, %c0_34, %c0_35, %c0_36] : memref<3x4x32x8xbf16, #tpu.memory_space<vmem>>, vector<3x4x32x8xbf16>
    %c0_37 = arith.constant 0 : index
    %c0_38 = arith.constant 0 : index
    %c0_39 = arith.constant 0 : index
    %c0_40 = arith.constant 0 : index
    %98 = vector.load %arg7[%c0_37, %c0_38, %c0_39, %c0_40] : memref<3x4x1x8xf32, #tpu.memory_space<vmem>>, vector<3x4x1x8xf32>
    %c0_41 = arith.constant 0 : index
    %c0_42 = arith.constant 0 : index
    %c0_43 = arith.constant 0 : index
    %99 = vector.load %arg8[%c0_41, %c0_42, %c0_43] : memref<4x8x32xbf16, #tpu.memory_space<vmem>>, vector<4x8x32xbf16>
    %100 = arith.truncf %96 : vector<8x32xf32> to vector<8x32xbf16>
    %101 = vector.shape_cast %100 : vector<8x32xbf16> to vector<1x8x32xbf16>
    %102 = vector.shape_cast %101 : vector<1x8x32xbf16> to vector<1x8x32xbf16>
    %103 = vector.broadcast %102 : vector<1x8x32xbf16> to vector<4x8x32xbf16>
    %104 = arith.truncf %1 : vector<8x32xf32> to vector<8x32xbf16>
    %105 = vector.shape_cast %104 : vector<8x32xbf16> to vector<1x8x32xbf16>
    %106 = vector.shape_cast %105 : vector<1x8x32xbf16> to vector<1x8x32xbf16>
    %107 = vector.broadcast %106 : vector<1x8x32xbf16> to vector<4x8x32xbf16>
    %108 = vector.extract_strided_slice %97 {offsets = [0, 0, 0, 0], sizes = [1, 4, 32, 8], strides = [1, 1, 1, 1]} : vector<3x4x32x8xbf16> to vector<1x4x32x8xbf16>
    %109 = vector.shape_cast %108 : vector<1x4x32x8xbf16> to vector<4x32x8xbf16>
    "tpu.trace_start"() <{level = 10 : i32, message = "hnd,hdk->hnk"}> : () -> ()
    %cst_44 = arith.constant dense<0.000000e+00> : vector<4x8x8xf32>
    %110 = tpu.matmul %103, %109, %cst_44 {dimension_numbers = #tpu.dot_dimension_numbers<[2], [1], [1], [2], [0, 0, 0, 1, 1, 2], [0], [0]>} : vector<4x8x32xbf16>, vector<4x32x8xbf16>, vector<4x8x8xf32> -> vector<4x8x8xf32>
    "tpu.trace_stop"() : () -> ()
    %111 = vector.extract_strided_slice %98 {offsets = [0, 0, 0, 0], sizes = [1, 4, 1, 8], strides = [1, 1, 1, 1]} : vector<3x4x1x8xf32> to vector<1x4x1x8xf32>
    %112 = vector.shape_cast %111 : vector<1x4x1x8xf32> to vector<4x1x8xf32>
    %113 = vector.broadcast %112 : vector<4x1x8xf32> to vector<4x8x8xf32>
    %114 = arith.addf %110, %113 : vector<4x8x8xf32>
    %115 = vector.extract_strided_slice %97 {offsets = [1, 0, 0, 0], sizes = [1, 4, 32, 8], strides = [1, 1, 1, 1]} : vector<3x4x32x8xbf16> to vector<1x4x32x8xbf16>
    %116 = vector.shape_cast %115 : vector<1x4x32x8xbf16> to vector<4x32x8xbf16>
    "tpu.trace_start"() <{level = 10 : i32, message = "hnd,hdk->hnk"}> : () -> ()
    %cst_45 = arith.constant dense<0.000000e+00> : vector<4x8x8xf32>
    %117 = tpu.matmul %107, %116, %cst_45 {dimension_numbers = #tpu.dot_dimension_numbers<[2], [1], [1], [2], [0, 0, 0, 1, 1, 2], [0], [0]>} : vector<4x8x32xbf16>, vector<4x32x8xbf16>, vector<4x8x8xf32> -> vector<4x8x8xf32>
    "tpu.trace_stop"() : () -> ()
    %118 = vector.extract_strided_slice %98 {offsets = [1, 0, 0, 0], sizes = [1, 4, 1, 8], strides = [1, 1, 1, 1]} : vector<3x4x1x8xf32> to vector<1x4x1x8xf32>
    %119 = vector.shape_cast %118 : vector<1x4x1x8xf32> to vector<4x1x8xf32>
    %120 = vector.broadcast %119 : vector<4x1x8xf32> to vector<4x8x8xf32>
    %121 = arith.addf %117, %120 : vector<4x8x8xf32>
    %122 = vector.extract_strided_slice %97 {offsets = [2, 0, 0, 0], sizes = [1, 4, 32, 8], strides = [1, 1, 1, 1]} : vector<3x4x32x8xbf16> to vector<1x4x32x8xbf16>
    %123 = vector.shape_cast %122 : vector<1x4x32x8xbf16> to vector<4x32x8xbf16>
    "tpu.trace_start"() <{level = 10 : i32, message = "hnd,hdk->hnk"}> : () -> ()
    %cst_46 = arith.constant dense<0.000000e+00> : vector<4x8x8xf32>
    %124 = tpu.matmul %107, %123, %cst_46 {dimension_numbers = #tpu.dot_dimension_numbers<[2], [1], [1], [2], [0, 0, 0, 1, 1, 2], [0], [0]>} : vector<4x8x32xbf16>, vector<4x32x8xbf16>, vector<4x8x8xf32> -> vector<4x8x8xf32>
    "tpu.trace_stop"() : () -> ()
    %125 = vector.extract_strided_slice %98 {offsets = [2, 0, 0, 0], sizes = [1, 4, 1, 8], strides = [1, 1, 1, 1]} : vector<3x4x1x8xf32> to vector<1x4x1x8xf32>
    %126 = vector.shape_cast %125 : vector<1x4x1x8xf32> to vector<4x1x8xf32>
    %127 = vector.broadcast %126 : vector<4x1x8xf32> to vector<4x8x8xf32>
    %128 = arith.addf %124, %127 : vector<4x8x8xf32>
    %129 = arith.truncf %114 : vector<4x8x8xf32> to vector<4x8x8xbf16>
    %130 = arith.truncf %121 : vector<4x8x8xf32> to vector<4x8x8xbf16>
    "tpu.trace_start"() <{level = 10 : i32, message = "hnk,hmk->hnm"}> : () -> ()
    %cst_47 = arith.constant dense<0.000000e+00> : vector<4x8x8xf32>
    %131 = tpu.matmul %129, %130, %cst_47 {dimension_numbers = #tpu.dot_dimension_numbers<[2], [2], [1], [1], [0, 0, 0, 1, 1, 1], [0], [0]>} : vector<4x8x8xbf16>, vector<4x8x8xbf16>, vector<4x8x8xf32> -> vector<4x8x8xf32>
    "tpu.trace_stop"() : () -> ()
    %cst_48 = arith.constant dense<0xFF800000> : vector<4x8xf32>
    %132 = vector.multi_reduction <maximumf>, %131, %cst_48 [2] : vector<4x8x8xf32> to vector<4x8xf32>
    %133 = vector.shape_cast %132 : vector<4x8xf32> to vector<4x8x1xf32>
    %134 = vector.broadcast %133 : vector<4x8x1xf32> to vector<4x8x8xf32>
    %135 = arith.subf %131, %134 : vector<4x8x8xf32>
    %136 = math.exp %135 : vector<4x8x8xf32>
    %cst_49 = arith.constant dense<0.000000e+00> : vector<4x8xf32>
    %137 = vector.multi_reduction <add>, %136, %cst_49 [2] : vector<4x8x8xf32> to vector<4x8xf32>
    %138 = vector.shape_cast %137 : vector<4x8xf32> to vector<4x8x1xf32>
    %139 = tpu.reciprocal %138 {approx = true} : vector<4x8x1xf32> -> vector<4x8x1xf32>
    %140 = vector.broadcast %139 : vector<4x8x1xf32> to vector<4x8x8xf32>
    %141 = arith.mulf %136, %140 : vector<4x8x8xf32>
    %142 = arith.truncf %141 : vector<4x8x8xf32> to vector<4x8x8xbf16>
    %143 = arith.truncf %128 : vector<4x8x8xf32> to vector<4x8x8xbf16>
    "tpu.trace_start"() <{level = 10 : i32, message = "hnm,hmk->hnk"}> : () -> ()
    %cst_50 = arith.constant dense<0.000000e+00> : vector<4x8x8xf32>
    %144 = tpu.matmul %142, %143, %cst_50 {dimension_numbers = #tpu.dot_dimension_numbers<[2], [1], [1], [2], [0, 0, 0, 1, 1, 2], [0], [0]>} : vector<4x8x8xbf16>, vector<4x8x8xbf16>, vector<4x8x8xf32> -> vector<4x8x8xf32>
    "tpu.trace_stop"() : () -> ()
    %145 = arith.truncf %144 : vector<4x8x8xf32> to vector<4x8x8xbf16>
    "tpu.trace_start"() <{level = 10 : i32, message = "hnk,hkd->hnd"}> : () -> ()
    %cst_51 = arith.constant dense<0.000000e+00> : vector<4x8x32xf32>
    %146 = tpu.matmul %145, %99, %cst_51 {dimension_numbers = #tpu.dot_dimension_numbers<[2], [1], [1], [2], [0, 0, 0, 1, 1, 2], [0], [0]>} : vector<4x8x8xbf16>, vector<4x8x32xbf16>, vector<4x8x32xf32> -> vector<4x8x32xf32>
    "tpu.trace_stop"() : () -> ()
    %cst_52 = arith.constant dense<0.000000e+00> : vector<8x32xf32>
    %147 = vector.multi_reduction <add>, %146, %cst_52 [0] : vector<4x8x32xf32> to vector<8x32xf32>
    %148 = vector.broadcast %8 : vector<1x32xf32> to vector<8x32xf32>
    %149 = arith.addf %147, %148 : vector<8x32xf32>
    %150 = arith.addf %149, %96 : vector<8x32xf32>
    %cst_53 = arith.constant dense<0.000000e+00> : vector<8xf32>
    %151 = vector.multi_reduction <add>, %150, %cst_53 [1] : vector<8x32xf32> to vector<8xf32>
    %152 = vector.shape_cast %151 : vector<8xf32> to vector<8x1xf32>
    %cst_54 = arith.constant 3.200000e+01 : f32
    %153 = vector.broadcast %cst_54 : f32 to vector<8x1xf32>
    %154 = arith.divf %152, %153 : vector<8x1xf32>
    %155 = vector.broadcast %154 : vector<8x1xf32> to vector<8x32xf32>
    %156 = arith.subf %150, %155 : vector<8x32xf32>
    %157 = arith.mulf %156, %156 : vector<8x32xf32>
    %cst_55 = arith.constant dense<0.000000e+00> : vector<8xf32>
    %158 = vector.multi_reduction <add>, %157, %cst_55 [1] : vector<8x32xf32> to vector<8xf32>
    %159 = vector.shape_cast %158 : vector<8xf32> to vector<8x1xf32>
    %cst_56 = arith.constant 3.200000e+01 : f32
    %160 = vector.broadcast %cst_56 : f32 to vector<8x1xf32>
    %161 = arith.divf %159, %160 : vector<8x1xf32>
    %cst_57 = arith.constant 9.99999974E-6 : f32
    %162 = vector.broadcast %cst_57 : f32 to vector<8x1xf32>
    %163 = arith.addf %161, %162 : vector<8x1xf32>
    %164 = math.rsqrt %163 : vector<8x1xf32>
    %165 = vector.broadcast %164 : vector<8x1xf32> to vector<8x32xf32>
    %166 = arith.mulf %156, %165 : vector<8x32xf32>
    %167 = vector.broadcast %9 : vector<1x32xf32> to vector<8x32xf32>
    %168 = arith.mulf %166, %167 : vector<8x32xf32>
    %169 = vector.broadcast %10 : vector<1x32xf32> to vector<8x32xf32>
    %170 = arith.addf %168, %169 : vector<8x32xf32>
    %171 = arith.truncf %170 : vector<8x32xf32> to vector<8x32xbf16>
    %c0_58 = arith.constant 0 : index
    %c0_59 = arith.constant 0 : index
    %172 = vector.load %arg9[%c0_58, %c0_59] : memref<32x2048xbf16, #tpu.memory_space<vmem>>, vector<32x2048xbf16>
    %cst_60 = arith.constant dense<0.000000e+00> : vector<8x2048xf32>
    %173 = tpu.matmul %171, %172, %cst_60 {dimension_numbers = #tpu.dot_dimension_numbers<[1], [0], [0], [1], [0, 0, 1, 1], [], []>} : vector<8x32xbf16>, vector<32x2048xbf16>, vector<8x2048xf32> -> vector<8x2048xf32>
    %c0_61 = arith.constant 0 : index
    %c0_62 = arith.constant 0 : index
    %174 = vector.load %arg10[%c0_61, %c0_62] : memref<1x2048xf32, #tpu.memory_space<vmem>>, vector<1x2048xf32>
    %175 = vector.broadcast %174 : vector<1x2048xf32> to vector<8x2048xf32>
    %176 = arith.addf %173, %175 : vector<8x2048xf32>
    %cst_63 = arith.constant 0.000000e+00 : f32
    %177 = vector.broadcast %cst_63 : f32 to vector<8x2048xf32>
    %178 = arith.maximumf %176, %177 : vector<8x2048xf32>
    %179 = arith.truncf %178 : vector<8x2048xf32> to vector<8x2048xbf16>
    %c0_64 = arith.constant 0 : index
    %c0_65 = arith.constant 0 : index
    %180 = vector.load %arg11[%c0_64, %c0_65] : memref<2048x32xbf16, #tpu.memory_space<vmem>>, vector<2048x32xbf16>
    %cst_66 = arith.constant dense<0.000000e+00> : vector<8x32xf32>
    %181 = tpu.matmul %179, %180, %cst_66 {dimension_numbers = #tpu.dot_dimension_numbers<[1], [0], [0], [1], [0, 0, 1, 1], [], []>} : vector<8x2048xbf16>, vector<2048x32xbf16>, vector<8x32xf32> -> vector<8x32xf32>
    %182 = vector.broadcast %11 : vector<1x32xf32> to vector<8x32xf32>
    %183 = arith.addf %181, %182 : vector<8x32xf32>
    %184 = arith.addf %183, %170 : vector<8x32xf32>
    %cst_67 = arith.constant dense<0.000000e+00> : vector<8xf32>
    %185 = vector.multi_reduction <add>, %184, %cst_67 [1] : vector<8x32xf32> to vector<8xf32>
    %186 = vector.shape_cast %185 : vector<8xf32> to vector<8x1xf32>
    %cst_68 = arith.constant 3.200000e+01 : f32
    %187 = vector.broadcast %cst_68 : f32 to vector<8x1xf32>
    %188 = arith.divf %186, %187 : vector<8x1xf32>
    %189 = vector.broadcast %188 : vector<8x1xf32> to vector<8x32xf32>
    %190 = arith.subf %184, %189 : vector<8x32xf32>
    %191 = arith.mulf %190, %190 : vector<8x32xf32>
    %cst_69 = arith.constant dense<0.000000e+00> : vector<8xf32>
    %192 = vector.multi_reduction <add>, %191, %cst_69 [1] : vector<8x32xf32> to vector<8xf32>
    %193 = vector.shape_cast %192 : vector<8xf32> to vector<8x1xf32>
    %cst_70 = arith.constant 3.200000e+01 : f32
    %194 = vector.broadcast %cst_70 : f32 to vector<8x1xf32>
    %195 = arith.divf %193, %194 : vector<8x1xf32>
    %cst_71 = arith.constant 9.99999974E-6 : f32
    %196 = vector.broadcast %cst_71 : f32 to vector<8x1xf32>
    %197 = arith.addf %195, %196 : vector<8x1xf32>
    %198 = math.rsqrt %197 : vector<8x1xf32>
    %199 = vector.broadcast %198 : vector<8x1xf32> to vector<8x32xf32>
    %200 = arith.mulf %190, %199 : vector<8x32xf32>
    %201 = vector.broadcast %12 : vector<1x32xf32> to vector<8x32xf32>
    %202 = arith.mulf %200, %201 : vector<8x32xf32>
    %203 = vector.broadcast %13 : vector<1x32xf32> to vector<8x32xf32>
    %204 = arith.addf %202, %203 : vector<8x32xf32>
    %c0_72 = arith.constant 0 : index
    %c0_73 = arith.constant 0 : index
    %c0_74 = arith.constant 0 : index
    %205 = vector.load %arg13[%c0_72, %c0_73, %c0_74] : memref<1x8x32xf32, #tpu.memory_space<vmem>>, vector<1x8x32xf32>
    %206 = vector.shape_cast %205 : vector<1x8x32xf32> to vector<8x32xf32>
    %207 = vector.shape_cast %204 : vector<8x32xf32> to vector<1x8x32xf32>
    tpu.vector_store %arg13[%c0_72, %c0_73, %c0_74], %207 {strides = array<i32>} : memref<1x8x32xf32, #tpu.memory_space<vmem>>, vector<1x8x32xf32>,
    return
  }
  func.func @transform_0(%arg0: i32) -> (i32, i32, i32) {
    %c0_i32 = arith.constant 0 : i32
    %c0_i32_0 = arith.constant 0 : i32
    %c0_i32_1 = arith.constant 0 : i32
    return %arg0, %c0_i32, %c0_i32_0 : i32, i32, i32
  }
  func.func @transform_1(%arg0: i32) -> (i32, i32, i32) {
    %c0_i32 = arith.constant 0 : i32
    %c0_i32_0 = arith.constant 0 : i32
    %c0_i32_1 = arith.constant 0 : i32
    return %arg0, %c0_i32, %c0_i32_0 : i32, i32, i32
  }
  func.func @transform_2(%arg0: i32) -> (i32, i32, i32, i32) {
    %c0_i32 = arith.constant 0 : i32
    %c0_i32_0 = arith.constant 0 : i32
    %c0_i32_1 = arith.constant 0 : i32
    %c0_i32_2 = arith.constant 0 : i32
    %c0_i32_3 = arith.constant 0 : i32
    return %c0_i32, %c0_i32_0, %c0_i32_1, %c0_i32_2 : i32, i32, i32, i32
  }
  func.func @transform_3(%arg0: i32) -> (i32, i32, i32, i32) {
    %c0_i32 = arith.constant 0 : i32
    %c0_i32_0 = arith.constant 0 : i32
    %c0_i32_1 = arith.constant 0 : i32
    %c0_i32_2 = arith.constant 0 : i32
    %c0_i32_3 = arith.constant 0 : i32
    return %c0_i32, %c0_i32_0, %c0_i32_1, %c0_i32_2 : i32, i32, i32, i32
  }
  func.func @transform_4(%arg0: i32) -> (i32, i32, i32) {
    %c0_i32 = arith.constant 0 : i32
    %c0_i32_0 = arith.constant 0 : i32
    %c0_i32_1 = arith.constant 0 : i32
    %c0_i32_2 = arith.constant 0 : i32
    return %c0_i32, %c0_i32_0, %c0_i32_1 : i32, i32, i32
  }
  func.func @transform_5(%arg0: i32) -> (i32, i32, i32, i32) {
    %c0_i32 = arith.constant 0 : i32
    %c0_i32_0 = arith.constant 0 : i32
    %c0_i32_1 = arith.constant 0 : i32
    %c0_i32_2 = arith.constant 0 : i32
    %c0_i32_3 = arith.constant 0 : i32
    return %c0_i32, %c0_i32_0, %c0_i32_1, %c0_i32_2 : i32, i32, i32, i32
  }
  func.func @transform_6(%arg0: i32) -> (i32, i32, i32, i32) {
    %c0_i32 = arith.constant 0 : i32
    %c0_i32_0 = arith.constant 0 : i32
    %c0_i32_1 = arith.constant 0 : i32
    %c0_i32_2 = arith.constant 0 : i32
    %c0_i32_3 = arith.constant 0 : i32
    return %c0_i32, %c0_i32_0, %c0_i32_1, %c0_i32_2 : i32, i32, i32, i32
  }
  func.func @transform_7(%arg0: i32) -> (i32, i32, i32) {
    %c0_i32 = arith.constant 0 : i32
    %c0_i32_0 = arith.constant 0 : i32
    %c0_i32_1 = arith.constant 0 : i32
    %c0_i32_2 = arith.constant 0 : i32
    return %c0_i32, %c0_i32_0, %c0_i32_1 : i32, i32, i32
  }
  func.func @transform_8(%arg0: i32) -> (i32, i32) {
    %c0_i32 = arith.constant 0 : i32
    %c0_i32_0 = arith.constant 0 : i32
    %c0_i32_1 = arith.constant 0 : i32
    return %c0_i32, %c0_i32_0 : i32, i32
  }
  func.func @transform_9(%arg0: i32) -> (i32, i32) {
    %c0_i32 = arith.constant 0 : i32
    %c0_i32_0 = arith.constant 0 : i32
    %c0_i32_1 = arith.constant 0 : i32
    return %c0_i32, %c0_i32_0 : i32, i32
  }
  func.func @transform_10(%arg0: i32) -> (i32, i32) {
    %c0_i32 = arith.constant 0 : i32
    %c0_i32_0 = arith.constant 0 : i32
    %c0_i32_1 = arith.constant 0 : i32
    return %c0_i32, %c0_i32_0 : i32, i32
  }
  func.func @transform_11(%arg0: i32) -> (i32, i32) {
    %c0_i32 = arith.constant 0 : i32
    %c0_i32_0 = arith.constant 0 : i32
    %c0_i32_1 = arith.constant 0 : i32
    return %c0_i32, %c0_i32_0 : i32, i32
  }
  func.func @transform_12(%arg0: i32) -> (i32, i32, i32) {
    %c0_i32 = arith.constant 0 : i32
    %c0_i32_0 = arith.constant 0 : i32
    %c0_i32_1 = arith.constant 0 : i32
    return %arg0, %c0_i32, %c0_i32_0 : i32, i32, i32
  }
}

</mosaic_0001>

<llo_original>
// kernel: tpu_custom_call.1
$region0: #{tpu_custom_call.1}
  #allocation0 [shape = 'u32[]', space=smem, size = 0x4, offset = 0x4, fixed_abs, tag = 'smem constant byte address 0x4 - core index']
  #allocation1 [shape = 'u32[144,128]{1,0:T(1,128)}', space=vmem, size = 0x12000, scoped, tag = 'internal scratch']
  %s0 = inlined_call_operand.vmem [shape: f32[2,8,32], index: 0, kind: input, shape index: {}]
  %s1 = inlined_call_operand.vmem [shape: f32[2,8,32], index: 1, kind: input, shape index: {}]
  %s2 = inlined_call_operand.vmem [shape: bf16[3,4,32,8], index: 2, kind: input, shape index: {}]
  %s3 = inlined_call_operand.vmem [shape: f32[3,4,1,8], index: 3, kind: input, shape index: {}]
  %s4 = inlined_call_operand.vmem [shape: bf16[4,8,32], index: 4, kind: input, shape index: {}]
  %s5 = inlined_call_operand.vmem [shape: bf16[3,4,32,8], index: 5, kind: input, shape index: {}]
  %s6 = inlined_call_operand.vmem [shape: f32[3,4,1,8], index: 6, kind: input, shape index: {}]
  %s7 = inlined_call_operand.vmem [shape: bf16[4,8,32], index: 7, kind: input, shape index: {}]
  %s8 = inlined_call_operand.vmem [shape: bf16[32,2048], index: 8, kind: input, shape index: {}]
  %s9 = inlined_call_operand.vmem [shape: f32[1,2048], index: 9, kind: input, shape index: {}]
  %s10 = inlined_call_operand.vmem [shape: bf16[2048,32], index: 10, kind: input, shape index: {}]
  %s11 = inlined_call_operand.vmem [shape: f32[9,32], index: 11, kind: input, shape index: {}]
  %s12 = inlined_call_operand.hbm [shape: f32[2,8,32], index: 12, kind: output, shape index: {}]
  %s13 = sld [smem:[#allocation0]]
  $region81: #{tpu_custom_call.1} parent=0
    _
  %s15 = ssub.s32 1, %s13
  %s16 = scalar_select 0, %s15, %s13
  $region1: #{tpu_custom_call.1} parent=0
    #allocation2 [shape = 'u8[8192]{0}', space=vmem, size = 0x2000, scoped, tag = 'output window, operand 0']
    #allocation3 [shape = 's32[2]{0}', space=sflag, size = 0x8, scoped, tag = 'scoped memory for tpu_custom_call.1']
    %17 = vsyncpa [#allocation3], 0
    %s18 = scalar_lea.sflag [#allocation3], 1
    %19 = vsyncpa %s18, 0
    loop: start=0, step=1, limit=4
    $region2: #{tpu_custom_call.1} parent=1 // loop_pre_header
      _
    $region3: #{tpu_custom_call.1} parent=1 // loop_header
      %s21 = sphi 0, %s25
      %p22 = scmp.ge.s32.totalorder %s21, 4
      %s31 = sphi 0, %s33
      %s34 = sphi 0, %s31
      %s35 = sphi 0, %s34
      %s51 = sphi 0, %s35
      %s57 = sphi 0, %s59
      %s60 = sphi 0, %s57
      %s61 = sphi 0, %s60
      %s77 = sphi 0, %s61
      %s81 = sphi 0, %s81
      %s83 = sphi 0, %s81
      %s84 = sphi 0, %s83
      %s98 = sphi 0, %s84
      %s102 = sphi 0, %s102
      %s104 = sphi 0, %s102
      %s105 = sphi 0, %s104
      %s119 = sphi 0, %s105
      %s123 = sphi 0, %s123
      %s125 = sphi 0, %s123
      %s126 = sphi 0, %s125
      %s140 = sphi 0, %s126
      %s144 = sphi 0, %s144
      %s146 = sphi 0, %s144
      %s147 = sphi 0, %s146
      %s161 = sphi 0, %s147
      %s165 = sphi 0, %s165
      %s167 = sphi 0, %s165
      %s168 = sphi 0, %s167
      %s182 = sphi 0, %s168
      %s186 = sphi 0, %s186
      %s188 = sphi 0, %s186
      %s189 = sphi 0, %s188
      %s203 = sphi 0, %s189
      %s207 = sphi 0, %s207
      %s209 = sphi 0, %s207
      %s210 = sphi 0, %s209
      %s224 = sphi 0, %s210
      %s228 = sphi 0, %s228
      %s230 = sphi 0, %s228
      %s231 = sphi 0, %s230
      %s245 = sphi 0, %s231
      %s249 = sphi 0, %s249
      %s251 = sphi 0, %s249
      %s252 = sphi 0, %s251
      %s266 = sphi 0, %s252
      %s270 = sphi 0, %s270
      %s272 = sphi 0, %s270
      %s273 = sphi 0, %s272
      %s287 = sphi 0, %s273
      %s293 = sphi 0, %s295
      %s296 = sphi 0, %s293
      %s297 = sphi 0, %s296
      %s313 = sphi 0, %s297
    $region4: #{tpu_custom_call.1} parent=1 // loop_header_branch
      %24 = sbr.rel (%p22) target = $region8
    $region5: #{tpu_custom_call.1} parent=1 // loop_body
      %s26 = ssub.s32 %s21, 1
      %s27 = ssub.s32 %s21, 2
      %s28 = sadd.s32 %s21, 1
      %s29 = ssub.s32 %s21, %s28
      %p30 = scmp.eq.s32.totalorder %s29, 0
      %s32 = sadd.s32 %s31, 1
      %s33 = scalar_select %p30, %s31, %s32
      %p36 = pneg %p30
      %p37 = scmp.eq.s32.totalorder %s21, 1
      %p38 = por %p36, %p37
      %p39 = scmp.ne.s32.totalorder %s31, %s34
      %p40 = scmp.eq.s32.totalorder %s21, 0
      %p41 = por %p39, %p40
      %p42 = scmp.ne.s32.totalorder %s31, %s34
      %p43 = scmp.eq.s32.totalorder %s26, 1
      %p44 = por %p42, %p43
      %p45 = scmp.ne.s32.totalorder %s34, %s35
      %p46 = scmp.eq.s32.totalorder %s26, 0
      %p47 = por %p45, %p46
      %p48 = scmp.ne.s32.totalorder %s34, %s35
      %p49 = scmp.eq.s32.totalorder %s27, 1
      %p50 = por %p48, %p49
      %p52 = scmp.ne.s32.totalorder %s35, %s51
      %p53 = scmp.eq.s32.totalorder %s27, 0
      %p54 = por %p52, %p53
      %s55 = ssub.s32 %s21, %s28
      %p56 = scmp.eq.s32.totalorder %s55, 0
      %s58 = sadd.s32 %s57, 1
      %s59 = scalar_select %p56, %s57, %s58
      %p62 = pneg %p56
      %p63 = scmp.eq.s32.totalorder %s21, 1
      %p64 = por %p62, %p63
      %p65 = scmp.ne.s32.totalorder %s57, %s60
      %p66 = scmp.eq.s32.totalorder %s21, 0
      %p67 = por %p65, %p66
      %p68 = scmp.ne.s32.totalorder %s57, %s60
      %p69 = scmp.eq.s32.totalorder %s26, 1
      %p70 = por %p68, %p69
      %p71 = scmp.ne.s32.totalorder %s60, %s61
      %p72 = scmp.eq.s32.totalorder %s26, 0
      %p73 = por %p71, %p72
      %p74 = scmp.ne.s32.totalorder %s60, %s61
      %p75 = scmp.eq.s32.totalorder %s27, 1
      %p76 = por %p74, %p75
      %p78 = scmp.ne.s32.totalorder %s61, %s77
      %p79 = scmp.eq.s32.totalorder %s27, 0
      %p80 = por %p78, %p79
      %s82 = sadd.s32 %s81, 1
      %p85 = scmp.eq.s32.totalorder %s21, 1
      %p86 = scmp.ne.s32.totalorder %s81, %s83
      %p87 = scmp.eq.s32.totalorder %s21, 0
      %p88 = por %p86, %p87
      %p89 = scmp.ne.s32.totalorder %s81, %s83
      %p90 = scmp.eq.s32.totalorder %s26, 1
      %p91 = por %p89, %p90
      %p92 = scmp.ne.s32.totalorder %s83, %s84
      %p93 = scmp.eq.s32.totalorder %s26, 0
      %p94 = por %p92, %p93
      %p95 = scmp.ne.s32.totalorder %s83, %s84
      %p96 = scmp.eq.s32.totalorder %s27, 1
      %p97 = por %p95, %p96
      %p99 = scmp.ne.s32.totalorder %s84, %s98
      %p100 = scmp.eq.s32.totalorder %s27, 0
      %p101 = por %p99, %p100
      %s103 = sadd.s32 %s102, 1
      %p106 = scmp.eq.s32.totalorder %s21, 1
      %p107 = scmp.ne.s32.totalorder %s102, %s104
      %p108 = scmp.eq.s32.totalorder %s21, 0
      %p109 = por %p107, %p108
      %p110 = scmp.ne.s32.totalorder %s102, %s104
      %p111 = scmp.eq.s32.totalorder %s26, 1
      %p112 = por %p110, %p111
      %p113 = scmp.ne.s32.totalorder %s104, %s105
      %p114 = scmp.eq.s32.totalorder %s26, 0
      %p115 = por %p113, %p114
      %p116 = scmp.ne.s32.totalorder %s104, %s105
      %p117 = scmp.eq.s32.totalorder %s27, 1
      %p118 = por %p116, %p117
      %p120 = scmp.ne.s32.totalorder %s105, %s119
      %p121 = scmp.eq.s32.totalorder %s27, 0
      %p122 = por %p120, %p121
      %s124 = sadd.s32 %s123, 1
      %p127 = scmp.eq.s32.totalorder %s21, 1
      %p128 = scmp.ne.s32.totalorder %s123, %s125
      %p129 = scmp.eq.s32.totalorder %s21, 0
      %p130 = por %p128, %p129
      %p131 = scmp.ne.s32.totalorder %s123, %s125
      %p132 = scmp.eq.s32.totalorder %s26, 1
      %p133 = por %p131, %p132
      %p134 = scmp.ne.s32.totalorder %s125, %s126
      %p135 = scmp.eq.s32.totalorder %s26, 0
      %p136 = por %p134, %p135
      %p137 = scmp.ne.s32.totalorder %s125, %s126
      %p138 = scmp.eq.s32.totalorder %s27, 1
      %p139 = por %p137, %p138
      %p141 = scmp.ne.s32.totalorder %s126, %s140
      %p142 = scmp.eq.s32.totalorder %s27, 0
      %p143 = por %p141, %p142
      %s145 = sadd.s32 %s144, 1
      %p148 = scmp.eq.s32.totalorder %s21, 1
      %p149 = scmp.ne.s32.totalorder %s144, %s146
      %p150 = scmp.eq.s32.totalorder %s21, 0
      %p151 = por %p149, %p150
      %p152 = scmp.ne.s32.totalorder %s144, %s146
      %p153 = scmp.eq.s32.totalorder %s26, 1
      %p154 = por %p152, %p153
      %p155 = scmp.ne.s32.totalorder %s146, %s147
      %p156 = scmp.eq.s32.totalorder %s26, 0
      %p157 = por %p155, %p156
      %p158 = scmp.ne.s32.totalorder %s146, %s147
      %p159 = scmp.eq.s32.totalorder %s27, 1
      %p160 = por %p158, %p159
      %p162 = scmp.ne.s32.totalorder %s147, %s161
      %p163 = scmp.eq.s32.totalorder %s27, 0
      %p164 = por %p162, %p163
      %s166 = sadd.s32 %s165, 1
      %p169 = scmp.eq.s32.totalorder %s21, 1
      %p170 = scmp.ne.s32.totalorder %s165, %s167
      %p171 = scmp.eq.s32.totalorder %s21, 0
      %p172 = por %p170, %p171
      %p173 = scmp.ne.s32.totalorder %s165, %s167
      %p174 = scmp.eq.s32.totalorder %s26, 1
      %p175 = por %p173, %p174
      %p176 = scmp.ne.s32.totalorder %s167, %s168
      %p177 = scmp.eq.s32.totalorder %s26, 0
      %p178 = por %p176, %p177
      %p179 = scmp.ne.s32.totalorder %s167, %s168
      %p180 = scmp.eq.s32.totalorder %s27, 1
      %p181 = por %p179, %p180
      %p183 = scmp.ne.s32.totalorder %s168, %s182
      %p184 = scmp.eq.s32.totalorder %s27, 0
      %p185 = por %p183, %p184
      %s187 = sadd.s32 %s186, 1
      %p190 = scmp.eq.s32.totalorder %s21, 1
      %p191 = scmp.ne.s32.totalorder %s186, %s188
      %p192 = scmp.eq.s32.totalorder %s21, 0
      %p193 = por %p191, %p192
      %p194 = scmp.ne.s32.totalorder %s186, %s188
      %p195 = scmp.eq.s32.totalorder %s26, 1
      %p196 = por %p194, %p195
      %p197 = scmp.ne.s32.totalorder %s188, %s189
      %p198 = scmp.eq.s32.totalorder %s26, 0
      %p199 = por %p197, %p198
      %p200 = scmp.ne.s32.totalorder %s188, %s189
      %p201 = scmp.eq.s32.totalorder %s27, 1
      %p202 = por %p200, %p201
      %p204 = scmp.ne.s32.totalorder %s189, %s203
      %p205 = scmp.eq.s32.totalorder %s27, 0
      %p206 = por %p204, %p205
      %s208 = sadd.s32 %s207, 1
      %p211 = scmp.eq.s32.totalorder %s21, 1
      %p212 = scmp.ne.s32.totalorder %s207, %s209
      %p213 = scmp.eq.s32.totalorder %s21, 0
      %p214 = por %p212, %p213
      %p215 = scmp.ne.s32.totalorder %s207, %s209
      %p216 = scmp.eq.s32.totalorder %s26, 1
      %p217 = por %p215, %p216
      %p218 = scmp.ne.s32.totalorder %s209, %s210
      %p219 = scmp.eq.s32.totalorder %s26, 0
      %p220 = por %p218, %p219
      %p221 = scmp.ne.s32.totalorder %s209, %s210
      %p222 = scmp.eq.s32.totalorder %s27, 1
      %p223 = por %p221, %p222
      %p225 = scmp.ne.s32.totalorder %s210, %s224
      %p226 = scmp.eq.s32.totalorder %s27, 0
      %p227 = por %p225, %p226
      %s229 = sadd.s32 %s228, 1
      %p232 = scmp.eq.s32.totalorder %s21, 1
      %p233 = scmp.ne.s32.totalorder %s228, %s230
      %p234 = scmp.eq.s32.totalorder %s21, 0
      %p235 = por %p233, %p234
      %p236 = scmp.ne.s32.totalorder %s228, %s230
      %p237 = scmp.eq.s32.totalorder %s26, 1
      %p238 = por %p236, %p237
      %p239 = scmp.ne.s32.totalorder %s230, %s231
      %p240 = scmp.eq.s32.totalorder %s26, 0
      %p241 = por %p239, %p240
      %p242 = scmp.ne.s32.totalorder %s230, %s231
      %p243 = scmp.eq.s32.totalorder %s27, 1
      %p244 = por %p242, %p243
      %p246 = scmp.ne.s32.totalorder %s231, %s245
      %p247 = scmp.eq.s32.totalorder %s27, 0
      %p248 = por %p246, %p247
      %s250 = sadd.s32 %s249, 1
      %p253 = scmp.eq.s32.totalorder %s21, 1
      %p254 = scmp.ne.s32.totalorder %s249, %s251
      %p255 = scmp.eq.s32.totalorder %s21, 0
      %p256 = por %p254, %p255
      %p257 = scmp.ne.s32.totalorder %s249, %s251
      %p258 = scmp.eq.s32.totalorder %s26, 1
      %p259 = por %p257, %p258
      %p260 = scmp.ne.s32.totalorder %s251, %s252
      %p261 = scmp.eq.s32.totalorder %s26, 0
      %p262 = por %p260, %p261
      %p263 = scmp.ne.s32.totalorder %s251, %s252
      %p264 = scmp.eq.s32.totalorder %s27, 1
      %p265 = por %p263, %p264
      %p267 = scmp.ne.s32.totalorder %s252, %s266
      %p268 = scmp.eq.s32.totalorder %s27, 0
      %p269 = por %p267, %p268
      %s271 = sadd.s32 %s270, 1
      %p274 = scmp.eq.s32.totalorder %s21, 1
      %p275 = scmp.ne.s32.totalorder %s270, %s272
      %p276 = scmp.eq.s32.totalorder %s21, 0
      %p277 = por %p275, %p276
      %p278 = scmp.ne.s32.totalorder %s270, %s272
      %p279 = scmp.eq.s32.totalorder %s26, 1
      %p280 = por %p278, %p279
      %p281 = scmp.ne.s32.totalorder %s272, %s273
      %p282 = scmp.eq.s32.totalorder %s26, 0
      %p283 = por %p281, %p282
      %p284 = scmp.ne.s32.totalorder %s272, %s273
      %p285 = scmp.eq.s32.totalorder %s27, 1
      %p286 = por %p284, %p285
      %p288 = scmp.ne.s32.totalorder %s273, %s287
      %p289 = scmp.eq.s32.totalorder %s27, 0
      %p290 = por %p288, %p289
      %s291 = ssub.s32 %s21, %s28
      %p292 = scmp.eq.s32.totalorder %s291, 0
      %s294 = sadd.s32 %s293, 1
      %s295 = scalar_select %p292, %s293, %s294
      %p298 = pneg %p292
      %p299 = scmp.eq.s32.totalorder %s21, 1
      %p300 = por %p298, %p299
      %p301 = scmp.ne.s32.totalorder %s293, %s296
      %p302 = scmp.eq.s32.totalorder %s21, 0
      %p303 = por %p301, %p302
      %p304 = scmp.ne.s32.totalorder %s293, %s296
      %p305 = scmp.eq.s32.totalorder %s26, 1
      %p306 = por %p304, %p305
      %p307 = scmp.ne.s32.totalorder %s296, %s297
      %p308 = scmp.eq.s32.totalorder %s26, 0
      %p309 = por %p307, %p308
      %p310 = scmp.ne.s32.totalorder %s296, %s297
      %p311 = scmp.eq.s32.totalorder %s27, 1
      %p312 = por %p310, %p311
      %p314 = scmp.ne.s32.totalorder %s297, %s313
      %p315 = scmp.eq.s32.totalorder %s27, 0
      %p316 = por %p314, %p315
      %p317 = scmp.le.s32.totalorder 1, %s21
      %p318 = scmp.lt.s32.totalorder %s21, 3
      %p319 = pnand %p317, %p318
      %p320 = pneg %p319
      // Predicated region
      $region9: #{tpu_custom_call.1} parent=5 // pred_check
        _
      $region10: #{tpu_custom_call.1} parent=5 // pred_check_branch
        %322 = sbr.rel (%p319) target = $region12
      $region11: #{tpu_custom_call.1} parent=5 // pred_region
        %s323 = ssub.s32 %s21, 1
        // Predicated region
        $region13: #{tpu_custom_call.1} parent=11 // pred_check
          %p324 = pneg %p94
        $region14: #{tpu_custom_call.1} parent=11 // pred_check_branch
          %326 = sbr.rel (%p324) target = $region16
        $region15: #{tpu_custom_call.1} parent=11 // pred_region
          _
        $region16: #{tpu_custom_call.1} parent=11 // pred_fallthru
          _
        // Predicated region
        $region17: #{tpu_custom_call.1} parent=11 // pred_check
          %p327 = pneg %p115
        $region18: #{tpu_custom_call.1} parent=11 // pred_check_branch
          %329 = sbr.rel (%p327) target = $region20
        $region19: #{tpu_custom_call.1} parent=11 // pred_region
          _
        $region20: #{tpu_custom_call.1} parent=11 // pred_fallthru
          _
        // Predicated region
        $region21: #{tpu_custom_call.1} parent=11 // pred_check
          %p330 = pneg %p136
        $region22: #{tpu_custom_call.1} parent=11 // pred_check_branch
          %332 = sbr.rel (%p330) target = $region24
        $region23: #{tpu_custom_call.1} parent=11 // pred_region
          _
        $region24: #{tpu_custom_call.1} parent=11 // pred_fallthru
          _
        // Predicated region
        $region25: #{tpu_custom_call.1} parent=11 // pred_check
          %p333 = pneg %p157
        $region26: #{tpu_custom_call.1} parent=11 // pred_check_branch
          %335 = sbr.rel (%p333) target = $region28
        $region27: #{tpu_custom_call.1} parent=11 // pred_region
          _
        $region28: #{tpu_custom_call.1} parent=11 // pred_fallthru
          _
        // Predicated region
        $region29: #{tpu_custom_call.1} parent=11 // pred_check
          %p336 = pneg %p178
        $region30: #{tpu_custom_call.1} parent=11 // pred_check_branch
          %338 = sbr.rel (%p336) target = $region32
        $region31: #{tpu_custom_call.1} parent=11 // pred_region
          _
        $region32: #{tpu_custom_call.1} parent=11 // pred_fallthru
          _
        // Predicated region
        $region33: #{tpu_custom_call.1} parent=11 // pred_check
          %p339 = pneg %p199
        $region34: #{tpu_custom_call.1} parent=11 // pred_check_branch
          %341 = sbr.rel (%p339) target = $region36
        $region35: #{tpu_custom_call.1} parent=11 // pred_region
          _
        $region36: #{tpu_custom_call.1} parent=11 // pred_fallthru
          _
        // Predicated region
        $region37: #{tpu_custom_call.1} parent=11 // pred_check
          %p342 = pneg %p220
        $region38: #{tpu_custom_call.1} parent=11 // pred_check_branch
          %344 = sbr.rel (%p342) target = $region40
        $region39: #{tpu_custom_call.1} parent=11 // pred_region
          _
        $region40: #{tpu_custom_call.1} parent=11 // pred_fallthru
          _
        // Predicated region
        $region41: #{tpu_custom_call.1} parent=11 // pred_check
          %p345 = pneg %p241
        $region42: #{tpu_custom_call.1} parent=11 // pred_check_branch
          %347 = sbr.rel (%p345) target = $region44
        $region43: #{tpu_custom_call.1} parent=11 // pred_region
          _
        $region44: #{tpu_custom_call.1} parent=11 // pred_fallthru
          _
        // Predicated region
        $region45: #{tpu_custom_call.1} parent=11 // pred_check
          %p348 = pneg %p262
        $region46: #{tpu_custom_call.1} parent=11 // pred_check_branch
          %350 = sbr.rel (%p348) target = $region48
        $region47: #{tpu_custom_call.1} parent=11 // pred_region
          _
        $region48: #{tpu_custom_call.1} parent=11 // pred_fallthru
          _
        // Predicated region
        $region49: #{tpu_custom_call.1} parent=11 // pred_check
          %p351 = pneg %p283
        $region50: #{tpu_custom_call.1} parent=11 // pred_check_branch
          %353 = sbr.rel (%p351) target = $region52
        $region51: #{tpu_custom_call.1} parent=11 // pred_region
          _
        $region52: #{tpu_custom_call.1} parent=11 // pred_fallthru
          _
      $region12: #{tpu_custom_call.1} parent=5 // pred_fallthru
        _
      %p354 = scmp.lt.s32.totalorder %s21, 2
      // Predicated region
      $region53: #{tpu_custom_call.1} parent=5 // pred_check
        %p355 = pneg %p354
      $region54: #{tpu_custom_call.1} parent=5 // pred_check_branch
        %357 = sbr.rel (%p355) target = $region56
      $region55: #{tpu_custom_call.1} parent=5 // pred_region
        // Predicated region
        $region57: #{tpu_custom_call.1} parent=55 // pred_check
          %p358 = pneg %p41
        $region58: #{tpu_custom_call.1} parent=55 // pred_check_branch
          %360 = sbr.rel (%p358) target = $region60
        $region59: #{tpu_custom_call.1} parent=55 // pred_region
          %p361 = scmp.lt.s32.totalorder %s21, 1
          %s362 = scalar_select %p361, %s21, 1
          %s363 = smul.addr %s362, 8
          %s364 = scalar_lea.vmem %s0, %s363
        $region60: #{tpu_custom_call.1} parent=55 // pred_fallthru
          _
        // Predicated region
        $region61: #{tpu_custom_call.1} parent=55 // pred_check
          %p365 = pneg %p67
        $region62: #{tpu_custom_call.1} parent=55 // pred_check_branch
          %367 = sbr.rel (%p365) target = $region64
        $region63: #{tpu_custom_call.1} parent=55 // pred_region
          %p368 = scmp.lt.s32.totalorder %s21, 1
          %s369 = scalar_select %p368, %s21, 1
          %s370 = smul.addr %s369, 8
          %s371 = scalar_lea.vmem %s1, %s370
        $region64: #{tpu_custom_call.1} parent=55 // pred_fallthru
          _
      $region56: #{tpu_custom_call.1} parent=5 // pred_fallthru
        _
      %p372 = scmp.le.s32.totalorder 1, %s21
      %p373 = scmp.lt.s32.totalorder %s21, 3
      %p374 = pnand %p372, %p373
      %p375 = pneg %p374
      // Predicated region
      $region65: #{tpu_custom_call.1} parent=5 // pred_check
        _
      $region66: #{tpu_custom_call.1} parent=5 // pred_check_branch
        %377 = sbr.rel (%p374) target = $region68
      $region67: #{tpu_custom_call.1} parent=5 // pred_region
        %s378 = ssub.s32 %s21, 1
        %p379 = scmp.lt.s32.totalorder %s26, 1
        %s380 = scalar_select %p379, %s26, 1
        %s381 = smul.addr %s380, 8
        %s382 = scalar_lea.vmem %s0, %s381
        %p383 = pneg %p47
        %p384 = pneg %p44
        %p385 = scmp.lt.s32.totalorder %s26, 1
        %s386 = scalar_select %p385, %s26, 1
        %s387 = smul.addr %s386, 8
        %s388 = scalar_lea.vmem %s1, %s387
        %p389 = pneg %p73
        %p390 = pneg %p70
        %p391 = pneg %p94
        %p392 = pneg %p91
        %p393 = pneg %p115
        %p394 = pneg %p112
        %p395 = pneg %p136
        %p396 = pneg %p133
        %p397 = pneg %p157
        %p398 = pneg %p154
        %p399 = pneg %p178
        %p400 = pneg %p175
        %p401 = pneg %p199
        %p402 = pneg %p196
        %p403 = pneg %p220
        %p404 = pneg %p217
        %p405 = pneg %p241
        %p406 = pneg %p238
        %p407 = pneg %p262
        %p408 = pneg %p259
        %p409 = pneg %p283
        %p410 = pneg %p280
        %p411 = pneg %p309
        %p412 = pneg %p306
        %s413 = sand.u32 %s296, 1
        %s414 = scalar_lea.sflag [#allocation3], %s413
        %s415 = sand.u32 %s296, 1
        %s416 = smul.addr %s415, 8
        %s417 = scalar_lea.vmem [#allocation2], %s416
        %p418 = scmp.lt.s32.totalorder %s26, 1
        %s419 = scalar_select %p418, %s26, 1
        %s420 = smul.addr %s419, 8
        %s421 = scalar_lea.vmem %s0, %s420
        %p422 = scmp.lt.s32.totalorder %s26, 1
        %s423 = scalar_select %p422, %s26, 1
        %s424 = smul.addr %s423, 8
        %s425 = scalar_lea.vmem %s1, %s424
        %v427 = vld [vmem:[%s421] sm:$0xff]
        %v428 = vld [vmem:[%s425] sm:$0xff]
        %v429 = vld [vmem:[%s11] sm:$0xff]
        %v430 = vld [vmem:[%s11 + $0x8] sm:$0x1]
        %v431 = vlaneseq
        %v432 = vshrl.u32 %v431, 7
        %v433 = vlaneseq
        %v434 = vand.u32 %v433, 127
        %vm435 = vcmp.ge.s32.totalorder %v432, %v434
        %v436 = vsel %vm435, 0.0, -1e+30
        %v437 = vld [vmem:[%s2] sm:$0xf]
        %v438 = vld [vmem:[%s2 + $0x4] sm:$0xf]
        %v439 = vld [vmem:[%s2 + $0x8] sm:$0xf]
        %v440 = vld [vmem:[%s2 + $0xc] sm:$0xf]
        %v441 = vld [vmem:[%s2 + $0x10] sm:$0xf]
        %v442 = vld [vmem:[%s2 + $0x14] sm:$0xf]
        %v443 = vld [vmem:[%s2 + $0x18] sm:$0xf]
        %v444 = vld [vmem:[%s2 + $0x1c] sm:$0xf]
        %v445 = vld [vmem:[%s2 + $0x20] sm:$0xf]
        %v446 = vld [vmem:[%s2 + $0x24] sm:$0xf]
        %v447 = vld [vmem:[%s2 + $0x28] sm:$0xf]
        %v448 = vld [vmem:[%s2 + $0x2c] sm:$0xf]
        %v449 = vld [vmem:[%s2 + $0x30] sm:$0xf]
        %v450 = vld [vmem:[%s2 + $0x34] sm:$0xf]
        %v451 = vld [vmem:[%s2 + $0x38] sm:$0xf]
        %v452 = vld [vmem:[%s2 + $0x3c] sm:$0xf]
        %v453 = vld [vmem:[%s2 + $0x40] sm:$0xf]
        %v454 = vld [vmem:[%s2 + $0x44] sm:$0xf]
        %v455 = vld [vmem:[%s2 + $0x48] sm:$0xf]
        %v456 = vld [vmem:[%s2 + $0x4c] sm:$0xf]
        %v457 = vld [vmem:[%s2 + $0x50] sm:$0xf]
        %v458 = vld [vmem:[%s2 + $0x54] sm:$0xf]
        %v459 = vld [vmem:[%s2 + $0x58] sm:$0xf]
        %v460 = vld [vmem:[%s2 + $0x5c] sm:$0xf]
        %v461 = vld [vmem:[%s2 + $0x60] sm:$0xf]
        %v462 = vld [vmem:[%s2 + $0x64] sm:$0xf]
        %v463 = vld [vmem:[%s2 + $0x68] sm:$0xf]
        %v464 = vld [vmem:[%s2 + $0x6c] sm:$0xf]
        %v465 = vld [vmem:[%s2 + $0x70] sm:$0xf]
        %v466 = vld [vmem:[%s2 + $0x74] sm:$0xf]
        %v467 = vld [vmem:[%s2 + $0x78] sm:$0xf]
        %v468 = vld [vmem:[%s2 + $0x7c] sm:$0xf]
        %v469 = vld [vmem:[%s2 + $0x80] sm:$0xf]
        %v470 = vld [vmem:[%s2 + $0x84] sm:$0xf]
        %v471 = vld [vmem:[%s2 + $0x88] sm:$0xf]
        %v472 = vld [vmem:[%s2 + $0x8c] sm:$0xf]
        %v473 = vld [vmem:[%s2 + $0x90] sm:$0xf]
        %v474 = vld [vmem:[%s2 + $0x94] sm:$0xf]
        %v475 = vld [vmem:[%s2 + $0x98] sm:$0xf]
        %v476 = vld [vmem:[%s2 + $0x9c] sm:$0xf]
        %v477 = vld [vmem:[%s2 + $0xa0] sm:$0xf]
        %v478 = vld [vmem:[%s2 + $0xa4] sm:$0xf]
        %v479 = vld [vmem:[%s2 + $0xa8] sm:$0xf]
        %v480 = vld [vmem:[%s2 + $0xac] sm:$0xf]
        %v481 = vld [vmem:[%s2 + $0xb0] sm:$0xf]
        %v482 = vld [vmem:[%s2 + $0xb4] sm:$0xf]
        %v483 = vld [vmem:[%s2 + $0xb8] sm:$0xf]
        %v484 = vld [vmem:[%s2 + $0xbc] sm:$0xf]
        %v485 = vld [vmem:[%s3] sm:$0x1]
        %v486 = vld [vmem:[%s3 + $0x1] sm:$0x1]
        %v487 = vld [vmem:[%s3 + $0x2] sm:$0x1]
        %v488 = vld [vmem:[%s3 + $0x3] sm:$0x1]
        %v489 = vld [vmem:[%s3 + $0x4] sm:$0x1]
        %v490 = vld [vmem:[%s3 + $0x5] sm:$0x1]
        %v491 = vld [vmem:[%s3 + $0x6] sm:$0x1]
        %v492 = vld [vmem:[%s3 + $0x7] sm:$0x1]
        %v493 = vld [vmem:[%s3 + $0x8] sm:$0x1]
        %v494 = vld [vmem:[%s3 + $0x9] sm:$0x1]
        %v495 = vld [vmem:[%s3 + $0xa] sm:$0x1]
        %v496 = vld [vmem:[%s3 + $0xb] sm:$0x1]
        %v497 = vld [vmem:[%s4] sm:$0xf]
        %v498 = vld [vmem:[%s4 + $0x4] sm:$0xf]
        %v499 = vld [vmem:[%s4 + $0x8] sm:$0xf]
        %v500 = vld [vmem:[%s4 + $0xc] sm:$0xf]
        %v501 = vpack.c.bf16 %v428, %v428
        %v506 = vlaneseq
        %v507 = vshrl.u32 %v506, 7
        %v508 = vsub.s32 0, %v507
        %v509 = vrot.slane %v485, %v508
        %v510 = vlaneseq
        %v511 = vshrl.u32 %v510, 7
        %v512 = vsub.s32 0, %v511
        %v513 = vrot.slane %v486, %v512
        %v514 = vlaneseq
        %v515 = vshrl.u32 %v514, 7
        %v516 = vsub.s32 0, %v515
        %v517 = vrot.slane %v487, %v516
        %v518 = vlaneseq
        %v519 = vshrl.u32 %v518, 7
        %v520 = vsub.s32 0, %v519
        %v521 = vrot.slane %v488, %v520
        %v530 = vunpack.c.l.b16 %v437
        %v531 = vunpack.c.l.b16 %v438
        %v532 = vunpack.c.l.b16 %v439
        %v533 = vunpack.c.l.b16 %v440
        %v534 = vpack.c.b16 %v531, %v530
        %v535 = vpack.c.b16 %v533, %v532
        %vm538 = vcmask 261120
        %v540 = vsel %vm538, %v501, 0
        %542 = vmatprep.subr.bf16.mxu0 0
        %543 = vmatpush1.bf16.msra.mxu0 %v534
        %544 = vmatprep.subr.bf16.mxu0 0
        %545 = vmatpush1.bf16.msra.mxu0 %v535
        %546 = vmatprep.subr.bf16.mxu0 0
        %547 = vmatpush1.bf16.msra.mxu0 0
        %548 = vmatprep.subr.bf16.mxu0 0
        %549 = vmatpush1.bf16.msra.mxu0 0
        %550 = vmatprep.subr.bf16.mxu0 0
        %551 = vmatpush1.bf16.msra.mxu0 0
        %552 = vmatprep.subr.bf16.mxu0 0
        %553 = vmatpush1.bf16.msra.mxu0 0
        %554 = vmatprep.subr.bf16.mxu0 0
        %555 = vmatpush1.bf16.msra.mxu0 0
        %556 = vmatprep.subr.bf16.mxu0 0
        %557 = vmatpush1.bf16.msra.mxu0 0
        %558 = vmatprep.subr.bf16.mxu0 0
        %559 = vmatpush1.bf16.msra.mxu0 0
        %560 = vmatprep.subr.bf16.mxu0 0
        %561 = vmatpush1.bf16.msra.mxu0 0
        %562 = vmatprep.subr.bf16.mxu0 0
        %563 = vmatpush1.bf16.msra.mxu0 0
        %564 = vmatprep.subr.bf16.mxu0 0
        %565 = vmatpush1.bf16.msra.mxu0 0
        %566 = vmatprep.subr.bf16.mxu0 0
        %567 = vmatpush1.bf16.msra.mxu0 0
        %568 = vmatprep.subr.bf16.mxu0 0
        %569 = vmatpush1.bf16.msra.mxu0 0
        %570 = vmatprep.subr.bf16.mxu0 0
        %571 = vmatpush1.bf16.msra.mxu0 0
        %572 = vmatprep.subr.bf16.mxu0 0
        %573 = vmatpush1.bf16.msra.mxu0 0
        %574 = vmatprep.mubr.bf16.mxu0 0
        %575 = vmatmul.mubr.bf16.gmra.mrb[0].mxu0 %v540
        %v576 = vpop.f32.mrb[0].mxu0
        %v577 = vadd.f32 %v509, %v576
        %v578 = vpop.f32.mrb[0].mxu0
        %v579 = vpop.f32.mrb[0].mxu0
        %v580 = vpop.f32.mrb[0].mxu0
        %581 = vdwg.mxu0
        %v586 = vunpack.c.l.b16 %v441
        %v587 = vunpack.c.l.b16 %v442
        %v588 = vunpack.c.l.b16 %v443
        %v589 = vunpack.c.l.b16 %v444
        %v590 = vpack.c.b16 %v587, %v586
        %v591 = vpack.c.b16 %v589, %v588
        %594 = vmatprep.subr.bf16.mxu0 0
        %595 = vmatpush1.bf16.msra.mxu0 %v590
        %596 = vmatprep.subr.bf16.mxu0 0
        %597 = vmatpush1.bf16.msra.mxu0 %v591
        %598 = vmatprep.subr.bf16.mxu0 0
        %599 = vmatpush1.bf16.msra.mxu0 0
        %600 = vmatprep.subr.bf16.mxu0 0
        %601 = vmatpush1.bf16.msra.mxu0 0
        %602 = vmatprep.subr.bf16.mxu0 0
        %603 = vmatpush1.bf16.msra.mxu0 0
        %604 = vmatprep.subr.bf16.mxu0 0
        %605 = vmatpush1.bf16.msra.mxu0 0
        %606 = vmatprep.subr.bf16.mxu0 0
        %607 = vmatpush1.bf16.msra.mxu0 0
        %608 = vmatprep.subr.bf16.mxu0 0
        %609 = vmatpush1.bf16.msra.mxu0 0
        %610 = vmatprep.subr.bf16.mxu0 0
        %611 = vmatpush1.bf16.msra.mxu0 0
        %612 = vmatprep.subr.bf16.mxu0 0
        %613 = vmatpush1.bf16.msra.mxu0 0
        %614 = vmatprep.subr.bf16.mxu0 0
        %615 = vmatpush1.bf16.msra.mxu0 0
        %616 = vmatprep.subr.bf16.mxu0 0
        %617 = vmatpush1.bf16.msra.mxu0 0
        %618 = vmatprep.subr.bf16.mxu0 0
        %619 = vmatpush1.bf16.msra.mxu0 0
        %620 = vmatprep.subr.bf16.mxu0 0
        %621 = vmatpush1.bf16.msra.mxu0 0
        %622 = vmatprep.subr.bf16.mxu0 0
        %623 = vmatpush1.bf16.msra.mxu0 0
        %624 = vmatprep.subr.bf16.mxu0 0
        %625 = vmatpush1.bf16.msra.mxu0 0
        %626 = vmatprep.mubr.bf16.mxu0 0
        %627 = vmatmul.mubr.bf16.gmra.mrb[0].mxu0 %v540
        %v628 = vpop.f32.mrb[0].mxu0
        %v629 = vadd.f32 %v513, %v628
        %v630 = vpop.f32.mrb[0].mxu0
        %v631 = vpop.f32.mrb[0].mxu0
        %v632 = vpop.f32.mrb[0].mxu0
        %633 = vdwg.mxu0
        %v638 = vunpack.c.l.b16 %v445
        %v639 = vunpack.c.l.b16 %v446
        %v640 = vunpack.c.l.b16 %v447
        %v641 = vunpack.c.l.b16 %v448
        %v642 = vpack.c.b16 %v639, %v638
        %v643 = vpack.c.b16 %v641, %v640
        %646 = vmatprep.subr.bf16.mxu0 0
        %647 = vmatpush1.bf16.msra.mxu0 %v642
        %648 = vmatprep.subr.bf16.mxu0 0
        %649 = vmatpush1.bf16.msra.mxu0 %v643
        %650 = vmatprep.subr.bf16.mxu0 0
        %651 = vmatpush1.bf16.msra.mxu0 0
        %652 = vmatprep.subr.bf16.mxu0 0
        %653 = vmatpush1.bf16.msra.mxu0 0
        %654 = vmatprep.subr.bf16.mxu0 0
        %655 = vmatpush1.bf16.msra.mxu0 0
        %656 = vmatprep.subr.bf16.mxu0 0
        %657 = vmatpush1.bf16.msra.mxu0 0
        %658 = vmatprep.subr.bf16.mxu0 0
        %659 = vmatpush1.bf16.msra.mxu0 0
        %660 = vmatprep.subr.bf16.mxu0 0
        %661 = vmatpush1.bf16.msra.mxu0 0
        %662 = vmatprep.subr.bf16.mxu0 0
        %663 = vmatpush1.bf16.msra.mxu0 0
        %664 = vmatprep.subr.bf16.mxu0 0
        %665 = vmatpush1.bf16.msra.mxu0 0
        %666 = vmatprep.subr.bf16.mxu0 0
        %667 = vmatpush1.bf16.msra.mxu0 0
        %668 = vmatprep.subr.bf16.mxu0 0
        %669 = vmatpush1.bf16.msra.mxu0 0
        %670 = vmatprep.subr.bf16.mxu0 0
        %671 = vmatpush1.bf16.msra.mxu0 0
        %672 = vmatprep.subr.bf16.mxu0 0
        %673 = vmatpush1.bf16.msra.mxu0 0
        %674 = vmatprep.subr.bf16.mxu0 0
        %675 = vmatpush1.bf16.msra.mxu0 0
        %676 = vmatprep.subr.bf16.mxu0 0
        %677 = vmatpush1.bf16.msra.mxu0 0
        %678 = vmatprep.mubr.bf16.mxu0 0
        %679 = vmatmul.mubr.bf16.gmra.mrb[0].mxu0 %v540
        %v680 = vpop.f32.mrb[0].mxu0
        %v681 = vadd.f32 %v517, %v680
        %v682 = vpop.f32.mrb[0].mxu0
        %v683 = vpop.f32.mrb[0].mxu0
        %v684 = vpop.f32.mrb[0].mxu0
        %685 = vdwg.mxu0
        %v690 = vunpack.c.l.b16 %v449
        %v691 = vunpack.c.l.b16 %v450
        %v692 = vunpack.c.l.b16 %v451
        %v693 = vunpack.c.l.b16 %v452
        %v694 = vpack.c.b16 %v691, %v690
        %v695 = vpack.c.b16 %v693, %v692
        %698 = vmatprep.subr.bf16.mxu0 0
        %699 = vmatpush1.bf16.msra.mxu0 %v694
        %700 = vmatprep.subr.bf16.mxu0 0
        %701 = vmatpush1.bf16.msra.mxu0 %v695
        %702 = vmatprep.subr.bf16.mxu0 0
        %703 = vmatpush1.bf16.msra.mxu0 0
        %704 = vmatprep.subr.bf16.mxu0 0
        %705 = vmatpush1.bf16.msra.mxu0 0
        %706 = vmatprep.subr.bf16.mxu0 0
        %707 = vmatpush1.bf16.msra.mxu0 0
        %708 = vmatprep.subr.bf16.mxu0 0
        %709 = vmatpush1.bf16.msra.mxu0 0
        %710 = vmatprep.subr.bf16.mxu0 0
        %711 = vmatpush1.bf16.msra.mxu0 0
        %712 = vmatprep.subr.bf16.mxu0 0
        %713 = vmatpush1.bf16.msra.mxu0 0
        %714 = vmatprep.subr.bf16.mxu0 0
        %715 = vmatpush1.bf16.msra.mxu0 0
        %716 = vmatprep.subr.bf16.mxu0 0
        %717 = vmatpush1.bf16.msra.mxu0 0
        %718 = vmatprep.subr.bf16.mxu0 0
        %719 = vmatpush1.bf16.msra.mxu0 0
        %720 = vmatprep.subr.bf16.mxu0 0
        %721 = vmatpush1.bf16.msra.mxu0 0
        %722 = vmatprep.subr.bf16.mxu0 0
        %723 = vmatpush1.bf16.msra.mxu0 0
        %724 = vmatprep.subr.bf16.mxu0 0
        %725 = vmatpush1.bf16.msra.mxu0 0
        %726 = vmatprep.subr.bf16.mxu0 0
        %727 = vmatpush1.bf16.msra.mxu0 0
        %728 = vmatprep.subr.bf16.mxu0 0
        %729 = vmatpush1.bf16.msra.mxu0 0
        %730 = vmatprep.mubr.bf16.mxu0 0
        %731 = vmatmul.mubr.bf16.gmra.mrb[0].mxu0 %v540
        %v732 = vpop.f32.mrb[0].mxu0
        %v733 = vadd.f32 %v521, %v732
        %v734 = vpop.f32.mrb[0].mxu0
        %v735 = vpop.f32.mrb[0].mxu0
        %v736 = vpop.f32.mrb[0].mxu0
        %737 = vdwg.mxu0
        %v742 = vlaneseq
        %v743 = vshrl.u32 %v742, 7
        %v744 = vsub.s32 0, %v743
        %v745 = vrot.slane %v489, %v744
        %v746 = vlaneseq
        %v747 = vshrl.u32 %v746, 7
        %v748 = vsub.s32 0, %v747
        %v749 = vrot.slane %v490, %v748
        %v750 = vlaneseq
        %v751 = vshrl.u32 %v750, 7
        %v752 = vsub.s32 0, %v751
        %v753 = vrot.slane %v491, %v752
        %v754 = vlaneseq
        %v755 = vshrl.u32 %v754, 7
        %v756 = vsub.s32 0, %v755
        %v757 = vrot.slane %v492, %v756
        %v766 = vunpack.c.l.b16 %v453
        %v767 = vunpack.c.l.b16 %v454
        %v768 = vunpack.c.l.b16 %v455
        %v769 = vunpack.c.l.b16 %v456
        %v770 = vpack.c.b16 %v767, %v766
        %v771 = vpack.c.b16 %v769, %v768
        %774 = vmatprep.subr.bf16.mxu0 0
        %775 = vmatpush1.bf16.msra.mxu0 %v770
        %776 = vmatprep.subr.bf16.mxu0 0
        %777 = vmatpush1.bf16.msra.mxu0 %v771
        %778 = vmatprep.subr.bf16.mxu0 0
        %779 = vmatpush1.bf16.msra.mxu0 0
        %780 = vmatprep.subr.bf16.mxu0 0
        %781 = vmatpush1.bf16.msra.mxu0 0
        %782 = vmatprep.subr.bf16.mxu0 0
        %783 = vmatpush1.bf16.msra.mxu0 0
        %784 = vmatprep.subr.bf16.mxu0 0
        %785 = vmatpush1.bf16.msra.mxu0 0
        %786 = vmatprep.subr.bf16.mxu0 0
        %787 = vmatpush1.bf16.msra.mxu0 0
        %788 = vmatprep.subr.bf16.mxu0 0
        %789 = vmatpush1.bf16.msra.mxu0 0
        %790 = vmatprep.subr.bf16.mxu0 0
        %791 = vmatpush1.bf16.msra.mxu0 0
        %792 = vmatprep.subr.bf16.mxu0 0
        %793 = vmatpush1.bf16.msra.mxu0 0
        %794 = vmatprep.subr.bf16.mxu0 0
        %795 = vmatpush1.bf16.msra.mxu0 0
        %796 = vmatprep.subr.bf16.mxu0 0
        %797 = vmatpush1.bf16.msra.mxu0 0
        %798 = vmatprep.subr.bf16.mxu0 0
        %799 = vmatpush1.bf16.msra.mxu0 0
        %800 = vmatprep.subr.bf16.mxu0 0
        %801 = vmatpush1.bf16.msra.mxu0 0
        %802 = vmatprep.subr.bf16.mxu0 0
        %803 = vmatpush1.bf16.msra.mxu0 0
        %804 = vmatprep.subr.bf16.mxu0 0
        %805 = vmatpush1.bf16.msra.mxu0 0
        %806 = vmatprep.mubr.bf16.mxu0 0
        %807 = vmatmul.mubr.bf16.gmra.mrb[0].mxu0 %v540
        %v808 = vpop.f32.mrb[0].mxu0
        %v809 = vadd.f32 %v745, %v808
        %v810 = vpop.f32.mrb[0].mxu0
        %v811 = vpop.f32.mrb[0].mxu0
        %v812 = vpop.f32.mrb[0].mxu0
        %813 = vdwg.mxu0
        %v818 = vunpack.c.l.b16 %v457
        %v819 = vunpack.c.l.b16 %v458
        %v820 = vunpack.c.l.b16 %v459
        %v821 = vunpack.c.l.b16 %v460
        %v822 = vpack.c.b16 %v819, %v818
        %v823 = vpack.c.b16 %v821, %v820
        %826 = vmatprep.subr.bf16.mxu0 0
        %827 = vmatpush1.bf16.msra.mxu0 %v822
        %828 = vmatprep.subr.bf16.mxu0 0
        %829 = vmatpush1.bf16.msra.mxu0 %v823
        %830 = vmatprep.subr.bf16.mxu0 0
        %831 = vmatpush1.bf16.msra.mxu0 0
        %832 = vmatprep.subr.bf16.mxu0 0
        %833 = vmatpush1.bf16.msra.mxu0 0
        %834 = vmatprep.subr.bf16.mxu0 0
        %835 = vmatpush1.bf16.msra.mxu0 0
        %836 = vmatprep.subr.bf16.mxu0 0
        %837 = vmatpush1.bf16.msra.mxu0 0
        %838 = vmatprep.subr.bf16.mxu0 0
        %839 = vmatpush1.bf16.msra.mxu0 0
        %840 = vmatprep.subr.bf16.mxu0 0
        %841 = vmatpush1.bf16.msra.mxu0 0
        %842 = vmatprep.subr.bf16.mxu0 0
        %843 = vmatpush1.bf16.msra.mxu0 0
        %844 = vmatprep.subr.bf16.mxu0 0
        %845 = vmatpush1.bf16.msra.mxu0 0
        %846 = vmatprep.subr.bf16.mxu0 0
        %847 = vmatpush1.bf16.msra.mxu0 0
        %848 = vmatprep.subr.bf16.mxu0 0
        %849 = vmatpush1.bf16.msra.mxu0 0
        %850 = vmatprep.subr.bf16.mxu0 0
        %851 = vmatpush1.bf16.msra.mxu0 0
        %852 = vmatprep.subr.bf16.mxu0 0
        %853 = vmatpush1.bf16.msra.mxu0 0
        %854 = vmatprep.subr.bf16.mxu0 0
        %855 = vmatpush1.bf16.msra.mxu0 0
        %856 = vmatprep.subr.bf16.mxu0 0
        %857 = vmatpush1.bf16.msra.mxu0 0
        %858 = vmatprep.mubr.bf16.mxu0 0
        %859 = vmatmul.mubr.bf16.gmra.mrb[0].mxu0 %v540
        %v860 = vpop.f32.mrb[0].mxu0
        %v861 = vadd.f32 %v749, %v860
        %v862 = vpop.f32.mrb[0].mxu0
        %v863 = vpop.f32.mrb[0].mxu0
        %v864 = vpop.f32.mrb[0].mxu0
        %865 = vdwg.mxu0
        %v870 = vunpack.c.l.b16 %v461
        %v871 = vunpack.c.l.b16 %v462
        %v872 = vunpack.c.l.b16 %v463
        %v873 = vunpack.c.l.b16 %v464
        %v874 = vpack.c.b16 %v871, %v870
        %v875 = vpack.c.b16 %v873, %v872
        %878 = vmatprep.subr.bf16.mxu0 0
        %879 = vmatpush1.bf16.msra.mxu0 %v874
        %880 = vmatprep.subr.bf16.mxu0 0
        %881 = vmatpush1.bf16.msra.mxu0 %v875
        %882 = vmatprep.subr.bf16.mxu0 0
        %883 = vmatpush1.bf16.msra.mxu0 0
        %884 = vmatprep.subr.bf16.mxu0 0
        %885 = vmatpush1.bf16.msra.mxu0 0
        %886 = vmatprep.subr.bf16.mxu0 0
        %887 = vmatpush1.bf16.msra.mxu0 0
        %888 = vmatprep.subr.bf16.mxu0 0
        %889 = vmatpush1.bf16.msra.mxu0 0
        %890 = vmatprep.subr.bf16.mxu0 0
        %891 = vmatpush1.bf16.msra.mxu0 0
        %892 = vmatprep.subr.bf16.mxu0 0
        %893 = vmatpush1.bf16.msra.mxu0 0
        %894 = vmatprep.subr.bf16.mxu0 0
        %895 = vmatpush1.bf16.msra.mxu0 0
        %896 = vmatprep.subr.bf16.mxu0 0
        %897 = vmatpush1.bf16.msra.mxu0 0
        %898 = vmatprep.subr.bf16.mxu0 0
        %899 = vmatpush1.bf16.msra.mxu0 0
        %900 = vmatprep.subr.bf16.mxu0 0
        %901 = vmatpush1.bf16.msra.mxu0 0
        %902 = vmatprep.subr.bf16.mxu0 0
        %903 = vmatpush1.bf16.msra.mxu0 0
        %904 = vmatprep.subr.bf16.mxu0 0
        %905 = vmatpush1.bf16.msra.mxu0 0
        %906 = vmatprep.subr.bf16.mxu0 0
        %907 = vmatpush1.bf16.msra.mxu0 0
        %908 = vmatprep.subr.bf16.mxu0 0
        %909 = vmatpush1.bf16.msra.mxu0 0
        %910 = vmatprep.mubr.bf16.mxu0 0
        %911 = vmatmul.mubr.bf16.gmra.mrb[0].mxu0 %v540
        %v912 = vpop.f32.mrb[0].mxu0
        %v913 = vadd.f32 %v753, %v912
        %v914 = vpop.f32.mrb[0].mxu0
        %v915 = vpop.f32.mrb[0].mxu0
        %v916 = vpop.f32.mrb[0].mxu0
        %917 = vdwg.mxu0
        %v922 = vunpack.c.l.b16 %v465
        %v923 = vunpack.c.l.b16 %v466
        %v924 = vunpack.c.l.b16 %v467
        %v925 = vunpack.c.l.b16 %v468
        %v926 = vpack.c.b16 %v923, %v922
        %v927 = vpack.c.b16 %v925, %v924
        %930 = vmatprep.subr.bf16.mxu0 0
        %931 = vmatpush1.bf16.msra.mxu0 %v926
        %932 = vmatprep.subr.bf16.mxu0 0
        %933 = vmatpush1.bf16.msra.mxu0 %v927
        %934 = vmatprep.subr.bf16.mxu0 0
        %935 = vmatpush1.bf16.msra.mxu0 0
        %936 = vmatprep.subr.bf16.mxu0 0
        %937 = vmatpush1.bf16.msra.mxu0 0
        %938 = vmatprep.subr.bf16.mxu0 0
        %939 = vmatpush1.bf16.msra.mxu0 0
        %940 = vmatprep.subr.bf16.mxu0 0
        %941 = vmatpush1.bf16.msra.mxu0 0
        %942 = vmatprep.subr.bf16.mxu0 0
        %943 = vmatpush1.bf16.msra.mxu0 0
        %944 = vmatprep.subr.bf16.mxu0 0
        %945 = vmatpush1.bf16.msra.mxu0 0
        %946 = vmatprep.subr.bf16.mxu0 0
        %947 = vmatpush1.bf16.msra.mxu0 0
        %948 = vmatprep.subr.bf16.mxu0 0
        %949 = vmatpush1.bf16.msra.mxu0 0
        %950 = vmatprep.subr.bf16.mxu0 0
        %951 = vmatpush1.bf16.msra.mxu0 0
        %952 = vmatprep.subr.bf16.mxu0 0
        %953 = vmatpush1.bf16.msra.mxu0 0
        %954 = vmatprep.subr.bf16.mxu0 0
        %955 = vmatpush1.bf16.msra.mxu0 0
        %956 = vmatprep.subr.bf16.mxu0 0
        %957 = vmatpush1.bf16.msra.mxu0 0
        %958 = vmatprep.subr.bf16.mxu0 0
        %959 = vmatpush1.bf16.msra.mxu0 0
        %960 = vmatprep.subr.bf16.mxu0 0
        %961 = vmatpush1.bf16.msra.mxu0 0
        %962 = vmatprep.mubr.bf16.mxu0 0
        %963 = vmatmul.mubr.bf16.gmra.mrb[0].mxu0 %v540
        %v964 = vpop.f32.mrb[0].mxu0
        %v965 = vadd.f32 %v757, %v964
        %v966 = vpop.f32.mrb[0].mxu0
        %v967 = vpop.f32.mrb[0].mxu0
        %v968 = vpop.f32.mrb[0].mxu0
        %969 = vdwg.mxu0
        %v974 = vlaneseq
        %v975 = vshrl.u32 %v974, 7
        %v976 = vsub.s32 0, %v975
        %v977 = vrot.slane %v493, %v976
        %v978 = vlaneseq
        %v979 = vshrl.u32 %v978, 7
        %v980 = vsub.s32 0, %v979
        %v981 = vrot.slane %v494, %v980
        %v982 = vlaneseq
        %v983 = vshrl.u32 %v982, 7
        %v984 = vsub.s32 0, %v983
        %v985 = vrot.slane %v495, %v984
        %v986 = vlaneseq
        %v987 = vshrl.u32 %v986, 7
        %v988 = vsub.s32 0, %v987
        %v989 = vrot.slane %v496, %v988
        %v998 = vunpack.c.l.b16 %v469
        %v999 = vunpack.c.l.b16 %v470
        %v1000 = vunpack.c.l.b16 %v471
        %v1001 = vunpack.c.l.b16 %v472
        %v1002 = vpack.c.b16 %v999, %v998
        %v1003 = vpack.c.b16 %v1001, %v1000
        %1006 = vmatprep.subr.bf16.mxu0 0
        %1007 = vmatpush1.bf16.msra.mxu0 %v1002
        %1008 = vmatprep.subr.bf16.mxu0 0
        %1009 = vmatpush1.bf16.msra.mxu0 %v1003
        %1010 = vmatprep.subr.bf16.mxu0 0
        %1011 = vmatpush1.bf16.msra.mxu0 0
        %1012 = vmatprep.subr.bf16.mxu0 0
        %1013 = vmatpush1.bf16.msra.mxu0 0
        %1014 = vmatprep.subr.bf16.mxu0 0
        %1015 = vmatpush1.bf16.msra.mxu0 0
        %1016 = vmatprep.subr.bf16.mxu0 0
        %1017 = vmatpush1.bf16.msra.mxu0 0
        %1018 = vmatprep.subr.bf16.mxu0 0
        %1019 = vmatpush1.bf16.msra.mxu0 0
        %1020 = vmatprep.subr.bf16.mxu0 0
        %1021 = vmatpush1.bf16.msra.mxu0 0
        %1022 = vmatprep.subr.bf16.mxu0 0
        %1023 = vmatpush1.bf16.msra.mxu0 0
        %1024 = vmatprep.subr.bf16.mxu0 0
        %1025 = vmatpush1.bf16.msra.mxu0 0
        %1026 = vmatprep.subr.bf16.mxu0 0
        %1027 = vmatpush1.bf16.msra.mxu0 0
        %1028 = vmatprep.subr.bf16.mxu0 0
        %1029 = vmatpush1.bf16.msra.mxu0 0
        %1030 = vmatprep.subr.bf16.mxu0 0
        %1031 = vmatpush1.bf16.msra.mxu0 0
        %1032 = vmatprep.subr.bf16.mxu0 0
        %1033 = vmatpush1.bf16.msra.mxu0 0
        %1034 = vmatprep.subr.bf16.mxu0 0
        %1035 = vmatpush1.bf16.msra.mxu0 0
        %1036 = vmatprep.subr.bf16.mxu0 0
        %1037 = vmatpush1.bf16.msra.mxu0 0
        %1038 = vmatprep.mubr.bf16.mxu0 0
        %1039 = vmatmul.mubr.bf16.gmra.mrb[0].mxu0 %v540
        %v1040 = vpop.f32.mrb[0].mxu0
        %v1041 = vadd.f32 %v977, %v1040
        %v1042 = vpop.f32.mrb[0].mxu0
        %v1043 = vpop.f32.mrb[0].mxu0
        %v1044 = vpop.f32.mrb[0].mxu0
        %1045 = vdwg.mxu0
        %v1050 = vunpack.c.l.b16 %v473
        %v1051 = vunpack.c.l.b16 %v474
        %v1052 = vunpack.c.l.b16 %v475
        %v1053 = vunpack.c.l.b16 %v476
        %v1054 = vpack.c.b16 %v1051, %v1050
        %v1055 = vpack.c.b16 %v1053, %v1052
        %1058 = vmatprep.subr.bf16.mxu0 0
        %1059 = vmatpush1.bf16.msra.mxu0 %v1054
        %1060 = vmatprep.subr.bf16.mxu0 0
        %1061 = vmatpush1.bf16.msra.mxu0 %v1055
        %1062 = vmatprep.subr.bf16.mxu0 0
        %1063 = vmatpush1.bf16.msra.mxu0 0
        %1064 = vmatprep.subr.bf16.mxu0 0
        %1065 = vmatpush1.bf16.msra.mxu0 0
        %1066 = vmatprep.subr.bf16.mxu0 0
        %1067 = vmatpush1.bf16.msra.mxu0 0
        %1068 = vmatprep.subr.bf16.mxu0 0
        %1069 = vmatpush1.bf16.msra.mxu0 0
        %1070 = vmatprep.subr.bf16.mxu0 0
        %1071 = vmatpush1.bf16.msra.mxu0 0
        %1072 = vmatprep.subr.bf16.mxu0 0
        %1073 = vmatpush1.bf16.msra.mxu0 0
        %1074 = vmatprep.subr.bf16.mxu0 0
        %1075 = vmatpush1.bf16.msra.mxu0 0
        %1076 = vmatprep.subr.bf16.mxu0 0
        %1077 = vmatpush1.bf16.msra.mxu0 0
        %1078 = vmatprep.subr.bf16.mxu0 0
        %1079 = vmatpush1.bf16.msra.mxu0 0
        %1080 = vmatprep.subr.bf16.mxu0 0
        %1081 = vmatpush1.bf16.msra.mxu0 0
        %1082 = vmatprep.subr.bf16.mxu0 0
        %1083 = vmatpush1.bf16.msra.mxu0 0
        %1084 = vmatprep.subr.bf16.mxu0 0
        %1085 = vmatpush1.bf16.msra.mxu0 0
        %1086 = vmatprep.subr.bf16.mxu0 0
        %1087 = vmatpush1.bf16.msra.mxu0 0
        %1088 = vmatprep.subr.bf16.mxu0 0
        %1089 = vmatpush1.bf16.msra.mxu0 0
        %1090 = vmatprep.mubr.bf16.mxu0 0
        %1091 = vmatmul.mubr.bf16.gmra.mrb[0].mxu0 %v540
        %v1092 = vpop.f32.mrb[0].mxu0
        %v1093 = vadd.f32 %v981, %v1092
        %v1094 = vpop.f32.mrb[0].mxu0
        %v1095 = vpop.f32.mrb[0].mxu0
        %v1096 = vpop.f32.mrb[0].mxu0
        %1097 = vdwg.mxu0
        %v1102 = vunpack.c.l.b16 %v477
        %v1103 = vunpack.c.l.b16 %v478
        %v1104 = vunpack.c.l.b16 %v479
        %v1105 = vunpack.c.l.b16 %v480
        %v1106 = vpack.c.b16 %v1103, %v1102
        %v1107 = vpack.c.b16 %v1105, %v1104
        %1110 = vmatprep.subr.bf16.mxu0 0
        %1111 = vmatpush1.bf16.msra.mxu0 %v1106
        %1112 = vmatprep.subr.bf16.mxu0 0
        %1113 = vmatpush1.bf16.msra.mxu0 %v1107
        %1114 = vmatprep.subr.bf16.mxu0 0
        %1115 = vmatpush1.bf16.msra.mxu0 0
        %1116 = vmatprep.subr.bf16.mxu0 0
        %1117 = vmatpush1.bf16.msra.mxu0 0
        %1118 = vmatprep.subr.bf16.mxu0 0
        %1119 = vmatpush1.bf16.msra.mxu0 0
        %1120 = vmatprep.subr.bf16.mxu0 0
        %1121 = vmatpush1.bf16.msra.mxu0 0
        %1122 = vmatprep.subr.bf16.mxu0 0
        %1123 = vmatpush1.bf16.msra.mxu0 0
        %1124 = vmatprep.subr.bf16.mxu0 0
        %1125 = vmatpush1.bf16.msra.mxu0 0
        %1126 = vmatprep.subr.bf16.mxu0 0
        %1127 = vmatpush1.bf16.msra.mxu0 0
        %1128 = vmatprep.subr.bf16.mxu0 0
        %1129 = vmatpush1.bf16.msra.mxu0 0
        %1130 = vmatprep.subr.bf16.mxu0 0
        %1131 = vmatpush1.bf16.msra.mxu0 0
        %1132 = vmatprep.subr.bf16.mxu0 0
        %1133 = vmatpush1.bf16.msra.mxu0 0
        %1134 = vmatprep.subr.bf16.mxu0 0
        %1135 = vmatpush1.bf16.msra.mxu0 0
        %1136 = vmatprep.subr.bf16.mxu0 0
        %1137 = vmatpush1.bf16.msra.mxu0 0
        %1138 = vmatprep.subr.bf16.mxu0 0
        %1139 = vmatpush1.bf16.msra.mxu0 0
        %1140 = vmatprep.subr.bf16.mxu0 0
        %1141 = vmatpush1.bf16.msra.mxu0 0
        %1142 = vmatprep.mubr.bf16.mxu0 0
        %1143 = vmatmul.mubr.bf16.gmra.mrb[0].mxu0 %v540
        %v1144 = vpop.f32.mrb[0].mxu0
        %v1145 = vadd.f32 %v985, %v1144
        %v1146 = vpop.f32.mrb[0].mxu0
        %v1147 = vpop.f32.mrb[0].mxu0
        %v1148 = vpop.f32.mrb[0].mxu0
        %1149 = vdwg.mxu0
        %v1154 = vunpack.c.l.b16 %v481
        %v1155 = vunpack.c.l.b16 %v482
        %v1156 = vunpack.c.l.b16 %v483
        %v1157 = vunpack.c.l.b16 %v484
        %v1158 = vpack.c.b16 %v1155, %v1154
        %v1159 = vpack.c.b16 %v1157, %v1156
        %1162 = vmatprep.subr.bf16.mxu0 0
        %1163 = vmatpush1.bf16.msra.mxu0 %v1158
        %1164 = vmatprep.subr.bf16.mxu0 0
        %1165 = vmatpush1.bf16.msra.mxu0 %v1159
        %1166 = vmatprep.subr.bf16.mxu0 0
        %1167 = vmatpush1.bf16.msra.mxu0 0
        %1168 = vmatprep.subr.bf16.mxu0 0
        %1169 = vmatpush1.bf16.msra.mxu0 0
        %1170 = vmatprep.subr.bf16.mxu0 0
        %1171 = vmatpush1.bf16.msra.mxu0 0
        %1172 = vmatprep.subr.bf16.mxu0 0
        %1173 = vmatpush1.bf16.msra.mxu0 0
        %1174 = vmatprep.subr.bf16.mxu0 0
        %1175 = vmatpush1.bf16.msra.mxu0 0
        %1176 = vmatprep.subr.bf16.mxu0 0
        %1177 = vmatpush1.bf16.msra.mxu0 0
        %1178 = vmatprep.subr.bf16.mxu0 0
        %1179 = vmatpush1.bf16.msra.mxu0 0
        %1180 = vmatprep.subr.bf16.mxu0 0
        %1181 = vmatpush1.bf16.msra.mxu0 0
        %1182 = vmatprep.subr.bf16.mxu0 0
        %1183 = vmatpush1.bf16.msra.mxu0 0
        %1184 = vmatprep.subr.bf16.mxu0 0
        %1185 = vmatpush1.bf16.msra.mxu0 0
        %1186 = vmatprep.subr.bf16.mxu0 0
        %1187 = vmatpush1.bf16.msra.mxu0 0
        %1188 = vmatprep.subr.bf16.mxu0 0
        %1189 = vmatpush1.bf16.msra.mxu0 0
        %1190 = vmatprep.subr.bf16.mxu0 0
        %1191 = vmatpush1.bf16.msra.mxu0 0
        %1192 = vmatprep.subr.bf16.mxu0 0
        %1193 = vmatpush1.bf16.msra.mxu0 0
        %1194 = vmatprep.mubr.bf16.mxu0 0
        %1195 = vmatmul.mubr.bf16.gmra.mrb[0].mxu0 %v540
        %v1196 = vpop.f32.mrb[0].mxu0
        %v1197 = vadd.f32 %v989, %v1196
        %v1198 = vpop.f32.mrb[0].mxu0
        %v1199 = vpop.f32.mrb[0].mxu0
        %v1200 = vpop.f32.mrb[0].mxu0
        %1201 = vdwg.mxu0
        %v1202 = vpack.c.bf16 %v577, %v577
        %v1203 = vpack.c.bf16 %v629, %v629
        %v1204 = vpack.c.bf16 %v681, %v681
        %v1205 = vpack.c.bf16 %v733, %v733
        %v1206 = vpack.c.bf16 %v809, %v809
        %v1207 = vpack.c.bf16 %v861, %v861
        %v1208 = vpack.c.bf16 %v913, %v913
        %v1209 = vpack.c.bf16 %v965, %v965
        %vm1210 = vcmask 64512
        %v1212 = vsel %vm1210, %v1202, 0
        %v1215 = vsel %vm1210, %v1206, 0
        %1217 = vmatprep.subr.bf16.mxu0 0
        %1218 = vmatpush1.bf16.xpose.msra.mxu0 %v1215
        %1219 = vmatprep.subr.bf16.mxu0 0
        %1220 = vmatpush1.bf16.xpose.msra.mxu0 0
        %1221 = vmatprep.subr.bf16.mxu0 0
        %1222 = vmatpush1.bf16.xpose.msra.mxu0 0
        %1223 = vmatprep.subr.bf16.mxu0 0
        %1224 = vmatpush1.bf16.xpose.msra.mxu0 0
        %1225 = vmatprep.subr.bf16.mxu0 0
        %1226 = vmatpush1.bf16.xpose.msra.mxu0 0
        %1227 = vmatprep.subr.bf16.mxu0 0
        %1228 = vmatpush1.bf16.xpose.msra.mxu0 0
        %1229 = vmatprep.subr.bf16.mxu0 0
        %1230 = vmatpush1.bf16.xpose.msra.mxu0 0
        %1231 = vmatprep.subr.bf16.mxu0 0
        %1232 = vmatpush1.bf16.xpose.msra.mxu0 0
        %1233 = vmatprep.subr.bf16.mxu0 0
        %1234 = vmatpush1.bf16.xpose.msra.mxu0 0
        %1235 = vmatprep.subr.bf16.mxu0 0
        %1236 = vmatpush1.bf16.xpose.msra.mxu0 0
        %1237 = vmatprep.subr.bf16.mxu0 0
        %1238 = vmatpush1.bf16.xpose.msra.mxu0 0
        %1239 = vmatprep.subr.bf16.mxu0 0
        %1240 = vmatpush1.bf16.xpose.msra.mxu0 0
        %1241 = vmatprep.subr.bf16.mxu0 0
        %1242 = vmatpush1.bf16.xpose.msra.mxu0 0
        %1243 = vmatprep.subr.bf16.mxu0 0
        %1244 = vmatpush1.bf16.xpose.msra.mxu0 0
        %1245 = vmatprep.subr.bf16.mxu0 0
        %1246 = vmatpush1.bf16.xpose.msra.mxu0 0
        %1247 = vmatprep.subr.bf16.mxu0 0
        %1248 = vmatpush1.bf16.xpose.msra.mxu0 0
        %1249 = vmatprep.mubr.bf16.mxu0 0
        %1250 = vmatmul.mubr.bf16.gmra.mrb[0].mxu0 %v1212
        %v1251 = vpop.f32.mrb[0].mxu0
        %v1252 = vadd.f32 %v436, %v1251
        %v1253 = vpop.f32.mrb[0].mxu0
        %v1254 = vpop.f32.mrb[0].mxu0
        %v1255 = vpop.f32.mrb[0].mxu0
        %1256 = vdwg.mxu0
        %v1258 = vsel %vm1210, %v1203, 0
        %v1261 = vsel %vm1210, %v1207, 0
        %1263 = vmatprep.subr.bf16.mxu0 0
        %1264 = vmatpush1.bf16.xpose.msra.mxu0 %v1261
        %1265 = vmatprep.subr.bf16.mxu0 0
        %1266 = vmatpush1.bf16.xpose.msra.mxu0 0
        %1267 = vmatprep.subr.bf16.mxu0 0
        %1268 = vmatpush1.bf16.xpose.msra.mxu0 0
        %1269 = vmatprep.subr.bf16.mxu0 0
        %1270 = vmatpush1.bf16.xpose.msra.mxu0 0
        %1271 = vmatprep.subr.bf16.mxu0 0
        %1272 = vmatpush1.bf16.xpose.msra.mxu0 0
        %1273 = vmatprep.subr.bf16.mxu0 0
        %1274 = vmatpush1.bf16.xpose.msra.mxu0 0
        %1275 = vmatprep.subr.bf16.mxu0 0
        %1276 = vmatpush1.bf16.xpose.msra.mxu0 0
        %1277 = vmatprep.subr.bf16.mxu0 0
        %1278 = vmatpush1.bf16.xpose.msra.mxu0 0
        %1279 = vmatprep.subr.bf16.mxu0 0
        %1280 = vmatpush1.bf16.xpose.msra.mxu0 0
        %1281 = vmatprep.subr.bf16.mxu0 0
        %1282 = vmatpush1.bf16.xpose.msra.mxu0 0
        %1283 = vmatprep.subr.bf16.mxu0 0
        %1284 = vmatpush1.bf16.xpose.msra.mxu0 0
        %1285 = vmatprep.subr.bf16.mxu0 0
        %1286 = vmatpush1.bf16.xpose.msra.mxu0 0
        %1287 = vmatprep.subr.bf16.mxu0 0
        %1288 = vmatpush1.bf16.xpose.msra.mxu0 0
        %1289 = vmatprep.subr.bf16.mxu0 0
        %1290 = vmatpush1.bf16.xpose.msra.mxu0 0
        %1291 = vmatprep.subr.bf16.mxu0 0
        %1292 = vmatpush1.bf16.xpose.msra.mxu0 0
        %1293 = vmatprep.subr.bf16.mxu0 0
        %1294 = vmatpush1.bf16.xpose.msra.mxu0 0
        %1295 = vmatprep.mubr.bf16.mxu0 0
        %1296 = vmatmul.mubr.bf16.gmra.mrb[0].mxu0 %v1258
        %v1297 = vpop.f32.mrb[0].mxu0
        %v1298 = vadd.f32 %v436, %v1297
        %v1299 = vpop.f32.mrb[0].mxu0
        %v1300 = vpop.f32.mrb[0].mxu0
        %v1301 = vpop.f32.mrb[0].mxu0
        %1302 = vdwg.mxu0
        %v1304 = vsel %vm1210, %v1204, 0
        %v1307 = vsel %vm1210, %v1208, 0
        %1309 = vmatprep.subr.bf16.mxu0 0
        %1310 = vmatpush1.bf16.xpose.msra.mxu0 %v1307
        %1311 = vmatprep.subr.bf16.mxu0 0
        %1312 = vmatpush1.bf16.xpose.msra.mxu0 0
        %1313 = vmatprep.subr.bf16.mxu0 0
        %1314 = vmatpush1.bf16.xpose.msra.mxu0 0
        %1315 = vmatprep.subr.bf16.mxu0 0
        %1316 = vmatpush1.bf16.xpose.msra.mxu0 0
        %1317 = vmatprep.subr.bf16.mxu0 0
        %1318 = vmatpush1.bf16.xpose.msra.mxu0 0
        %1319 = vmatprep.subr.bf16.mxu0 0
        %1320 = vmatpush1.bf16.xpose.msra.mxu0 0
        %1321 = vmatprep.subr.bf16.mxu0 0
        %1322 = vmatpush1.bf16.xpose.msra.mxu0 0
        %1323 = vmatprep.subr.bf16.mxu0 0
        %1324 = vmatpush1.bf16.xpose.msra.mxu0 0
        %1325 = vmatprep.subr.bf16.mxu0 0
        %1326 = vmatpush1.bf16.xpose.msra.mxu0 0
        %1327 = vmatprep.subr.bf16.mxu0 0
        %1328 = vmatpush1.bf16.xpose.msra.mxu0 0
        %1329 = vmatprep.subr.bf16.mxu0 0
        %1330 = vmatpush1.bf16.xpose.msra.mxu0 0
        %1331 = vmatprep.subr.bf16.mxu0 0
        %1332 = vmatpush1.bf16.xpose.msra.mxu0 0
        %1333 = vmatprep.subr.bf16.mxu0 0
        %1334 = vmatpush1.bf16.xpose.msra.mxu0 0
        %1335 = vmatprep.subr.bf16.mxu0 0
        %1336 = vmatpush1.bf16.xpose.msra.mxu0 0
        %1337 = vmatprep.subr.bf16.mxu0 0
        %1338 = vmatpush1.bf16.xpose.msra.mxu0 0
        %1339 = vmatprep.subr.bf16.mxu0 0
        %1340 = vmatpush1.bf16.xpose.msra.mxu0 0
        %1341 = vmatprep.mubr.bf16.mxu0 0
        %1342 = vmatmul.mubr.bf16.gmra.mrb[0].mxu0 %v1304
        %v1343 = vpop.f32.mrb[0].mxu0
        %v1344 = vadd.f32 %v436, %v1343
        %v1345 = vpop.f32.mrb[0].mxu0
        %v1346 = vpop.f32.mrb[0].mxu0
        %v1347 = vpop.f32.mrb[0].mxu0
        %1348 = vdwg.mxu0
        %v1350 = vsel %vm1210, %v1205, 0
        %v1353 = vsel %vm1210, %v1209, 0
        %1355 = vmatprep.subr.bf16.mxu0 0
        %1356 = vmatpush1.bf16.xpose.msra.mxu0 %v1353
        %1357 = vmatprep.subr.bf16.mxu0 0
        %1358 = vmatpush1.bf16.xpose.msra.mxu0 0
        %1359 = vmatprep.subr.bf16.mxu0 0
        %1360 = vmatpush1.bf16.xpose.msra.mxu0 0
        %1361 = vmatprep.subr.bf16.mxu0 0
        %1362 = vmatpush1.bf16.xpose.msra.mxu0 0
        %1363 = vmatprep.subr.bf16.mxu0 0
        %1364 = vmatpush1.bf16.xpose.msra.mxu0 0
        %1365 = vmatprep.subr.bf16.mxu0 0
        %1366 = vmatpush1.bf16.xpose.msra.mxu0 0
        %1367 = vmatprep.subr.bf16.mxu0 0
        %1368 = vmatpush1.bf16.xpose.msra.mxu0 0
        %1369 = vmatprep.subr.bf16.mxu0 0
        %1370 = vmatpush1.bf16.xpose.msra.mxu0 0
        %1371 = vmatprep.subr.bf16.mxu0 0
        %1372 = vmatpush1.bf16.xpose.msra.mxu0 0
        %1373 = vmatprep.subr.bf16.mxu0 0
        %1374 = vmatpush1.bf16.xpose.msra.mxu0 0
        %1375 = vmatprep.subr.bf16.mxu0 0
        %1376 = vmatpush1.bf16.xpose.msra.mxu0 0
        %1377 = vmatprep.subr.bf16.mxu0 0
        %1378 = vmatpush1.bf16.xpose.msra.mxu0 0
        %1379 = vmatprep.subr.bf16.mxu0 0
        %1380 = vmatpush1.bf16.xpose.msra.mxu0 0
        %1381 = vmatprep.subr.bf16.mxu0 0
        %1382 = vmatpush1.bf16.xpose.msra.mxu0 0
        %1383 = vmatprep.subr.bf16.mxu0 0
        %1384 = vmatpush1.bf16.xpose.msra.mxu0 0
        %1385 = vmatprep.subr.bf16.mxu0 0
        %1386 = vmatpush1.bf16.xpose.msra.mxu0 0
        %1387 = vmatprep.mubr.bf16.mxu0 0
        %1388 = vmatmul.mubr.bf16.gmra.mrb[0].mxu0 %v1350
        %v1389 = vpop.f32.mrb[0].mxu0
        %v1390 = vadd.f32 %v436, %v1389
        %v1391 = vpop.f32.mrb[0].mxu0
        %v1392 = vpop.f32.mrb[0].mxu0
        %v1393 = vpop.f32.mrb[0].mxu0
        %1394 = vdwg.mxu0
        %v1395 = vsel %vm1210, %v1252, -inf
        %1396 = vmax.xlane.f32.xlu0 %v1395
        %v1397 = vpop.xlane.xlu0 %1396
        %v1398 = vsel %vm1210, %v1298, -inf
        %1399 = vmax.xlane.f32.xlu0 %v1398
        %v1400 = vpop.xlane.xlu0 %1399
        %v1401 = vsel %vm1210, %v1344, -inf
        %1402 = vmax.xlane.f32.xlu0 %v1401
        %v1403 = vpop.xlane.xlu0 %1402
        %v1404 = vsel %vm1210, %v1390, -inf
        %1405 = vmax.xlane.f32.xlu0 %v1404
        %v1406 = vpop.xlane.xlu0 %1405
        %v1407 = vsub.f32 %v1252, %v1397
        %v1408 = vsub.f32 %v1298, %v1400
        %v1409 = vsub.f32 %v1344, %v1403
        %v1410 = vsub.f32 %v1390, %v1406
        %v1411 = vmul.f32 %v1407, 1.442695
        %v1412 = vpow.pop %v1411
        %v1413 = vmul.f32 %v1408, 1.442695
        %v1414 = vpow.pop %v1413
        %v1415 = vmul.f32 %v1409, 1.442695
        %v1416 = vpow.pop %v1415
        %v1417 = vmul.f32 %v1410, 1.442695
        %v1418 = vpow.pop %v1417
        %v1419 = vsel %vm1210, %v1412, 0.0
        %1420 = vadd.xlane.f32.xlu0 %v1419
        %v1421 = vpop.xlane.xlu0 %1420
        %v1422 = vsel %vm1210, %v1414, 0.0
        %1423 = vadd.xlane.f32.xlu0 %v1422
        %v1424 = vpop.xlane.xlu0 %1423
        %v1425 = vsel %vm1210, %v1416, 0.0
        %1426 = vadd.xlane.f32.xlu0 %v1425
        %v1427 = vpop.xlane.xlu0 %1426
        %v1428 = vsel %vm1210, %v1418, 0.0
        %1429 = vadd.xlane.f32.xlu0 %v1428
        %v1430 = vpop.xlane.xlu0 %1429
        %v1431 = vrcp.pop %v1421
        %v1432 = vrcp.pop %v1424
        %v1433 = vrcp.pop %v1427
        %v1434 = vrcp.pop %v1430
        %v1435 = vmul.f32 %v1412, %v1431
        %v1436 = vmul.f32 %v1414, %v1432
        %v1437 = vmul.f32 %v1416, %v1433
        %v1438 = vmul.f32 %v1418, %v1434
        %v1439 = vpack.c.bf16 %v1435, %v1435
        %v1440 = vpack.c.bf16 %v1436, %v1436
        %v1441 = vpack.c.bf16 %v1437, %v1437
        %v1442 = vpack.c.bf16 %v1438, %v1438
        %v1443 = vpack.c.bf16 %v1041, %v1041
        %v1444 = vpack.c.bf16 %v1093, %v1093
        %v1445 = vpack.c.bf16 %v1145, %v1145
        %v1446 = vpack.c.bf16 %v1197, %v1197
        %v1448 = vsel %vm1210, %v1439, 0
        %vm1450 = vcmask 1043456
        %v1452 = vsel %vm1450, %v1443, 0
        %1454 = vmatprep.subr.bf16.mxu0 0
        %1455 = vmatpush1.bf16.msra.mxu0 %v1452
        %1456 = vmatprep.subr.bf16.mxu0 0
        %1457 = vmatpush1.bf16.msra.mxu0 0
        %1458 = vmatprep.subr.bf16.mxu0 0
        %1459 = vmatpush1.bf16.msra.mxu0 0
        %1460 = vmatprep.subr.bf16.mxu0 0
        %1461 = vmatpush1.bf16.msra.mxu0 0
        %1462 = vmatprep.subr.bf16.mxu0 0
        %1463 = vmatpush1.bf16.msra.mxu0 0
        %1464 = vmatprep.subr.bf16.mxu0 0
        %1465 = vmatpush1.bf16.msra.mxu0 0
        %1466 = vmatprep.subr.bf16.mxu0 0
        %1467 = vmatpush1.bf16.msra.mxu0 0
        %1468 = vmatprep.subr.bf16.mxu0 0
        %1469 = vmatpush1.bf16.msra.mxu0 0
        %1470 = vmatprep.subr.bf16.mxu0 0
        %1471 = vmatpush1.bf16.msra.mxu0 0
        %1472 = vmatprep.subr.bf16.mxu0 0
        %1473 = vmatpush1.bf16.msra.mxu0 0
        %1474 = vmatprep.subr.bf16.mxu0 0
        %1475 = vmatpush1.bf16.msra.mxu0 0
        %1476 = vmatprep.subr.bf16.mxu0 0
        %1477 = vmatpush1.bf16.msra.mxu0 0
        %1478 = vmatprep.subr.bf16.mxu0 0
        %1479 = vmatpush1.bf16.msra.mxu0 0
        %1480 = vmatprep.subr.bf16.mxu0 0
        %1481 = vmatpush1.bf16.msra.mxu0 0
        %1482 = vmatprep.subr.bf16.mxu0 0
        %1483 = vmatpush1.bf16.msra.mxu0 0
        %1484 = vmatprep.subr.bf16.mxu0 0
        %1485 = vmatpush1.bf16.msra.mxu0 0
        %1486 = vmatprep.mubr.bf16.mxu0 0
        %1487 = vmatmul.mubr.bf16.gmra.mrb[0].mxu0 %v1448
        %v1488 = vpop.f32.mrb[0].mxu0
        %v1489 = vadd.f32 0.0, %v1488
        %v1490 = vpop.f32.mrb[0].mxu0
        %v1491 = vpop.f32.mrb[0].mxu0
        %v1492 = vpop.f32.mrb[0].mxu0
        %1493 = vdwg.mxu0
        %v1495 = vsel %vm1210, %v1440, 0
        %v1498 = vsel %vm1450, %v1444, 0
        %1500 = vmatprep.subr.bf16.mxu0 0
        %1501 = vmatpush1.bf16.msra.mxu0 %v1498
        %1502 = vmatprep.subr.bf16.mxu0 0
        %1503 = vmatpush1.bf16.msra.mxu0 0
        %1504 = vmatprep.subr.bf16.mxu0 0
        %1505 = vmatpush1.bf16.msra.mxu0 0
        %1506 = vmatprep.subr.bf16.mxu0 0
        %1507 = vmatpush1.bf16.msra.mxu0 0
        %1508 = vmatprep.subr.bf16.mxu0 0
        %1509 = vmatpush1.bf16.msra.mxu0 0
        %1510 = vmatprep.subr.bf16.mxu0 0
        %1511 = vmatpush1.bf16.msra.mxu0 0
        %1512 = vmatprep.subr.bf16.mxu0 0
        %1513 = vmatpush1.bf16.msra.mxu0 0
        %1514 = vmatprep.subr.bf16.mxu0 0
        %1515 = vmatpush1.bf16.msra.mxu0 0
        %1516 = vmatprep.subr.bf16.mxu0 0
        %1517 = vmatpush1.bf16.msra.mxu0 0
        %1518 = vmatprep.subr.bf16.mxu0 0
        %1519 = vmatpush1.bf16.msra.mxu0 0
        %1520 = vmatprep.subr.bf16.mxu0 0
        %1521 = vmatpush1.bf16.msra.mxu0 0
        %1522 = vmatprep.subr.bf16.mxu0 0
        %1523 = vmatpush1.bf16.msra.mxu0 0
        %1524 = vmatprep.subr.bf16.mxu0 0
        %1525 = vmatpush1.bf16.msra.mxu0 0
        %1526 = vmatprep.subr.bf16.mxu0 0
        %1527 = vmatpush1.bf16.msra.mxu0 0
        %1528 = vmatprep.subr.bf16.mxu0 0
        %1529 = vmatpush1.bf16.msra.mxu0 0
        %1530 = vmatprep.subr.bf16.mxu0 0
        %1531 = vmatpush1.bf16.msra.mxu0 0
        %1532 = vmatprep.mubr.bf16.mxu0 0
        %1533 = vmatmul.mubr.bf16.gmra.mrb[0].mxu0 %v1495
        %v1534 = vpop.f32.mrb[0].mxu0
        %v1535 = vadd.f32 0.0, %v1534
        %v1536 = vpop.f32.mrb[0].mxu0
        %v1537 = vpop.f32.mrb[0].mxu0
        %v1538 = vpop.f32.mrb[0].mxu0
        %1539 = vdwg.mxu0
        %v1541 = vsel %vm1210, %v1441, 0
        %v1544 = vsel %vm1450, %v1445, 0
        %1546 = vmatprep.subr.bf16.mxu0 0
        %1547 = vmatpush1.bf16.msra.mxu0 %v1544
        %1548 = vmatprep.subr.bf16.mxu0 0
        %1549 = vmatpush1.bf16.msra.mxu0 0
        %1550 = vmatprep.subr.bf16.mxu0 0
        %1551 = vmatpush1.bf16.msra.mxu0 0
        %1552 = vmatprep.subr.bf16.mxu0 0
        %1553 = vmatpush1.bf16.msra.mxu0 0
        %1554 = vmatprep.subr.bf16.mxu0 0
        %1555 = vmatpush1.bf16.msra.mxu0 0
        %1556 = vmatprep.subr.bf16.mxu0 0
        %1557 = vmatpush1.bf16.msra.mxu0 0
        %1558 = vmatprep.subr.bf16.mxu0 0
        %1559 = vmatpush1.bf16.msra.mxu0 0
        %1560 = vmatprep.subr.bf16.mxu0 0
        %1561 = vmatpush1.bf16.msra.mxu0 0
        %1562 = vmatprep.subr.bf16.mxu0 0
        %1563 = vmatpush1.bf16.msra.mxu0 0
        %1564 = vmatprep.subr.bf16.mxu0 0
        %1565 = vmatpush1.bf16.msra.mxu0 0
        %1566 = vmatprep.subr.bf16.mxu0 0
        %1567 = vmatpush1.bf16.msra.mxu0 0
        %1568 = vmatprep.subr.bf16.mxu0 0
        %1569 = vmatpush1.bf16.msra.mxu0 0
        %1570 = vmatprep.subr.bf16.mxu0 0
        %1571 = vmatpush1.bf16.msra.mxu0 0
        %1572 = vmatprep.subr.bf16.mxu0 0
        %1573 = vmatpush1.bf16.msra.mxu0 0
        %1574 = vmatprep.subr.bf16.mxu0 0
        %1575 = vmatpush1.bf16.msra.mxu0 0
        %1576 = vmatprep.subr.bf16.mxu0 0
        %1577 = vmatpush1.bf16.msra.mxu0 0
        %1578 = vmatprep.mubr.bf16.mxu0 0
        %1579 = vmatmul.mubr.bf16.gmra.mrb[0].mxu0 %v1541
        %v1580 = vpop.f32.mrb[0].mxu0
        %v1581 = vadd.f32 0.0, %v1580
        %v1582 = vpop.f32.mrb[0].mxu0
        %v1583 = vpop.f32.mrb[0].mxu0
        %v1584 = vpop.f32.mrb[0].mxu0
        %1585 = vdwg.mxu0
        %v1587 = vsel %vm1210, %v1442, 0
        %v1590 = vsel %vm1450, %v1446, 0
        %1592 = vmatprep.subr.bf16.mxu0 0
        %1593 = vmatpush1.bf16.msra.mxu0 %v1590
        %1594 = vmatprep.subr.bf16.mxu0 0
        %1595 = vmatpush1.bf16.msra.mxu0 0
        %1596 = vmatprep.subr.bf16.mxu0 0
        %1597 = vmatpush1.bf16.msra.mxu0 0
        %1598 = vmatprep.subr.bf16.mxu0 0
        %1599 = vmatpush1.bf16.msra.mxu0 0
        %1600 = vmatprep.subr.bf16.mxu0 0
        %1601 = vmatpush1.bf16.msra.mxu0 0
        %1602 = vmatprep.subr.bf16.mxu0 0
        %1603 = vmatpush1.bf16.msra.mxu0 0
        %1604 = vmatprep.subr.bf16.mxu0 0
        %1605 = vmatpush1.bf16.msra.mxu0 0
        %1606 = vmatprep.subr.bf16.mxu0 0
        %1607 = vmatpush1.bf16.msra.mxu0 0
        %1608 = vmatprep.subr.bf16.mxu0 0
        %1609 = vmatpush1.bf16.msra.mxu0 0
        %1610 = vmatprep.subr.bf16.mxu0 0
        %1611 = vmatpush1.bf16.msra.mxu0 0
        %1612 = vmatprep.subr.bf16.mxu0 0
        %1613 = vmatpush1.bf16.msra.mxu0 0
        %1614 = vmatprep.subr.bf16.mxu0 0
        %1615 = vmatpush1.bf16.msra.mxu0 0
        %1616 = vmatprep.subr.bf16.mxu0 0
        %1617 = vmatpush1.bf16.msra.mxu0 0
        %1618 = vmatprep.subr.bf16.mxu0 0
        %1619 = vmatpush1.bf16.msra.mxu0 0
        %1620 = vmatprep.subr.bf16.mxu0 0
        %1621 = vmatpush1.bf16.msra.mxu0 0
        %1622 = vmatprep.subr.bf16.mxu0 0
        %1623 = vmatpush1.bf16.msra.mxu0 0
        %1624 = vmatprep.mubr.bf16.mxu0 0
        %1625 = vmatmul.mubr.bf16.gmra.mrb[0].mxu0 %v1587
        %v1626 = vpop.f32.mrb[0].mxu0
        %v1627 = vadd.f32 0.0, %v1626
        %v1628 = vpop.f32.mrb[0].mxu0
        %v1629 = vpop.f32.mrb[0].mxu0
        %v1630 = vpop.f32.mrb[0].mxu0
        %1631 = vdwg.mxu0
        %v1632 = vpack.c.bf16 %v1489, %v1489
        %v1633 = vpack.c.bf16 %v1535, %v1535
        %v1634 = vpack.c.bf16 %v1581, %v1581
        %v1635 = vpack.c.bf16 %v1627, %v1627
        %v1637 = vsel %vm1210, %v1632, 0
        %v1640 = vsel %vm1450, %v497, 0
        %1642 = vmatprep.subr.bf16.mxu0 0
        %1643 = vmatpush1.bf16.msra.mxu0 %v1640
        %1644 = vmatprep.subr.bf16.mxu0 0
        %1645 = vmatpush1.bf16.msra.mxu0 0
        %1646 = vmatprep.subr.bf16.mxu0 0
        %1647 = vmatpush1.bf16.msra.mxu0 0
        %1648 = vmatprep.subr.bf16.mxu0 0
        %1649 = vmatpush1.bf16.msra.mxu0 0
        %1650 = vmatprep.subr.bf16.mxu0 0
        %1651 = vmatpush1.bf16.msra.mxu0 0
        %1652 = vmatprep.subr.bf16.mxu0 0
        %1653 = vmatpush1.bf16.msra.mxu0 0
        %1654 = vmatprep.subr.bf16.mxu0 0
        %1655 = vmatpush1.bf16.msra.mxu0 0
        %1656 = vmatprep.subr.bf16.mxu0 0
        %1657 = vmatpush1.bf16.msra.mxu0 0
        %1658 = vmatprep.subr.bf16.mxu0 0
        %1659 = vmatpush1.bf16.msra.mxu0 0
        %1660 = vmatprep.subr.bf16.mxu0 0
        %1661 = vmatpush1.bf16.msra.mxu0 0
        %1662 = vmatprep.subr.bf16.mxu0 0
        %1663 = vmatpush1.bf16.msra.mxu0 0
        %1664 = vmatprep.subr.bf16.mxu0 0
        %1665 = vmatpush1.bf16.msra.mxu0 0
        %1666 = vmatprep.subr.bf16.mxu0 0
        %1667 = vmatpush1.bf16.msra.mxu0 0
        %1668 = vmatprep.subr.bf16.mxu0 0
        %1669 = vmatpush1.bf16.msra.mxu0 0
        %1670 = vmatprep.subr.bf16.mxu0 0
        %1671 = vmatpush1.bf16.msra.mxu0 0
        %1672 = vmatprep.subr.bf16.mxu0 0
        %1673 = vmatpush1.bf16.msra.mxu0 0
        %1674 = vmatprep.mubr.bf16.mxu0 0
        %1675 = vmatmul.mubr.bf16.gmra.mrb[0].mxu0 %v1637
        %v1676 = vpop.f32.mrb[0].mxu0
        %v1677 = vadd.f32 0.0, %v1676
        %v1678 = vpop.f32.mrb[0].mxu0
        %v1679 = vpop.f32.mrb[0].mxu0
        %v1680 = vpop.f32.mrb[0].mxu0
        %1681 = vdwg.mxu0
        %v1683 = vsel %vm1210, %v1633, 0
        %v1686 = vsel %vm1450, %v498, 0
        %1688 = vmatprep.subr.bf16.mxu0 0
        %1689 = vmatpush1.bf16.msra.mxu0 %v1686
        %1690 = vmatprep.subr.bf16.mxu0 0
        %1691 = vmatpush1.bf16.msra.mxu0 0
        %1692 = vmatprep.subr.bf16.mxu0 0
        %1693 = vmatpush1.bf16.msra.mxu0 0
        %1694 = vmatprep.subr.bf16.mxu0 0
        %1695 = vmatpush1.bf16.msra.mxu0 0
        %1696 = vmatprep.subr.bf16.mxu0 0
        %1697 = vmatpush1.bf16.msra.mxu0 0
        %1698 = vmatprep.subr.bf16.mxu0 0
        %1699 = vmatpush1.bf16.msra.mxu0 0
        %1700 = vmatprep.subr.bf16.mxu0 0
        %1701 = vmatpush1.bf16.msra.mxu0 0
        %1702 = vmatprep.subr.bf16.mxu0 0
        %1703 = vmatpush1.bf16.msra.mxu0 0
        %1704 = vmatprep.subr.bf16.mxu0 0
        %1705 = vmatpush1.bf16.msra.mxu0 0
        %1706 = vmatprep.subr.bf16.mxu0 0
        %1707 = vmatpush1.bf16.msra.mxu0 0
        %1708 = vmatprep.subr.bf16.mxu0 0
        %1709 = vmatpush1.bf16.msra.mxu0 0
        %1710 = vmatprep.subr.bf16.mxu0 0
        %1711 = vmatpush1.bf16.msra.mxu0 0
        %1712 = vmatprep.subr.bf16.mxu0 0
        %1713 = vmatpush1.bf16.msra.mxu0 0
        %1714 = vmatprep.subr.bf16.mxu0 0
        %1715 = vmatpush1.bf16.msra.mxu0 0
        %1716 = vmatprep.subr.bf16.mxu0 0
        %1717 = vmatpush1.bf16.msra.mxu0 0
        %1718 = vmatprep.subr.bf16.mxu0 0
        %1719 = vmatpush1.bf16.msra.mxu0 0
        %1720 = vmatprep.mubr.bf16.mxu0 0
        %1721 = vmatmul.mubr.bf16.gmra.mrb[0].mxu0 %v1683
        %v1722 = vpop.f32.mrb[0].mxu0
        %v1723 = vadd.f32 0.0, %v1722
        %v1724 = vpop.f32.mrb[0].mxu0
        %v1725 = vpop.f32.mrb[0].mxu0
        %v1726 = vpop.f32.mrb[0].mxu0
        %1727 = vdwg.mxu0
        %v1729 = vsel %vm1210, %v1634, 0
        %v1732 = vsel %vm1450, %v499, 0
        %1734 = vmatprep.subr.bf16.mxu0 0
        %1735 = vmatpush1.bf16.msra.mxu0 %v1732
        %1736 = vmatprep.subr.bf16.mxu0 0
        %1737 = vmatpush1.bf16.msra.mxu0 0
        %1738 = vmatprep.subr.bf16.mxu0 0
        %1739 = vmatpush1.bf16.msra.mxu0 0
        %1740 = vmatprep.subr.bf16.mxu0 0
        %1741 = vmatpush1.bf16.msra.mxu0 0
        %1742 = vmatprep.subr.bf16.mxu0 0
        %1743 = vmatpush1.bf16.msra.mxu0 0
        %1744 = vmatprep.subr.bf16.mxu0 0
        %1745 = vmatpush1.bf16.msra.mxu0 0
        %1746 = vmatprep.subr.bf16.mxu0 0
        %1747 = vmatpush1.bf16.msra.mxu0 0
        %1748 = vmatprep.subr.bf16.mxu0 0
        %1749 = vmatpush1.bf16.msra.mxu0 0
        %1750 = vmatprep.subr.bf16.mxu0 0
        %1751 = vmatpush1.bf16.msra.mxu0 0
        %1752 = vmatprep.subr.bf16.mxu0 0
        %1753 = vmatpush1.bf16.msra.mxu0 0
        %1754 = vmatprep.subr.bf16.mxu0 0
        %1755 = vmatpush1.bf16.msra.mxu0 0
        %1756 = vmatprep.subr.bf16.mxu0 0
        %1757 = vmatpush1.bf16.msra.mxu0 0
        %1758 = vmatprep.subr.bf16.mxu0 0
        %1759 = vmatpush1.bf16.msra.mxu0 0
        %1760 = vmatprep.subr.bf16.mxu0 0
        %1761 = vmatpush1.bf16.msra.mxu0 0
        %1762 = vmatprep.subr.bf16.mxu0 0
        %1763 = vmatpush1.bf16.msra.mxu0 0
        %1764 = vmatprep.subr.bf16.mxu0 0
        %1765 = vmatpush1.bf16.msra.mxu0 0
        %1766 = vmatprep.mubr.bf16.mxu0 0
        %1767 = vmatmul.mubr.bf16.gmra.mrb[0].mxu0 %v1729
        %v1768 = vpop.f32.mrb[0].mxu0
        %v1769 = vadd.f32 0.0, %v1768
        %v1770 = vpop.f32.mrb[0].mxu0
        %v1771 = vpop.f32.mrb[0].mxu0
        %v1772 = vpop.f32.mrb[0].mxu0
        %1773 = vdwg.mxu0
        %v1775 = vsel %vm1210, %v1635, 0
        %v1778 = vsel %vm1450, %v500, 0
        %1780 = vmatprep.subr.bf16.mxu0 0
        %1781 = vmatpush1.bf16.msra.mxu0 %v1778
        %1782 = vmatprep.subr.bf16.mxu0 0
        %1783 = vmatpush1.bf16.msra.mxu0 0
        %1784 = vmatprep.subr.bf16.mxu0 0
        %1785 = vmatpush1.bf16.msra.mxu0 0
        %1786 = vmatprep.subr.bf16.mxu0 0
        %1787 = vmatpush1.bf16.msra.mxu0 0
        %1788 = vmatprep.subr.bf16.mxu0 0
        %1789 = vmatpush1.bf16.msra.mxu0 0
        %1790 = vmatprep.subr.bf16.mxu0 0
        %1791 = vmatpush1.bf16.msra.mxu0 0
        %1792 = vmatprep.subr.bf16.mxu0 0
        %1793 = vmatpush1.bf16.msra.mxu0 0
        %1794 = vmatprep.subr.bf16.mxu0 0
        %1795 = vmatpush1.bf16.msra.mxu0 0
        %1796 = vmatprep.subr.bf16.mxu0 0
        %1797 = vmatpush1.bf16.msra.mxu0 0
        %1798 = vmatprep.subr.bf16.mxu0 0
        %1799 = vmatpush1.bf16.msra.mxu0 0
        %1800 = vmatprep.subr.bf16.mxu0 0
        %1801 = vmatpush1.bf16.msra.mxu0 0
        %1802 = vmatprep.subr.bf16.mxu0 0
        %1803 = vmatpush1.bf16.msra.mxu0 0
        %1804 = vmatprep.subr.bf16.mxu0 0
        %1805 = vmatpush1.bf16.msra.mxu0 0
        %1806 = vmatprep.subr.bf16.mxu0 0
        %1807 = vmatpush1.bf16.msra.mxu0 0
        %1808 = vmatprep.subr.bf16.mxu0 0
        %1809 = vmatpush1.bf16.msra.mxu0 0
        %1810 = vmatprep.subr.bf16.mxu0 0
        %1811 = vmatpush1.bf16.msra.mxu0 0
        %1812 = vmatprep.mubr.bf16.mxu0 0
        %1813 = vmatmul.mubr.bf16.gmra.mrb[0].mxu0 %v1775
        %v1814 = vpop.f32.mrb[0].mxu0
        %v1815 = vadd.f32 0.0, %v1814
        %v1816 = vpop.f32.mrb[0].mxu0
        %v1817 = vpop.f32.mrb[0].mxu0
        %v1818 = vpop.f32.mrb[0].mxu0
        %1819 = vdwg.mxu0
        %v1820 = vsel %vm538, %v1677, 0.0
        %v1821 = vsel %vm538, %v1723, 0.0
        %v1822 = vadd.f32 %v1820, %v1821
        %v1823 = vsel %vm538, %v1769, 0.0
        %v1824 = vadd.f32 %v1822, %v1823
        %v1825 = vsel %vm538, %v1815, 0.0
        %v1826 = vadd.f32 %v1824, %v1825
        %v1827 = vlaneseq
        %v1828 = vshrl.u32 %v1827, 7
        %v1829 = vsub.s32 0, %v1828
        %v1830 = vrot.slane %v429, %v1829
        %v1831 = vadd.f32 %v1826, %v1830
        %v1832 = vadd.f32 %v1831, %v428
        %v1833 = vsel %vm538, %v1832, 0.0
        %1834 = vadd.xlane.f32.xlu0 %v1833
        %v1835 = vpop.xlane.xlu0 %1834
        %v1836 = vrcp.pop 32.0
        %v1837 = vmul.f32 %v1835, %v1836
        %v1838 = vsub.f32 %v1832, %v1837
        %v1839 = vmul.f32 %v1838, %v1838
        %v1840 = vsel %vm538, %v1839, 0.0
        %1841 = vadd.xlane.f32.xlu0 %v1840
        %v1842 = vpop.xlane.xlu0 %1841
        %v1843 = vmul.f32 %v1842, %v1836
        %v1844 = vadd.f32 %v1843, 1e-05
        %v1845 = vrsqrt.pop %v1844
        %v1846 = vmul.f32 %v1838, %v1845
        %v1847 = vlaneseq
        %v1848 = vshrl.u32 %v1847, 7
        %v1849 = vsub.s32 1, %v1848
        %v1850 = vrot.slane %v429, %v1849
        %v1851 = vmul.f32 %v1846, %v1850
        %v1852 = vlaneseq
        %v1853 = vshrl.u32 %v1852, 7
        %v1854 = vsub.s32 2, %v1853
        %v1855 = vrot.slane %v429, %v1854
        %v1856 = vadd.f32 %v1851, %v1855
        %v1857 = vld [vmem:[%s5] sm:$0xf]
        %v1858 = vld [vmem:[%s5 + $0x4] sm:$0xf]
        %v1859 = vld [vmem:[%s5 + $0x8] sm:$0xf]
        %v1860 = vld [vmem:[%s5 + $0xc] sm:$0xf]
        %v1861 = vld [vmem:[%s5 + $0x10] sm:$0xf]
        %v1862 = vld [vmem:[%s5 + $0x14] sm:$0xf]
        %v1863 = vld [vmem:[%s5 + $0x18] sm:$0xf]
        %v1864 = vld [vmem:[%s5 + $0x1c] sm:$0xf]
        %v1865 = vld [vmem:[%s5 + $0x20] sm:$0xf]
        %v1866 = vld [vmem:[%s5 + $0x24] sm:$0xf]
        %v1867 = vld [vmem:[%s5 + $0x28] sm:$0xf]
        %v1868 = vld [vmem:[%s5 + $0x2c] sm:$0xf]
        %v1869 = vld [vmem:[%s5 + $0x30] sm:$0xf]
        %v1870 = vld [vmem:[%s5 + $0x34] sm:$0xf]
        %v1871 = vld [vmem:[%s5 + $0x38] sm:$0xf]
        %v1872 = vld [vmem:[%s5 + $0x3c] sm:$0xf]
        %v1873 = vld [vmem:[%s5 + $0x40] sm:$0xf]
        %v1874 = vld [vmem:[%s5 + $0x44] sm:$0xf]
        %v1875 = vld [vmem:[%s5 + $0x48] sm:$0xf]
        %v1876 = vld [vmem:[%s5 + $0x4c] sm:$0xf]
        %v1877 = vld [vmem:[%s5 + $0x50] sm:$0xf]
        %v1878 = vld [vmem:[%s5 + $0x54] sm:$0xf]
        %v1879 = vld [vmem:[%s5 + $0x58] sm:$0xf]
        %v1880 = vld [vmem:[%s5 + $0x5c] sm:$0xf]
        %v1881 = vld [vmem:[%s5 + $0x60] sm:$0xf]
        %v1882 = vld [vmem:[%s5 + $0x64] sm:$0xf]
        %v1883 = vld [vmem:[%s5 + $0x68] sm:$0xf]
        %v1884 = vld [vmem:[%s5 + $0x6c] sm:$0xf]
        %v1885 = vld [vmem:[%s5 + $0x70] sm:$0xf]
        %v1886 = vld [vmem:[%s5 + $0x74] sm:$0xf]
        %v1887 = vld [vmem:[%s5 + $0x78] sm:$0xf]
        %v1888 = vld [vmem:[%s5 + $0x7c] sm:$0xf]
        %v1889 = vld [vmem:[%s5 + $0x80] sm:$0xf]
        %v1890 = vld [vmem:[%s5 + $0x84] sm:$0xf]
        %v1891 = vld [vmem:[%s5 + $0x88] sm:$0xf]
        %v1892 = vld [vmem:[%s5 + $0x8c] sm:$0xf]
        %v1893 = vld [vmem:[%s5 + $0x90] sm:$0xf]
        %v1894 = vld [vmem:[%s5 + $0x94] sm:$0xf]
        %v1895 = vld [vmem:[%s5 + $0x98] sm:$0xf]
        %v1896 = vld [vmem:[%s5 + $0x9c] sm:$0xf]
        %v1897 = vld [vmem:[%s5 + $0xa0] sm:$0xf]
        %v1898 = vld [vmem:[%s5 + $0xa4] sm:$0xf]
        %v1899 = vld [vmem:[%s5 + $0xa8] sm:$0xf]
        %v1900 = vld [vmem:[%s5 + $0xac] sm:$0xf]
        %v1901 = vld [vmem:[%s5 + $0xb0] sm:$0xf]
        %v1902 = vld [vmem:[%s5 + $0xb4] sm:$0xf]
        %v1903 = vld [vmem:[%s5 + $0xb8] sm:$0xf]
        %v1904 = vld [vmem:[%s5 + $0xbc] sm:$0xf]
        %v1905 = vld [vmem:[%s6] sm:$0x1]
        %v1906 = vld [vmem:[%s6 + $0x1] sm:$0x1]
        %v1907 = vld [vmem:[%s6 + $0x2] sm:$0x1]
        %v1908 = vld [vmem:[%s6 + $0x3] sm:$0x1]
        %v1909 = vld [vmem:[%s6 + $0x4] sm:$0x1]
        %v1910 = vld [vmem:[%s6 + $0x5] sm:$0x1]
        %v1911 = vld [vmem:[%s6 + $0x6] sm:$0x1]
        %v1912 = vld [vmem:[%s6 + $0x7] sm:$0x1]
        %v1913 = vld [vmem:[%s6 + $0x8] sm:$0x1]
        %v1914 = vld [vmem:[%s6 + $0x9] sm:$0x1]
        %v1915 = vld [vmem:[%s6 + $0xa] sm:$0x1]
        %v1916 = vld [vmem:[%s6 + $0xb] sm:$0x1]
        %v1917 = vld [vmem:[%s7] sm:$0xf]
        %v1918 = vld [vmem:[%s7 + $0x4] sm:$0xf]
        %v1919 = vld [vmem:[%s7 + $0x8] sm:$0xf]
        %v1920 = vld [vmem:[%s7 + $0xc] sm:$0xf]
        %v1921 = vpack.c.bf16 %v1856, %v1856
        %v1922 = vpack.c.bf16 %v427, %v427
        %v1927 = vlaneseq
        %v1928 = vshrl.u32 %v1927, 7
        %v1929 = vsub.s32 0, %v1928
        %v1930 = vrot.slane %v1905, %v1929
        %v1931 = vlaneseq
        %v1932 = vshrl.u32 %v1931, 7
        %v1933 = vsub.s32 0, %v1932
        %v1934 = vrot.slane %v1906, %v1933
        %v1935 = vlaneseq
        %v1936 = vshrl.u32 %v1935, 7
        %v1937 = vsub.s32 0, %v1936
        %v1938 = vrot.slane %v1907, %v1937
        %v1939 = vlaneseq
        %v1940 = vshrl.u32 %v1939, 7
        %v1941 = vsub.s32 0, %v1940
        %v1942 = vrot.slane %v1908, %v1941
        %v1951 = vunpack.c.l.b16 %v1857
        %v1952 = vunpack.c.l.b16 %v1858
        %v1953 = vunpack.c.l.b16 %v1859
        %v1954 = vunpack.c.l.b16 %v1860
        %v1955 = vpack.c.b16 %v1952, %v1951
        %v1956 = vpack.c.b16 %v1954, %v1953
        %v1960 = vsel %vm538, %v1921, 0
        %1962 = vmatprep.subr.bf16.mxu0 0
        %1963 = vmatpush1.bf16.msra.mxu0 %v1955
        %1964 = vmatprep.subr.bf16.mxu0 0
        %1965 = vmatpush1.bf16.msra.mxu0 %v1956
        %1966 = vmatprep.subr.bf16.mxu0 0
        %1967 = vmatpush1.bf16.msra.mxu0 0
        %1968 = vmatprep.subr.bf16.mxu0 0
        %1969 = vmatpush1.bf16.msra.mxu0 0
        %1970 = vmatprep.subr.bf16.mxu0 0
        %1971 = vmatpush1.bf16.msra.mxu0 0
        %1972 = vmatprep.subr.bf16.mxu0 0
        %1973 = vmatpush1.bf16.msra.mxu0 0
        %1974 = vmatprep.subr.bf16.mxu0 0
        %1975 = vmatpush1.bf16.msra.mxu0 0
        %1976 = vmatprep.subr.bf16.mxu0 0
        %1977 = vmatpush1.bf16.msra.mxu0 0
        %1978 = vmatprep.subr.bf16.mxu0 0
        %1979 = vmatpush1.bf16.msra.mxu0 0
        %1980 = vmatprep.subr.bf16.mxu0 0
        %1981 = vmatpush1.bf16.msra.mxu0 0
        %1982 = vmatprep.subr.bf16.mxu0 0
        %1983 = vmatpush1.bf16.msra.mxu0 0
        %1984 = vmatprep.subr.bf16.mxu0 0
        %1985 = vmatpush1.bf16.msra.mxu0 0
        %1986 = vmatprep.subr.bf16.mxu0 0
        %1987 = vmatpush1.bf16.msra.mxu0 0
        %1988 = vmatprep.subr.bf16.mxu0 0
        %1989 = vmatpush1.bf16.msra.mxu0 0
        %1990 = vmatprep.subr.bf16.mxu0 0
        %1991 = vmatpush1.bf16.msra.mxu0 0
        %1992 = vmatprep.subr.bf16.mxu0 0
        %1993 = vmatpush1.bf16.msra.mxu0 0
        %1994 = vmatprep.mubr.bf16.mxu0 0
        %1995 = vmatmul.mubr.bf16.gmra.mrb[0].mxu0 %v1960
        %v1996 = vpop.f32.mrb[0].mxu0
        %v1997 = vadd.f32 %v1930, %v1996
        %v1998 = vpop.f32.mrb[0].mxu0
        %v1999 = vpop.f32.mrb[0].mxu0
        %v2000 = vpop.f32.mrb[0].mxu0
        %2001 = vdwg.mxu0
        %v2006 = vunpack.c.l.b16 %v1861
        %v2007 = vunpack.c.l.b16 %v1862
        %v2008 = vunpack.c.l.b16 %v1863
        %v2009 = vunpack.c.l.b16 %v1864
        %v2010 = vpack.c.b16 %v2007, %v2006
        %v2011 = vpack.c.b16 %v2009, %v2008
        %2014 = vmatprep.subr.bf16.mxu0 0
        %2015 = vmatpush1.bf16.msra.mxu0 %v2010
        %2016 = vmatprep.subr.bf16.mxu0 0
        %2017 = vmatpush1.bf16.msra.mxu0 %v2011
        %2018 = vmatprep.subr.bf16.mxu0 0
        %2019 = vmatpush1.bf16.msra.mxu0 0
        %2020 = vmatprep.subr.bf16.mxu0 0
        %2021 = vmatpush1.bf16.msra.mxu0 0
        %2022 = vmatprep.subr.bf16.mxu0 0
        %2023 = vmatpush1.bf16.msra.mxu0 0
        %2024 = vmatprep.subr.bf16.mxu0 0
        %2025 = vmatpush1.bf16.msra.mxu0 0
        %2026 = vmatprep.subr.bf16.mxu0 0
        %2027 = vmatpush1.bf16.msra.mxu0 0
        %2028 = vmatprep.subr.bf16.mxu0 0
        %2029 = vmatpush1.bf16.msra.mxu0 0
        %2030 = vmatprep.subr.bf16.mxu0 0
        %2031 = vmatpush1.bf16.msra.mxu0 0
        %2032 = vmatprep.subr.bf16.mxu0 0
        %2033 = vmatpush1.bf16.msra.mxu0 0
        %2034 = vmatprep.subr.bf16.mxu0 0
        %2035 = vmatpush1.bf16.msra.mxu0 0
        %2036 = vmatprep.subr.bf16.mxu0 0
        %2037 = vmatpush1.bf16.msra.mxu0 0
        %2038 = vmatprep.subr.bf16.mxu0 0
        %2039 = vmatpush1.bf16.msra.mxu0 0
        %2040 = vmatprep.subr.bf16.mxu0 0
        %2041 = vmatpush1.bf16.msra.mxu0 0
        %2042 = vmatprep.subr.bf16.mxu0 0
        %2043 = vmatpush1.bf16.msra.mxu0 0
        %2044 = vmatprep.subr.bf16.mxu0 0
        %2045 = vmatpush1.bf16.msra.mxu0 0
        %2046 = vmatprep.mubr.bf16.mxu0 0
        %2047 = vmatmul.mubr.bf16.gmra.mrb[0].mxu0 %v1960
        %v2048 = vpop.f32.mrb[0].mxu0
        %v2049 = vadd.f32 %v1934, %v2048
        %v2050 = vpop.f32.mrb[0].mxu0
        %v2051 = vpop.f32.mrb[0].mxu0
        %v2052 = vpop.f32.mrb[0].mxu0
        %2053 = vdwg.mxu0
        %v2058 = vunpack.c.l.b16 %v1865
        %v2059 = vunpack.c.l.b16 %v1866
        %v2060 = vunpack.c.l.b16 %v1867
        %v2061 = vunpack.c.l.b16 %v1868
        %v2062 = vpack.c.b16 %v2059, %v2058
        %v2063 = vpack.c.b16 %v2061, %v2060
        %2066 = vmatprep.subr.bf16.mxu0 0
        %2067 = vmatpush1.bf16.msra.mxu0 %v2062
        %2068 = vmatprep.subr.bf16.mxu0 0
        %2069 = vmatpush1.bf16.msra.mxu0 %v2063
        %2070 = vmatprep.subr.bf16.mxu0 0
        %2071 = vmatpush1.bf16.msra.mxu0 0
        %2072 = vmatprep.subr.bf16.mxu0 0
        %2073 = vmatpush1.bf16.msra.mxu0 0
        %2074 = vmatprep.subr.bf16.mxu0 0
        %2075 = vmatpush1.bf16.msra.mxu0 0
        %2076 = vmatprep.subr.bf16.mxu0 0
        %2077 = vmatpush1.bf16.msra.mxu0 0
        %2078 = vmatprep.subr.bf16.mxu0 0
        %2079 = vmatpush1.bf16.msra.mxu0 0
        %2080 = vmatprep.subr.bf16.mxu0 0
        %2081 = vmatpush1.bf16.msra.mxu0 0
        %2082 = vmatprep.subr.bf16.mxu0 0
        %2083 = vmatpush1.bf16.msra.mxu0 0
        %2084 = vmatprep.subr.bf16.mxu0 0
        %2085 = vmatpush1.bf16.msra.mxu0 0
        %2086 = vmatprep.subr.bf16.mxu0 0
        %2087 = vmatpush1.bf16.msra.mxu0 0
        %2088 = vmatprep.subr.bf16.mxu0 0
        %2089 = vmatpush1.bf16.msra.mxu0 0
        %2090 = vmatprep.subr.bf16.mxu0 0
        %2091 = vmatpush1.bf16.msra.mxu0 0
        %2092 = vmatprep.subr.bf16.mxu0 0
        %2093 = vmatpush1.bf16.msra.mxu0 0
        %2094 = vmatprep.subr.bf16.mxu0 0
        %2095 = vmatpush1.bf16.msra.mxu0 0
        %2096 = vmatprep.subr.bf16.mxu0 0
        %2097 = vmatpush1.bf16.msra.mxu0 0
        %2098 = vmatprep.mubr.bf16.mxu0 0
        %2099 = vmatmul.mubr.bf16.gmra.mrb[0].mxu0 %v1960
        %v2100 = vpop.f32.mrb[0].mxu0
        %v2101 = vadd.f32 %v1938, %v2100
        %v2102 = vpop.f32.mrb[0].mxu0
        %v2103 = vpop.f32.mrb[0].mxu0
        %v2104 = vpop.f32.mrb[0].mxu0
        %2105 = vdwg.mxu0
        %v2110 = vunpack.c.l.b16 %v1869
        %v2111 = vunpack.c.l.b16 %v1870
        %v2112 = vunpack.c.l.b16 %v1871
        %v2113 = vunpack.c.l.b16 %v1872
        %v2114 = vpack.c.b16 %v2111, %v2110
        %v2115 = vpack.c.b16 %v2113, %v2112
        %2118 = vmatprep.subr.bf16.mxu0 0
        %2119 = vmatpush1.bf16.msra.mxu0 %v2114
        %2120 = vmatprep.subr.bf16.mxu0 0
        %2121 = vmatpush1.bf16.msra.mxu0 %v2115
        %2122 = vmatprep.subr.bf16.mxu0 0
        %2123 = vmatpush1.bf16.msra.mxu0 0
        %2124 = vmatprep.subr.bf16.mxu0 0
        %2125 = vmatpush1.bf16.msra.mxu0 0
        %2126 = vmatprep.subr.bf16.mxu0 0
        %2127 = vmatpush1.bf16.msra.mxu0 0
        %2128 = vmatprep.subr.bf16.mxu0 0
        %2129 = vmatpush1.bf16.msra.mxu0 0
        %2130 = vmatprep.subr.bf16.mxu0 0
        %2131 = vmatpush1.bf16.msra.mxu0 0
        %2132 = vmatprep.subr.bf16.mxu0 0
        %2133 = vmatpush1.bf16.msra.mxu0 0
        %2134 = vmatprep.subr.bf16.mxu0 0
        %2135 = vmatpush1.bf16.msra.mxu0 0
        %2136 = vmatprep.subr.bf16.mxu0 0
        %2137 = vmatpush1.bf16.msra.mxu0 0
        %2138 = vmatprep.subr.bf16.mxu0 0
        %2139 = vmatpush1.bf16.msra.mxu0 0
        %2140 = vmatprep.subr.bf16.mxu0 0
        %2141 = vmatpush1.bf16.msra.mxu0 0
        %2142 = vmatprep.subr.bf16.mxu0 0
        %2143 = vmatpush1.bf16.msra.mxu0 0
        %2144 = vmatprep.subr.bf16.mxu0 0
        %2145 = vmatpush1.bf16.msra.mxu0 0
        %2146 = vmatprep.subr.bf16.mxu0 0
        %2147 = vmatpush1.bf16.msra.mxu0 0
        %2148 = vmatprep.subr.bf16.mxu0 0
        %2149 = vmatpush1.bf16.msra.mxu0 0
        %2150 = vmatprep.mubr.bf16.mxu0 0
        %2151 = vmatmul.mubr.bf16.gmra.mrb[0].mxu0 %v1960
        %v2152 = vpop.f32.mrb[0].mxu0
        %v2153 = vadd.f32 %v1942, %v2152
        %v2154 = vpop.f32.mrb[0].mxu0
        %v2155 = vpop.f32.mrb[0].mxu0
        %v2156 = vpop.f32.mrb[0].mxu0
        %2157 = vdwg.mxu0
        %v2162 = vlaneseq
        %v2163 = vshrl.u32 %v2162, 7
        %v2164 = vsub.s32 0, %v2163
        %v2165 = vrot.slane %v1909, %v2164
        %v2166 = vlaneseq
        %v2167 = vshrl.u32 %v2166, 7
        %v2168 = vsub.s32 0, %v2167
        %v2169 = vrot.slane %v1910, %v2168
        %v2170 = vlaneseq
        %v2171 = vshrl.u32 %v2170, 7
        %v2172 = vsub.s32 0, %v2171
        %v2173 = vrot.slane %v1911, %v2172
        %v2174 = vlaneseq
        %v2175 = vshrl.u32 %v2174, 7
        %v2176 = vsub.s32 0, %v2175
        %v2177 = vrot.slane %v1912, %v2176
        %v2186 = vunpack.c.l.b16 %v1873
        %v2187 = vunpack.c.l.b16 %v1874
        %v2188 = vunpack.c.l.b16 %v1875
        %v2189 = vunpack.c.l.b16 %v1876
        %v2190 = vpack.c.b16 %v2187, %v2186
        %v2191 = vpack.c.b16 %v2189, %v2188
        %v2195 = vsel %vm538, %v1922, 0
        %2197 = vmatprep.subr.bf16.mxu0 0
        %2198 = vmatpush1.bf16.msra.mxu0 %v2190
        %2199 = vmatprep.subr.bf16.mxu0 0
        %2200 = vmatpush1.bf16.msra.mxu0 %v2191
        %2201 = vmatprep.subr.bf16.mxu0 0
        %2202 = vmatpush1.bf16.msra.mxu0 0
        %2203 = vmatprep.subr.bf16.mxu0 0
        %2204 = vmatpush1.bf16.msra.mxu0 0
        %2205 = vmatprep.subr.bf16.mxu0 0
        %2206 = vmatpush1.bf16.msra.mxu0 0
        %2207 = vmatprep.subr.bf16.mxu0 0
        %2208 = vmatpush1.bf16.msra.mxu0 0
        %2209 = vmatprep.subr.bf16.mxu0 0
        %2210 = vmatpush1.bf16.msra.mxu0 0
        %2211 = vmatprep.subr.bf16.mxu0 0
        %2212 = vmatpush1.bf16.msra.mxu0 0
        %2213 = vmatprep.subr.bf16.mxu0 0
        %2214 = vmatpush1.bf16.msra.mxu0 0
        %2215 = vmatprep.subr.bf16.mxu0 0
        %2216 = vmatpush1.bf16.msra.mxu0 0
        %2217 = vmatprep.subr.bf16.mxu0 0
        %2218 = vmatpush1.bf16.msra.mxu0 0
        %2219 = vmatprep.subr.bf16.mxu0 0
        %2220 = vmatpush1.bf16.msra.mxu0 0
        %2221 = vmatprep.subr.bf16.mxu0 0
        %2222 = vmatpush1.bf16.msra.mxu0 0
        %2223 = vmatprep.subr.bf16.mxu0 0
        %2224 = vmatpush1.bf16.msra.mxu0 0
        %2225 = vmatprep.subr.bf16.mxu0 0
        %2226 = vmatpush1.bf16.msra.mxu0 0
        %2227 = vmatprep.subr.bf16.mxu0 0
        %2228 = vmatpush1.bf16.msra.mxu0 0
        %2229 = vmatprep.mubr.bf16.mxu0 0
        %2230 = vmatmul.mubr.bf16.gmra.mrb[0].mxu0 %v2195
        %v2231 = vpop.f32.mrb[0].mxu0
        %v2232 = vadd.f32 %v2165, %v2231
        %v2233 = vpop.f32.mrb[0].mxu0
        %v2234 = vpop.f32.mrb[0].mxu0
        %v2235 = vpop.f32.mrb[0].mxu0
        %2236 = vdwg.mxu0
        %v2241 = vunpack.c.l.b16 %v1877
        %v2242 = vunpack.c.l.b16 %v1878
        %v2243 = vunpack.c.l.b16 %v1879
        %v2244 = vunpack.c.l.b16 %v1880
        %v2245 = vpack.c.b16 %v2242, %v2241
        %v2246 = vpack.c.b16 %v2244, %v2243
        %2249 = vmatprep.subr.bf16.mxu0 0
        %2250 = vmatpush1.bf16.msra.mxu0 %v2245
        %2251 = vmatprep.subr.bf16.mxu0 0
        %2252 = vmatpush1.bf16.msra.mxu0 %v2246
        %2253 = vmatprep.subr.bf16.mxu0 0
        %2254 = vmatpush1.bf16.msra.mxu0 0
        %2255 = vmatprep.subr.bf16.mxu0 0
        %2256 = vmatpush1.bf16.msra.mxu0 0
        %2257 = vmatprep.subr.bf16.mxu0 0
        %2258 = vmatpush1.bf16.msra.mxu0 0
        %2259 = vmatprep.subr.bf16.mxu0 0
        %2260 = vmatpush1.bf16.msra.mxu0 0
        %2261 = vmatprep.subr.bf16.mxu0 0
        %2262 = vmatpush1.bf16.msra.mxu0 0
        %2263 = vmatprep.subr.bf16.mxu0 0
        %2264 = vmatpush1.bf16.msra.mxu0 0
        %2265 = vmatprep.subr.bf16.mxu0 0
        %2266 = vmatpush1.bf16.msra.mxu0 0
        %2267 = vmatprep.subr.bf16.mxu0 0
        %2268 = vmatpush1.bf16.msra.mxu0 0
        %2269 = vmatprep.subr.bf16.mxu0 0
        %2270 = vmatpush1.bf16.msra.mxu0 0
        %2271 = vmatprep.subr.bf16.mxu0 0
        %2272 = vmatpush1.bf16.msra.mxu0 0
        %2273 = vmatprep.subr.bf16.mxu0 0
        %2274 = vmatpush1.bf16.msra.mxu0 0
        %2275 = vmatprep.subr.bf16.mxu0 0
        %2276 = vmatpush1.bf16.msra.mxu0 0
        %2277 = vmatprep.subr.bf16.mxu0 0
        %2278 = vmatpush1.bf16.msra.mxu0 0
        %2279 = vmatprep.subr.bf16.mxu0 0
        %2280 = vmatpush1.bf16.msra.mxu0 0
        %2281 = vmatprep.mubr.bf16.mxu0 0
        %2282 = vmatmul.mubr.bf16.gmra.mrb[0].mxu0 %v2195
        %v2283 = vpop.f32.mrb[0].mxu0
        %v2284 = vadd.f32 %v2169, %v2283
        %v2285 = vpop.f32.mrb[0].mxu0
        %v2286 = vpop.f32.mrb[0].mxu0
        %v2287 = vpop.f32.mrb[0].mxu0
        %2288 = vdwg.mxu0
        %v2293 = vunpack.c.l.b16 %v1881
        %v2294 = vunpack.c.l.b16 %v1882
        %v2295 = vunpack.c.l.b16 %v1883
        %v2296 = vunpack.c.l.b16 %v1884
        %v2297 = vpack.c.b16 %v2294, %v2293
        %v2298 = vpack.c.b16 %v2296, %v2295
        %2301 = vmatprep.subr.bf16.mxu0 0
        %2302 = vmatpush1.bf16.msra.mxu0 %v2297
        %2303 = vmatprep.subr.bf16.mxu0 0
        %2304 = vmatpush1.bf16.msra.mxu0 %v2298
        %2305 = vmatprep.subr.bf16.mxu0 0
        %2306 = vmatpush1.bf16.msra.mxu0 0
        %2307 = vmatprep.subr.bf16.mxu0 0
        %2308 = vmatpush1.bf16.msra.mxu0 0
        %2309 = vmatprep.subr.bf16.mxu0 0
        %2310 = vmatpush1.bf16.msra.mxu0 0
        %2311 = vmatprep.subr.bf16.mxu0 0
        %2312 = vmatpush1.bf16.msra.mxu0 0
        %2313 = vmatprep.subr.bf16.mxu0 0
        %2314 = vmatpush1.bf16.msra.mxu0 0
        %2315 = vmatprep.subr.bf16.mxu0 0
        %2316 = vmatpush1.bf16.msra.mxu0 0
        %2317 = vmatprep.subr.bf16.mxu0 0
        %2318 = vmatpush1.bf16.msra.mxu0 0
        %2319 = vmatprep.subr.bf16.mxu0 0
        %2320 = vmatpush1.bf16.msra.mxu0 0
        %2321 = vmatprep.subr.bf16.mxu0 0
        %2322 = vmatpush1.bf16.msra.mxu0 0
        %2323 = vmatprep.subr.bf16.mxu0 0
        %2324 = vmatpush1.bf16.msra.mxu0 0
        %2325 = vmatprep.subr.bf16.mxu0 0
        %2326 = vmatpush1.bf16.msra.mxu0 0
        %2327 = vmatprep.subr.bf16.mxu0 0
        %2328 = vmatpush1.bf16.msra.mxu0 0
        %2329 = vmatprep.subr.bf16.mxu0 0
        %2330 = vmatpush1.bf16.msra.mxu0 0
        %2331 = vmatprep.subr.bf16.mxu0 0
        %2332 = vmatpush1.bf16.msra.mxu0 0
        %2333 = vmatprep.mubr.bf16.mxu0 0
        %2334 = vmatmul.mubr.bf16.gmra.mrb[0].mxu0 %v2195
        %v2335 = vpop.f32.mrb[0].mxu0
        %v2336 = vadd.f32 %v2173, %v2335
        %v2337 = vpop.f32.mrb[0].mxu0
        %v2338 = vpop.f32.mrb[0].mxu0
        %v2339 = vpop.f32.mrb[0].mxu0
        %2340 = vdwg.mxu0
        %v2345 = vunpack.c.l.b16 %v1885
        %v2346 = vunpack.c.l.b16 %v1886
        %v2347 = vunpack.c.l.b16 %v1887
        %v2348 = vunpack.c.l.b16 %v1888
        %v2349 = vpack.c.b16 %v2346, %v2345
        %v2350 = vpack.c.b16 %v2348, %v2347
        %2353 = vmatprep.subr.bf16.mxu0 0
        %2354 = vmatpush1.bf16.msra.mxu0 %v2349
        %2355 = vmatprep.subr.bf16.mxu0 0
        %2356 = vmatpush1.bf16.msra.mxu0 %v2350
        %2357 = vmatprep.subr.bf16.mxu0 0
        %2358 = vmatpush1.bf16.msra.mxu0 0
        %2359 = vmatprep.subr.bf16.mxu0 0
        %2360 = vmatpush1.bf16.msra.mxu0 0
        %2361 = vmatprep.subr.bf16.mxu0 0
        %2362 = vmatpush1.bf16.msra.mxu0 0
        %2363 = vmatprep.subr.bf16.mxu0 0
        %2364 = vmatpush1.bf16.msra.mxu0 0
        %2365 = vmatprep.subr.bf16.mxu0 0
        %2366 = vmatpush1.bf16.msra.mxu0 0
        %2367 = vmatprep.subr.bf16.mxu0 0
        %2368 = vmatpush1.bf16.msra.mxu0 0
        %2369 = vmatprep.subr.bf16.mxu0 0
        %2370 = vmatpush1.bf16.msra.mxu0 0
        %2371 = vmatprep.subr.bf16.mxu0 0
        %2372 = vmatpush1.bf16.msra.mxu0 0
        %2373 = vmatprep.subr.bf16.mxu0 0
        %2374 = vmatpush1.bf16.msra.mxu0 0
        %2375 = vmatprep.subr.bf16.mxu0 0
        %2376 = vmatpush1.bf16.msra.mxu0 0
        %2377 = vmatprep.subr.bf16.mxu0 0
        %2378 = vmatpush1.bf16.msra.mxu0 0
        %2379 = vmatprep.subr.bf16.mxu0 0
        %2380 = vmatpush1.bf16.msra.mxu0 0
        %2381 = vmatprep.subr.bf16.mxu0 0
        %2382 = vmatpush1.bf16.msra.mxu0 0
        %2383 = vmatprep.subr.bf16.mxu0 0
        %2384 = vmatpush1.bf16.msra.mxu0 0
        %2385 = vmatprep.mubr.bf16.mxu0 0
        %2386 = vmatmul.mubr.bf16.gmra.mrb[0].mxu0 %v2195
        %v2387 = vpop.f32.mrb[0].mxu0
        %v2388 = vadd.f32 %v2177, %v2387
        %v2389 = vpop.f32.mrb[0].mxu0
        %v2390 = vpop.f32.mrb[0].mxu0
        %v2391 = vpop.f32.mrb[0].mxu0
        %2392 = vdwg.mxu0
        %v2397 = vlaneseq
        %v2398 = vshrl.u32 %v2397, 7
        %v2399 = vsub.s32 0, %v2398
        %v2400 = vrot.slane %v1913, %v2399
        %v2401 = vlaneseq
        %v2402 = vshrl.u32 %v2401, 7
        %v2403 = vsub.s32 0, %v2402
        %v2404 = vrot.slane %v1914, %v2403
        %v2405 = vlaneseq
        %v2406 = vshrl.u32 %v2405, 7
        %v2407 = vsub.s32 0, %v2406
        %v2408 = vrot.slane %v1915, %v2407
        %v2409 = vlaneseq
        %v2410 = vshrl.u32 %v2409, 7
        %v2411 = vsub.s32 0, %v2410
        %v2412 = vrot.slane %v1916, %v2411
        %v2421 = vunpack.c.l.b16 %v1889
        %v2422 = vunpack.c.l.b16 %v1890
        %v2423 = vunpack.c.l.b16 %v1891
        %v2424 = vunpack.c.l.b16 %v1892
        %v2425 = vpack.c.b16 %v2422, %v2421
        %v2426 = vpack.c.b16 %v2424, %v2423
        %2429 = vmatprep.subr.bf16.mxu0 0
        %2430 = vmatpush1.bf16.msra.mxu0 %v2425
        %2431 = vmatprep.subr.bf16.mxu0 0
        %2432 = vmatpush1.bf16.msra.mxu0 %v2426
        %2433 = vmatprep.subr.bf16.mxu0 0
        %2434 = vmatpush1.bf16.msra.mxu0 0
        %2435 = vmatprep.subr.bf16.mxu0 0
        %2436 = vmatpush1.bf16.msra.mxu0 0
        %2437 = vmatprep.subr.bf16.mxu0 0
        %2438 = vmatpush1.bf16.msra.mxu0 0
        %2439 = vmatprep.subr.bf16.mxu0 0
        %2440 = vmatpush1.bf16.msra.mxu0 0
        %2441 = vmatprep.subr.bf16.mxu0 0
        %2442 = vmatpush1.bf16.msra.mxu0 0
        %2443 = vmatprep.subr.bf16.mxu0 0
        %2444 = vmatpush1.bf16.msra.mxu0 0
        %2445 = vmatprep.subr.bf16.mxu0 0
        %2446 = vmatpush1.bf16.msra.mxu0 0
        %2447 = vmatprep.subr.bf16.mxu0 0
        %2448 = vmatpush1.bf16.msra.mxu0 0
        %2449 = vmatprep.subr.bf16.mxu0 0
        %2450 = vmatpush1.bf16.msra.mxu0 0
        %2451 = vmatprep.subr.bf16.mxu0 0
        %2452 = vmatpush1.bf16.msra.mxu0 0
        %2453 = vmatprep.subr.bf16.mxu0 0
        %2454 = vmatpush1.bf16.msra.mxu0 0
        %2455 = vmatprep.subr.bf16.mxu0 0
        %2456 = vmatpush1.bf16.msra.mxu0 0
        %2457 = vmatprep.subr.bf16.mxu0 0
        %2458 = vmatpush1.bf16.msra.mxu0 0
        %2459 = vmatprep.subr.bf16.mxu0 0
        %2460 = vmatpush1.bf16.msra.mxu0 0
        %2461 = vmatprep.mubr.bf16.mxu0 0
        %2462 = vmatmul.mubr.bf16.gmra.mrb[0].mxu0 %v2195
        %v2463 = vpop.f32.mrb[0].mxu0
        %v2464 = vadd.f32 %v2400, %v2463
        %v2465 = vpop.f32.mrb[0].mxu0
        %v2466 = vpop.f32.mrb[0].mxu0
        %v2467 = vpop.f32.mrb[0].mxu0
        %2468 = vdwg.mxu0
        %v2473 = vunpack.c.l.b16 %v1893
        %v2474 = vunpack.c.l.b16 %v1894
        %v2475 = vunpack.c.l.b16 %v1895
        %v2476 = vunpack.c.l.b16 %v1896
        %v2477 = vpack.c.b16 %v2474, %v2473
        %v2478 = vpack.c.b16 %v2476, %v2475
        %2481 = vmatprep.subr.bf16.mxu0 0
        %2482 = vmatpush1.bf16.msra.mxu0 %v2477
        %2483 = vmatprep.subr.bf16.mxu0 0
        %2484 = vmatpush1.bf16.msra.mxu0 %v2478
        %2485 = vmatprep.subr.bf16.mxu0 0
        %2486 = vmatpush1.bf16.msra.mxu0 0
        %2487 = vmatprep.subr.bf16.mxu0 0
        %2488 = vmatpush1.bf16.msra.mxu0 0
        %2489 = vmatprep.subr.bf16.mxu0 0
        %2490 = vmatpush1.bf16.msra.mxu0 0
        %2491 = vmatprep.subr.bf16.mxu0 0
        %2492 = vmatpush1.bf16.msra.mxu0 0
        %2493 = vmatprep.subr.bf16.mxu0 0
        %2494 = vmatpush1.bf16.msra.mxu0 0
        %2495 = vmatprep.subr.bf16.mxu0 0
        %2496 = vmatpush1.bf16.msra.mxu0 0
        %2497 = vmatprep.subr.bf16.mxu0 0
        %2498 = vmatpush1.bf16.msra.mxu0 0
        %2499 = vmatprep.subr.bf16.mxu0 0
        %2500 = vmatpush1.bf16.msra.mxu0 0
        %2501 = vmatprep.subr.bf16.mxu0 0
        %2502 = vmatpush1.bf16.msra.mxu0 0
        %2503 = vmatprep.subr.bf16.mxu0 0
        %2504 = vmatpush1.bf16.msra.mxu0 0
        %2505 = vmatprep.subr.bf16.mxu0 0
        %2506 = vmatpush1.bf16.msra.mxu0 0
        %2507 = vmatprep.subr.bf16.mxu0 0
        %2508 = vmatpush1.bf16.msra.mxu0 0
        %2509 = vmatprep.subr.bf16.mxu0 0
        %2510 = vmatpush1.bf16.msra.mxu0 0
        %2511 = vmatprep.subr.bf16.mxu0 0
        %2512 = vmatpush1.bf16.msra.mxu0 0
        %2513 = vmatprep.mubr.bf16.mxu0 0
        %2514 = vmatmul.mubr.bf16.gmra.mrb[0].mxu0 %v2195
        %v2515 = vpop.f32.mrb[0].mxu0
        %v2516 = vadd.f32 %v2404, %v2515
        %v2517 = vpop.f32.mrb[0].mxu0
        %v2518 = vpop.f32.mrb[0].mxu0
        %v2519 = vpop.f32.mrb[0].mxu0
        %2520 = vdwg.mxu0
        %v2525 = vunpack.c.l.b16 %v1897
        %v2526 = vunpack.c.l.b16 %v1898
        %v2527 = vunpack.c.l.b16 %v1899
        %v2528 = vunpack.c.l.b16 %v1900
        %v2529 = vpack.c.b16 %v2526, %v2525
        %v2530 = vpack.c.b16 %v2528, %v2527
        %2533 = vmatprep.subr.bf16.mxu0 0
        %2534 = vmatpush1.bf16.msra.mxu0 %v2529
        %2535 = vmatprep.subr.bf16.mxu0 0
        %2536 = vmatpush1.bf16.msra.mxu0 %v2530
        %2537 = vmatprep.subr.bf16.mxu0 0
        %2538 = vmatpush1.bf16.msra.mxu0 0
        %2539 = vmatprep.subr.bf16.mxu0 0
        %2540 = vmatpush1.bf16.msra.mxu0 0
        %2541 = vmatprep.subr.bf16.mxu0 0
        %2542 = vmatpush1.bf16.msra.mxu0 0
        %2543 = vmatprep.subr.bf16.mxu0 0
        %2544 = vmatpush1.bf16.msra.mxu0 0
        %2545 = vmatprep.subr.bf16.mxu0 0
        %2546 = vmatpush1.bf16.msra.mxu0 0
        %2547 = vmatprep.subr.bf16.mxu0 0
        %2548 = vmatpush1.bf16.msra.mxu0 0
        %2549 = vmatprep.subr.bf16.mxu0 0
        %2550 = vmatpush1.bf16.msra.mxu0 0
        %2551 = vmatprep.subr.bf16.mxu0 0
        %2552 = vmatpush1.bf16.msra.mxu0 0
        %2553 = vmatprep.subr.bf16.mxu0 0
        %2554 = vmatpush1.bf16.msra.mxu0 0
        %2555 = vmatprep.subr.bf16.mxu0 0
        %2556 = vmatpush1.bf16.msra.mxu0 0
        %2557 = vmatprep.subr.bf16.mxu0 0
        %2558 = vmatpush1.bf16.msra.mxu0 0
        %2559 = vmatprep.subr.bf16.mxu0 0
        %2560 = vmatpush1.bf16.msra.mxu0 0
        %2561 = vmatprep.subr.bf16.mxu0 0
        %2562 = vmatpush1.bf16.msra.mxu0 0
        %2563 = vmatprep.subr.bf16.mxu0 0
        %2564 = vmatpush1.bf16.msra.mxu0 0
        %2565 = vmatprep.mubr.bf16.mxu0 0
        %2566 = vmatmul.mubr.bf16.gmra.mrb[0].mxu0 %v2195
        %v2567 = vpop.f32.mrb[0].mxu0
        %v2568 = vadd.f32 %v2408, %v2567
        %v2569 = vpop.f32.mrb[0].mxu0
        %v2570 = vpop.f32.mrb[0].mxu0
        %v2571 = vpop.f32.mrb[0].mxu0
        %2572 = vdwg.mxu0
        %v2577 = vunpack.c.l.b16 %v1901
        %v2578 = vunpack.c.l.b16 %v1902
        %v2579 = vunpack.c.l.b16 %v1903
        %v2580 = vunpack.c.l.b16 %v1904
        %v2581 = vpack.c.b16 %v2578, %v2577
        %v2582 = vpack.c.b16 %v2580, %v2579
        %2585 = vmatprep.subr.bf16.mxu0 0
        %2586 = vmatpush1.bf16.msra.mxu0 %v2581
        %2587 = vmatprep.subr.bf16.mxu0 0
        %2588 = vmatpush1.bf16.msra.mxu0 %v2582
        %2589 = vmatprep.subr.bf16.mxu0 0
        %2590 = vmatpush1.bf16.msra.mxu0 0
        %2591 = vmatprep.subr.bf16.mxu0 0
        %2592 = vmatpush1.bf16.msra.mxu0 0
        %2593 = vmatprep.subr.bf16.mxu0 0
        %2594 = vmatpush1.bf16.msra.mxu0 0
        %2595 = vmatprep.subr.bf16.mxu0 0
        %2596 = vmatpush1.bf16.msra.mxu0 0
        %2597 = vmatprep.subr.bf16.mxu0 0
        %2598 = vmatpush1.bf16.msra.mxu0 0
        %2599 = vmatprep.subr.bf16.mxu0 0
        %2600 = vmatpush1.bf16.msra.mxu0 0
        %2601 = vmatprep.subr.bf16.mxu0 0
        %2602 = vmatpush1.bf16.msra.mxu0 0
        %2603 = vmatprep.subr.bf16.mxu0 0
        %2604 = vmatpush1.bf16.msra.mxu0 0
        %2605 = vmatprep.subr.bf16.mxu0 0
        %2606 = vmatpush1.bf16.msra.mxu0 0
        %2607 = vmatprep.subr.bf16.mxu0 0
        %2608 = vmatpush1.bf16.msra.mxu0 0
        %2609 = vmatprep.subr.bf16.mxu0 0
        %2610 = vmatpush1.bf16.msra.mxu0 0
        %2611 = vmatprep.subr.bf16.mxu0 0
        %2612 = vmatpush1.bf16.msra.mxu0 0
        %2613 = vmatprep.subr.bf16.mxu0 0
        %2614 = vmatpush1.bf16.msra.mxu0 0
        %2615 = vmatprep.subr.bf16.mxu0 0
        %2616 = vmatpush1.bf16.msra.mxu0 0
        %2617 = vmatprep.mubr.bf16.mxu0 0
        %2618 = vmatmul.mubr.bf16.gmra.mrb[0].mxu0 %v2195
        %v2619 = vpop.f32.mrb[0].mxu0
        %v2620 = vadd.f32 %v2412, %v2619
        %v2621 = vpop.f32.mrb[0].mxu0
        %v2622 = vpop.f32.mrb[0].mxu0
        %v2623 = vpop.f32.mrb[0].mxu0
        %2624 = vdwg.mxu0
        %v2625 = vpack.c.bf16 %v1997, %v1997
        %v2626 = vpack.c.bf16 %v2049, %v2049
        %v2627 = vpack.c.bf16 %v2101, %v2101
        %v2628 = vpack.c.bf16 %v2153, %v2153
        %v2629 = vpack.c.bf16 %v2232, %v2232
        %v2630 = vpack.c.bf16 %v2284, %v2284
        %v2631 = vpack.c.bf16 %v2336, %v2336
        %v2632 = vpack.c.bf16 %v2388, %v2388
        %v2634 = vsel %vm1210, %v2625, 0
        %v2637 = vsel %vm1210, %v2629, 0
        %2639 = vmatprep.subr.bf16.mxu0 0
        %2640 = vmatpush1.bf16.xpose.msra.mxu0 %v2637
        %2641 = vmatprep.subr.bf16.mxu0 0
        %2642 = vmatpush1.bf16.xpose.msra.mxu0 0
        %2643 = vmatprep.subr.bf16.mxu0 0
        %2644 = vmatpush1.bf16.xpose.msra.mxu0 0
        %2645 = vmatprep.subr.bf16.mxu0 0
        %2646 = vmatpush1.bf16.xpose.msra.mxu0 0
        %2647 = vmatprep.subr.bf16.mxu0 0
        %2648 = vmatpush1.bf16.xpose.msra.mxu0 0
        %2649 = vmatprep.subr.bf16.mxu0 0
        %2650 = vmatpush1.bf16.xpose.msra.mxu0 0
        %2651 = vmatprep.subr.bf16.mxu0 0
        %2652 = vmatpush1.bf16.xpose.msra.mxu0 0
        %2653 = vmatprep.subr.bf16.mxu0 0
        %2654 = vmatpush1.bf16.xpose.msra.mxu0 0
        %2655 = vmatprep.subr.bf16.mxu0 0
        %2656 = vmatpush1.bf16.xpose.msra.mxu0 0
        %2657 = vmatprep.subr.bf16.mxu0 0
        %2658 = vmatpush1.bf16.xpose.msra.mxu0 0
        %2659 = vmatprep.subr.bf16.mxu0 0
        %2660 = vmatpush1.bf16.xpose.msra.mxu0 0
        %2661 = vmatprep.subr.bf16.mxu0 0
        %2662 = vmatpush1.bf16.xpose.msra.mxu0 0
        %2663 = vmatprep.subr.bf16.mxu0 0
        %2664 = vmatpush1.bf16.xpose.msra.mxu0 0
        %2665 = vmatprep.subr.bf16.mxu0 0
        %2666 = vmatpush1.bf16.xpose.msra.mxu0 0
        %2667 = vmatprep.subr.bf16.mxu0 0
        %2668 = vmatpush1.bf16.xpose.msra.mxu0 0
        %2669 = vmatprep.subr.bf16.mxu0 0
        %2670 = vmatpush1.bf16.xpose.msra.mxu0 0
        %2671 = vmatprep.mubr.bf16.mxu0 0
        %2672 = vmatmul.mubr.bf16.gmra.mrb[0].mxu0 %v2634
        %v2673 = vpop.f32.mrb[0].mxu0
        %v2674 = vadd.f32 0.0, %v2673
        %v2675 = vpop.f32.mrb[0].mxu0
        %v2676 = vpop.f32.mrb[0].mxu0
        %v2677 = vpop.f32.mrb[0].mxu0
        %2678 = vdwg.mxu0
        %v2680 = vsel %vm1210, %v2626, 0
        %v2683 = vsel %vm1210, %v2630, 0
        %2685 = vmatprep.subr.bf16.mxu0 0
        %2686 = vmatpush1.bf16.xpose.msra.mxu0 %v2683
        %2687 = vmatprep.subr.bf16.mxu0 0
        %2688 = vmatpush1.bf16.xpose.msra.mxu0 0
        %2689 = vmatprep.subr.bf16.mxu0 0
        %2690 = vmatpush1.bf16.xpose.msra.mxu0 0
        %2691 = vmatprep.subr.bf16.mxu0 0
        %2692 = vmatpush1.bf16.xpose.msra.mxu0 0
        %2693 = vmatprep.subr.bf16.mxu0 0
        %2694 = vmatpush1.bf16.xpose.msra.mxu0 0
        %2695 = vmatprep.subr.bf16.mxu0 0
        %2696 = vmatpush1.bf16.xpose.msra.mxu0 0
        %2697 = vmatprep.subr.bf16.mxu0 0
        %2698 = vmatpush1.bf16.xpose.msra.mxu0 0
        %2699 = vmatprep.subr.bf16.mxu0 0
        %2700 = vmatpush1.bf16.xpose.msra.mxu0 0
        %2701 = vmatprep.subr.bf16.mxu0 0
        %2702 = vmatpush1.bf16.xpose.msra.mxu0 0
        %2703 = vmatprep.subr.bf16.mxu0 0
        %2704 = vmatpush1.bf16.xpose.msra.mxu0 0
        %2705 = vmatprep.subr.bf16.mxu0 0
        %2706 = vmatpush1.bf16.xpose.msra.mxu0 0
        %2707 = vmatprep.subr.bf16.mxu0 0
        %2708 = vmatpush1.bf16.xpose.msra.mxu0 0
        %2709 = vmatprep.subr.bf16.mxu0 0
        %2710 = vmatpush1.bf16.xpose.msra.mxu0 0
        %2711 = vmatprep.subr.bf16.mxu0 0
        %2712 = vmatpush1.bf16.xpose.msra.mxu0 0
        %2713 = vmatprep.subr.bf16.mxu0 0
        %2714 = vmatpush1.bf16.xpose.msra.mxu0 0
        %2715 = vmatprep.subr.bf16.mxu0 0
        %2716 = vmatpush1.bf16.xpose.msra.mxu0 0
        %2717 = vmatprep.mubr.bf16.mxu0 0
        %2718 = vmatmul.mubr.bf16.gmra.mrb[0].mxu0 %v2680
        %v2719 = vpop.f32.mrb[0].mxu0
        %v2720 = vadd.f32 0.0, %v2719
        %v2721 = vpop.f32.mrb[0].mxu0
        %v2722 = vpop.f32.mrb[0].mxu0
        %v2723 = vpop.f32.mrb[0].mxu0
        %2724 = vdwg.mxu0
        %v2726 = vsel %vm1210, %v2627, 0
        %v2729 = vsel %vm1210, %v2631, 0
        %2731 = vmatprep.subr.bf16.mxu0 0
        %2732 = vmatpush1.bf16.xpose.msra.mxu0 %v2729
        %2733 = vmatprep.subr.bf16.mxu0 0
        %2734 = vmatpush1.bf16.xpose.msra.mxu0 0
        %2735 = vmatprep.subr.bf16.mxu0 0
        %2736 = vmatpush1.bf16.xpose.msra.mxu0 0
        %2737 = vmatprep.subr.bf16.mxu0 0
        %2738 = vmatpush1.bf16.xpose.msra.mxu0 0
        %2739 = vmatprep.subr.bf16.mxu0 0
        %2740 = vmatpush1.bf16.xpose.msra.mxu0 0
        %2741 = vmatprep.subr.bf16.mxu0 0
        %2742 = vmatpush1.bf16.xpose.msra.mxu0 0
        %2743 = vmatprep.subr.bf16.mxu0 0
        %2744 = vmatpush1.bf16.xpose.msra.mxu0 0
        %2745 = vmatprep.subr.bf16.mxu0 0
        %2746 = vmatpush1.bf16.xpose.msra.mxu0 0
        %2747 = vmatprep.subr.bf16.mxu0 0
        %2748 = vmatpush1.bf16.xpose.msra.mxu0 0
        %2749 = vmatprep.subr.bf16.mxu0 0
        %2750 = vmatpush1.bf16.xpose.msra.mxu0 0
        %2751 = vmatprep.subr.bf16.mxu0 0
        %2752 = vmatpush1.bf16.xpose.msra.mxu0 0
        %2753 = vmatprep.subr.bf16.mxu0 0
        %2754 = vmatpush1.bf16.xpose.msra.mxu0 0
        %2755 = vmatprep.subr.bf16.mxu0 0
        %2756 = vmatpush1.bf16.xpose.msra.mxu0 0
        %2757 = vmatprep.subr.bf16.mxu0 0
        %2758 = vmatpush1.bf16.xpose.msra.mxu0 0
        %2759 = vmatprep.subr.bf16.mxu0 0
        %2760 = vmatpush1.bf16.xpose.msra.mxu0 0
        %2761 = vmatprep.subr.bf16.mxu0 0
        %2762 = vmatpush1.bf16.xpose.msra.mxu0 0
        %2763 = vmatprep.mubr.bf16.mxu0 0
        %2764 = vmatmul.mubr.bf16.gmra.mrb[0].mxu0 %v2726
        %v2765 = vpop.f32.mrb[0].mxu0
        %v2766 = vadd.f32 0.0, %v2765
        %v2767 = vpop.f32.mrb[0].mxu0
        %v2768 = vpop.f32.mrb[0].mxu0
        %v2769 = vpop.f32.mrb[0].mxu0
        %2770 = vdwg.mxu0
        %v2772 = vsel %vm1210, %v2628, 0
        %v2775 = vsel %vm1210, %v2632, 0
        %2777 = vmatprep.subr.bf16.mxu0 0
        %2778 = vmatpush1.bf16.xpose.msra.mxu0 %v2775
        %2779 = vmatprep.subr.bf16.mxu0 0
        %2780 = vmatpush1.bf16.xpose.msra.mxu0 0
        %2781 = vmatprep.subr.bf16.mxu0 0
        %2782 = vmatpush1.bf16.xpose.msra.mxu0 0
        %2783 = vmatprep.subr.bf16.mxu0 0
        %2784 = vmatpush1.bf16.xpose.msra.mxu0 0
        %2785 = vmatprep.subr.bf16.mxu0 0
        %2786 = vmatpush1.bf16.xpose.msra.mxu0 0
        %2787 = vmatprep.subr.bf16.mxu0 0
        %2788 = vmatpush1.bf16.xpose.msra.mxu0 0
        %2789 = vmatprep.subr.bf16.mxu0 0
        %2790 = vmatpush1.bf16.xpose.msra.mxu0 0
        %2791 = vmatprep.subr.bf16.mxu0 0
        %2792 = vmatpush1.bf16.xpose.msra.mxu0 0
        %2793 = vmatprep.subr.bf16.mxu0 0
        %2794 = vmatpush1.bf16.xpose.msra.mxu0 0
        %2795 = vmatprep.subr.bf16.mxu0 0
        %2796 = vmatpush1.bf16.xpose.msra.mxu0 0
        %2797 = vmatprep.subr.bf16.mxu0 0
        %2798 = vmatpush1.bf16.xpose.msra.mxu0 0
        %2799 = vmatprep.subr.bf16.mxu0 0
        %2800 = vmatpush1.bf16.xpose.msra.mxu0 0
        %2801 = vmatprep.subr.bf16.mxu0 0
        %2802 = vmatpush1.bf16.xpose.msra.mxu0 0
        %2803 = vmatprep.subr.bf16.mxu0 0
        %2804 = vmatpush1.bf16.xpose.msra.mxu0 0
        %2805 = vmatprep.subr.bf16.mxu0 0
        %2806 = vmatpush1.bf16.xpose.msra.mxu0 0
        %2807 = vmatprep.subr.bf16.mxu0 0
        %2808 = vmatpush1.bf16.xpose.msra.mxu0 0
        %2809 = vmatprep.mubr.bf16.mxu0 0
        %2810 = vmatmul.mubr.bf16.gmra.mrb[0].mxu0 %v2772
        %v2811 = vpop.f32.mrb[0].mxu0
        %v2812 = vadd.f32 0.0, %v2811
        %v2813 = vpop.f32.mrb[0].mxu0
        %v2814 = vpop.f32.mrb[0].mxu0
        %v2815 = vpop.f32.mrb[0].mxu0
        %2816 = vdwg.mxu0
        %v2817 = vsel %vm1210, %v2674, -inf
        %2818 = vmax.xlane.f32.xlu0 %v2817
        %v2819 = vpop.xlane.xlu0 %2818
        %v2820 = vsel %vm1210, %v2720, -inf
        %2821 = vmax.xlane.f32.xlu0 %v2820
        %v2822 = vpop.xlane.xlu0 %2821
        %v2823 = vsel %vm1210, %v2766, -inf
        %2824 = vmax.xlane.f32.xlu0 %v2823
        %v2825 = vpop.xlane.xlu0 %2824
        %v2826 = vsel %vm1210, %v2812, -inf
        %2827 = vmax.xlane.f32.xlu0 %v2826
        %v2828 = vpop.xlane.xlu0 %2827
        %v2829 = vsub.f32 %v2674, %v2819
        %v2830 = vsub.f32 %v2720, %v2822
        %v2831 = vsub.f32 %v2766, %v2825
        %v2832 = vsub.f32 %v2812, %v2828
        %v2833 = vmul.f32 %v2829, 1.442695
        %v2834 = vpow.pop %v2833
        %v2835 = vmul.f32 %v2830, 1.442695
        %v2836 = vpow.pop %v2835
        %v2837 = vmul.f32 %v2831, 1.442695
        %v2838 = vpow.pop %v2837
        %v2839 = vmul.f32 %v2832, 1.442695
        %v2840 = vpow.pop %v2839
        %v2841 = vsel %vm1210, %v2834, 0.0
        %2842 = vadd.xlane.f32.xlu0 %v2841
        %v2843 = vpop.xlane.xlu0 %2842
        %v2844 = vsel %vm1210, %v2836, 0.0
        %2845 = vadd.xlane.f32.xlu0 %v2844
        %v2846 = vpop.xlane.xlu0 %2845
        %v2847 = vsel %vm1210, %v2838, 0.0
        %2848 = vadd.xlane.f32.xlu0 %v2847
        %v2849 = vpop.xlane.xlu0 %2848
        %v2850 = vsel %vm1210, %v2840, 0.0
        %2851 = vadd.xlane.f32.xlu0 %v2850
        %v2852 = vpop.xlane.xlu0 %2851
        %v2853 = vrcp.pop %v2843
        %v2854 = vrcp.pop %v2846
        %v2855 = vrcp.pop %v2849
        %v2856 = vrcp.pop %v2852
        %v2857 = vmul.f32 %v2834, %v2853
        %v2858 = vmul.f32 %v2836, %v2854
        %v2859 = vmul.f32 %v2838, %v2855
        %v2860 = vmul.f32 %v2840, %v2856
        %v2861 = vpack.c.bf16 %v2857, %v2857
        %v2862 = vpack.c.bf16 %v2858, %v2858
        %v2863 = vpack.c.bf16 %v2859, %v2859
        %v2864 = vpack.c.bf16 %v2860, %v2860
        %v2865 = vpack.c.bf16 %v2464, %v2464
        %v2866 = vpack.c.bf16 %v2516, %v2516
        %v2867 = vpack.c.bf16 %v2568, %v2568
        %v2868 = vpack.c.bf16 %v2620, %v2620
        %v2870 = vsel %vm1210, %v2861, 0
        %v2873 = vsel %vm1450, %v2865, 0
        %2875 = vmatprep.subr.bf16.mxu0 0
        %2876 = vmatpush1.bf16.msra.mxu0 %v2873
        %2877 = vmatprep.subr.bf16.mxu0 0
        %2878 = vmatpush1.bf16.msra.mxu0 0
        %2879 = vmatprep.subr.bf16.mxu0 0
        %2880 = vmatpush1.bf16.msra.mxu0 0
        %2881 = vmatprep.subr.bf16.mxu0 0
        %2882 = vmatpush1.bf16.msra.mxu0 0
        %2883 = vmatprep.subr.bf16.mxu0 0
        %2884 = vmatpush1.bf16.msra.mxu0 0
        %2885 = vmatprep.subr.bf16.mxu0 0
        %2886 = vmatpush1.bf16.msra.mxu0 0
        %2887 = vmatprep.subr.bf16.mxu0 0
        %2888 = vmatpush1.bf16.msra.mxu0 0
        %2889 = vmatprep.subr.bf16.mxu0 0
        %2890 = vmatpush1.bf16.msra.mxu0 0
        %2891 = vmatprep.subr.bf16.mxu0 0
        %2892 = vmatpush1.bf16.msra.mxu0 0
        %2893 = vmatprep.subr.bf16.mxu0 0
        %2894 = vmatpush1.bf16.msra.mxu0 0
        %2895 = vmatprep.subr.bf16.mxu0 0
        %2896 = vmatpush1.bf16.msra.mxu0 0
        %2897 = vmatprep.subr.bf16.mxu0 0
        %2898 = vmatpush1.bf16.msra.mxu0 0
        %2899 = vmatprep.subr.bf16.mxu0 0
        %2900 = vmatpush1.bf16.msra.mxu0 0
        %2901 = vmatprep.subr.bf16.mxu0 0
        %2902 = vmatpush1.bf16.msra.mxu0 0
        %2903 = vmatprep.subr.bf16.mxu0 0
        %2904 = vmatpush1.bf16.msra.mxu0 0
        %2905 = vmatprep.subr.bf16.mxu0 0
        %2906 = vmatpush1.bf16.msra.mxu0 0
        %2907 = vmatprep.mubr.bf16.mxu0 0
        %2908 = vmatmul.mubr.bf16.gmra.mrb[0].mxu0 %v2870
        %v2909 = vpop.f32.mrb[0].mxu0
        %v2910 = vadd.f32 0.0, %v2909
        %v2911 = vpop.f32.mrb[0].mxu0
        %v2912 = vpop.f32.mrb[0].mxu0
        %v2913 = vpop.f32.mrb[0].mxu0
        %2914 = vdwg.mxu0
        %v2916 = vsel %vm1210, %v2862, 0
        %v2919 = vsel %vm1450, %v2866, 0
        %2921 = vmatprep.subr.bf16.mxu0 0
        %2922 = vmatpush1.bf16.msra.mxu0 %v2919
        %2923 = vmatprep.subr.bf16.mxu0 0
        %2924 = vmatpush1.bf16.msra.mxu0 0
        %2925 = vmatprep.subr.bf16.mxu0 0
        %2926 = vmatpush1.bf16.msra.mxu0 0
        %2927 = vmatprep.subr.bf16.mxu0 0
        %2928 = vmatpush1.bf16.msra.mxu0 0
        %2929 = vmatprep.subr.bf16.mxu0 0
        %2930 = vmatpush1.bf16.msra.mxu0 0
        %2931 = vmatprep.subr.bf16.mxu0 0
        %2932 = vmatpush1.bf16.msra.mxu0 0
        %2933 = vmatprep.subr.bf16.mxu0 0
        %2934 = vmatpush1.bf16.msra.mxu0 0
        %2935 = vmatprep.subr.bf16.mxu0 0
        %2936 = vmatpush1.bf16.msra.mxu0 0
        %2937 = vmatprep.subr.bf16.mxu0 0
        %2938 = vmatpush1.bf16.msra.mxu0 0
        %2939 = vmatprep.subr.bf16.mxu0 0
        %2940 = vmatpush1.bf16.msra.mxu0 0
        %2941 = vmatprep.subr.bf16.mxu0 0
        %2942 = vmatpush1.bf16.msra.mxu0 0
        %2943 = vmatprep.subr.bf16.mxu0 0
        %2944 = vmatpush1.bf16.msra.mxu0 0
        %2945 = vmatprep.subr.bf16.mxu0 0
        %2946 = vmatpush1.bf16.msra.mxu0 0
        %2947 = vmatprep.subr.bf16.mxu0 0
        %2948 = vmatpush1.bf16.msra.mxu0 0
        %2949 = vmatprep.subr.bf16.mxu0 0
        %2950 = vmatpush1.bf16.msra.mxu0 0
        %2951 = vmatprep.subr.bf16.mxu0 0
        %2952 = vmatpush1.bf16.msra.mxu0 0
        %2953 = vmatprep.mubr.bf16.mxu0 0
        %2954 = vmatmul.mubr.bf16.gmra.mrb[0].mxu0 %v2916
        %v2955 = vpop.f32.mrb[0].mxu0
        %v2956 = vadd.f32 0.0, %v2955
        %v2957 = vpop.f32.mrb[0].mxu0
        %v2958 = vpop.f32.mrb[0].mxu0
        %v2959 = vpop.f32.mrb[0].mxu0
        %2960 = vdwg.mxu0
        %v2962 = vsel %vm1210, %v2863, 0
        %v2965 = vsel %vm1450, %v2867, 0
        %2967 = vmatprep.subr.bf16.mxu0 0
        %2968 = vmatpush1.bf16.msra.mxu0 %v2965
        %2969 = vmatprep.subr.bf16.mxu0 0
        %2970 = vmatpush1.bf16.msra.mxu0 0
        %2971 = vmatprep.subr.bf16.mxu0 0
        %2972 = vmatpush1.bf16.msra.mxu0 0
        %2973 = vmatprep.subr.bf16.mxu0 0
        %2974 = vmatpush1.bf16.msra.mxu0 0
        %2975 = vmatprep.subr.bf16.mxu0 0
        %2976 = vmatpush1.bf16.msra.mxu0 0
        %2977 = vmatprep.subr.bf16.mxu0 0
        %2978 = vmatpush1.bf16.msra.mxu0 0
        %2979 = vmatprep.subr.bf16.mxu0 0
        %2980 = vmatpush1.bf16.msra.mxu0 0
        %2981 = vmatprep.subr.bf16.mxu0 0
        %2982 = vmatpush1.bf16.msra.mxu0 0
        %2983 = vmatprep.subr.bf16.mxu0 0
        %2984 = vmatpush1.bf16.msra.mxu0 0
        %2985 = vmatprep.subr.bf16.mxu0 0
        %2986 = vmatpush1.bf16.msra.mxu0 0
        %2987 = vmatprep.subr.bf16.mxu0 0
        %2988 = vmatpush1.bf16.msra.mxu0 0
        %2989 = vmatprep.subr.bf16.mxu0 0
        %2990 = vmatpush1.bf16.msra.mxu0 0
        %2991 = vmatprep.subr.bf16.mxu0 0
        %2992 = vmatpush1.bf16.msra.mxu0 0
        %2993 = vmatprep.subr.bf16.mxu0 0
        %2994 = vmatpush1.bf16.msra.mxu0 0
        %2995 = vmatprep.subr.bf16.mxu0 0
        %2996 = vmatpush1.bf16.msra.mxu0 0
        %2997 = vmatprep.subr.bf16.mxu0 0
        %2998 = vmatpush1.bf16.msra.mxu0 0
        %2999 = vmatprep.mubr.bf16.mxu0 0
        %3000 = vmatmul.mubr.bf16.gmra.mrb[0].mxu0 %v2962
        %v3001 = vpop.f32.mrb[0].mxu0
        %v3002 = vadd.f32 0.0, %v3001
        %v3003 = vpop.f32.mrb[0].mxu0
        %v3004 = vpop.f32.mrb[0].mxu0
        %v3005 = vpop.f32.mrb[0].mxu0
        %3006 = vdwg.mxu0
        %v3008 = vsel %vm1210, %v2864, 0
        %v3011 = vsel %vm1450, %v2868, 0
        %3013 = vmatprep.subr.bf16.mxu0 0
        %3014 = vmatpush1.bf16.msra.mxu0 %v3011
        %3015 = vmatprep.subr.bf16.mxu0 0
        %3016 = vmatpush1.bf16.msra.mxu0 0
        %3017 = vmatprep.subr.bf16.mxu0 0
        %3018 = vmatpush1.bf16.msra.mxu0 0
        %3019 = vmatprep.subr.bf16.mxu0 0
        %3020 = vmatpush1.bf16.msra.mxu0 0
        %3021 = vmatprep.subr.bf16.mxu0 0
        %3022 = vmatpush1.bf16.msra.mxu0 0
        %3023 = vmatprep.subr.bf16.mxu0 0
        %3024 = vmatpush1.bf16.msra.mxu0 0
        %3025 = vmatprep.subr.bf16.mxu0 0
        %3026 = vmatpush1.bf16.msra.mxu0 0
        %3027 = vmatprep.subr.bf16.mxu0 0
        %3028 = vmatpush1.bf16.msra.mxu0 0
        %3029 = vmatprep.subr.bf16.mxu0 0
        %3030 = vmatpush1.bf16.msra.mxu0 0
        %3031 = vmatprep.subr.bf16.mxu0 0
        %3032 = vmatpush1.bf16.msra.mxu0 0
        %3033 = vmatprep.subr.bf16.mxu0 0
        %3034 = vmatpush1.bf16.msra.mxu0 0
        %3035 = vmatprep.subr.bf16.mxu0 0
        %3036 = vmatpush1.bf16.msra.mxu0 0
        %3037 = vmatprep.subr.bf16.mxu0 0
        %3038 = vmatpush1.bf16.msra.mxu0 0
        %3039 = vmatprep.subr.bf16.mxu0 0
        %3040 = vmatpush1.bf16.msra.mxu0 0
        %3041 = vmatprep.subr.bf16.mxu0 0
        %3042 = vmatpush1.bf16.msra.mxu0 0
        %3043 = vmatprep.subr.bf16.mxu0 0
        %3044 = vmatpush1.bf16.msra.mxu0 0
        %3045 = vmatprep.mubr.bf16.mxu0 0
        %3046 = vmatmul.mubr.bf16.gmra.mrb[0].mxu0 %v3008
        %v3047 = vpop.f32.mrb[0].mxu0
        %v3048 = vadd.f32 0.0, %v3047
        %v3049 = vpop.f32.mrb[0].mxu0
        %v3050 = vpop.f32.mrb[0].mxu0
        %v3051 = vpop.f32.mrb[0].mxu0
        %3052 = vdwg.mxu0
        %v3053 = vpack.c.bf16 %v2910, %v2910
        %v3054 = vpack.c.bf16 %v2956, %v2956
        %v3055 = vpack.c.bf16 %v3002, %v3002
        %v3056 = vpack.c.bf16 %v3048, %v3048
        %v3058 = vsel %vm1210, %v3053, 0
        %v3061 = vsel %vm1450, %v1917, 0
        %3063 = vmatprep.subr.bf16.mxu0 0
        %3064 = vmatpush1.bf16.msra.mxu0 %v3061
        %3065 = vmatprep.subr.bf16.mxu0 0
        %3066 = vmatpush1.bf16.msra.mxu0 0
        %3067 = vmatprep.subr.bf16.mxu0 0
        %3068 = vmatpush1.bf16.msra.mxu0 0
        %3069 = vmatprep.subr.bf16.mxu0 0
        %3070 = vmatpush1.bf16.msra.mxu0 0
        %3071 = vmatprep.subr.bf16.mxu0 0
        %3072 = vmatpush1.bf16.msra.mxu0 0
        %3073 = vmatprep.subr.bf16.mxu0 0
        %3074 = vmatpush1.bf16.msra.mxu0 0
        %3075 = vmatprep.subr.bf16.mxu0 0
        %3076 = vmatpush1.bf16.msra.mxu0 0
        %3077 = vmatprep.subr.bf16.mxu0 0
        %3078 = vmatpush1.bf16.msra.mxu0 0
        %3079 = vmatprep.subr.bf16.mxu0 0
        %3080 = vmatpush1.bf16.msra.mxu0 0
        %3081 = vmatprep.subr.bf16.mxu0 0
        %3082 = vmatpush1.bf16.msra.mxu0 0
        %3083 = vmatprep.subr.bf16.mxu0 0
        %3084 = vmatpush1.bf16.msra.mxu0 0
        %3085 = vmatprep.subr.bf16.mxu0 0
        %3086 = vmatpush1.bf16.msra.mxu0 0
        %3087 = vmatprep.subr.bf16.mxu0 0
        %3088 = vmatpush1.bf16.msra.mxu0 0
        %3089 = vmatprep.subr.bf16.mxu0 0
        %3090 = vmatpush1.bf16.msra.mxu0 0
        %3091 = vmatprep.subr.bf16.mxu0 0
        %3092 = vmatpush1.bf16.msra.mxu0 0
        %3093 = vmatprep.subr.bf16.mxu0 0
        %3094 = vmatpush1.bf16.msra.mxu0 0
        %3095 = vmatprep.mubr.bf16.mxu0 0
        %3096 = vmatmul.mubr.bf16.gmra.mrb[0].mxu0 %v3058
        %v3097 = vpop.f32.mrb[0].mxu0
        %v3098 = vadd.f32 0.0, %v3097
        %v3099 = vpop.f32.mrb[0].mxu0
        %v3100 = vpop.f32.mrb[0].mxu0
        %v3101 = vpop.f32.mrb[0].mxu0
        %3102 = vdwg.mxu0
        %v3104 = vsel %vm1210, %v3054, 0
        %v3107 = vsel %vm1450, %v1918, 0
        %3109 = vmatprep.subr.bf16.mxu0 0
        %3110 = vmatpush1.bf16.msra.mxu0 %v3107
        %3111 = vmatprep.subr.bf16.mxu0 0
        %3112 = vmatpush1.bf16.msra.mxu0 0
        %3113 = vmatprep.subr.bf16.mxu0 0
        %3114 = vmatpush1.bf16.msra.mxu0 0
        %3115 = vmatprep.subr.bf16.mxu0 0
        %3116 = vmatpush1.bf16.msra.mxu0 0
        %3117 = vmatprep.subr.bf16.mxu0 0
        %3118 = vmatpush1.bf16.msra.mxu0 0
        %3119 = vmatprep.subr.bf16.mxu0 0
        %3120 = vmatpush1.bf16.msra.mxu0 0
        %3121 = vmatprep.subr.bf16.mxu0 0
        %3122 = vmatpush1.bf16.msra.mxu0 0
        %3123 = vmatprep.subr.bf16.mxu0 0
        %3124 = vmatpush1.bf16.msra.mxu0 0
        %3125 = vmatprep.subr.bf16.mxu0 0
        %3126 = vmatpush1.bf16.msra.mxu0 0
        %3127 = vmatprep.subr.bf16.mxu0 0
        %3128 = vmatpush1.bf16.msra.mxu0 0
        %3129 = vmatprep.subr.bf16.mxu0 0
        %3130 = vmatpush1.bf16.msra.mxu0 0
        %3131 = vmatprep.subr.bf16.mxu0 0
        %3132 = vmatpush1.bf16.msra.mxu0 0
        %3133 = vmatprep.subr.bf16.mxu0 0
        %3134 = vmatpush1.bf16.msra.mxu0 0
        %3135 = vmatprep.subr.bf16.mxu0 0
        %3136 = vmatpush1.bf16.msra.mxu0 0
        %3137 = vmatprep.subr.bf16.mxu0 0
        %3138 = vmatpush1.bf16.msra.mxu0 0
        %3139 = vmatprep.subr.bf16.mxu0 0
        %3140 = vmatpush1.bf16.msra.mxu0 0
        %3141 = vmatprep.mubr.bf16.mxu0 0
        %3142 = vmatmul.mubr.bf16.gmra.mrb[0].mxu0 %v3104
        %v3143 = vpop.f32.mrb[0].mxu0
        %v3144 = vadd.f32 0.0, %v3143
        %v3145 = vpop.f32.mrb[0].mxu0
        %v3146 = vpop.f32.mrb[0].mxu0
        %v3147 = vpop.f32.mrb[0].mxu0
        %3148 = vdwg.mxu0
        %v3150 = vsel %vm1210, %v3055, 0
        %v3153 = vsel %vm1450, %v1919, 0
        %3155 = vmatprep.subr.bf16.mxu0 0
        %3156 = vmatpush1.bf16.msra.mxu0 %v3153
        %3157 = vmatprep.subr.bf16.mxu0 0
        %3158 = vmatpush1.bf16.msra.mxu0 0
        %3159 = vmatprep.subr.bf16.mxu0 0
        %3160 = vmatpush1.bf16.msra.mxu0 0
        %3161 = vmatprep.subr.bf16.mxu0 0
        %3162 = vmatpush1.bf16.msra.mxu0 0
        %3163 = vmatprep.subr.bf16.mxu0 0
        %3164 = vmatpush1.bf16.msra.mxu0 0
        %3165 = vmatprep.subr.bf16.mxu0 0
        %3166 = vmatpush1.bf16.msra.mxu0 0
        %3167 = vmatprep.subr.bf16.mxu0 0
        %3168 = vmatpush1.bf16.msra.mxu0 0
        %3169 = vmatprep.subr.bf16.mxu0 0
        %3170 = vmatpush1.bf16.msra.mxu0 0
        %3171 = vmatprep.subr.bf16.mxu0 0
        %3172 = vmatpush1.bf16.msra.mxu0 0
        %3173 = vmatprep.subr.bf16.mxu0 0
        %3174 = vmatpush1.bf16.msra.mxu0 0
        %3175 = vmatprep.subr.bf16.mxu0 0
        %3176 = vmatpush1.bf16.msra.mxu0 0
        %3177 = vmatprep.subr.bf16.mxu0 0
        %3178 = vmatpush1.bf16.msra.mxu0 0
        %3179 = vmatprep.subr.bf16.mxu0 0
        %3180 = vmatpush1.bf16.msra.mxu0 0
        %3181 = vmatprep.subr.bf16.mxu0 0
        %3182 = vmatpush1.bf16.msra.mxu0 0
        %3183 = vmatprep.subr.bf16.mxu0 0
        %3184 = vmatpush1.bf16.msra.mxu0 0
        %3185 = vmatprep.subr.bf16.mxu0 0
        %3186 = vmatpush1.bf16.msra.mxu0 0
        %3187 = vmatprep.mubr.bf16.mxu0 0
        %3188 = vmatmul.mubr.bf16.gmra.mrb[0].mxu0 %v3150
        %v3189 = vpop.f32.mrb[0].mxu0
        %v3190 = vadd.f32 0.0, %v3189
        %v3191 = vpop.f32.mrb[0].mxu0
        %v3192 = vpop.f32.mrb[0].mxu0
        %v3193 = vpop.f32.mrb[0].mxu0
        %3194 = vdwg.mxu0
        %v3196 = vsel %vm1210, %v3056, 0
        %v3199 = vsel %vm1450, %v1920, 0
        %3201 = vmatprep.subr.bf16.mxu0 0
        %3202 = vmatpush1.bf16.msra.mxu0 %v3199
        %3203 = vmatprep.subr.bf16.mxu0 0
        %3204 = vmatpush1.bf16.msra.mxu0 0
        %3205 = vmatprep.subr.bf16.mxu0 0
        %3206 = vmatpush1.bf16.msra.mxu0 0
        %3207 = vmatprep.subr.bf16.mxu0 0
        %3208 = vmatpush1.bf16.msra.mxu0 0
        %3209 = vmatprep.subr.bf16.mxu0 0
        %3210 = vmatpush1.bf16.msra.mxu0 0
        %3211 = vmatprep.subr.bf16.mxu0 0
        %3212 = vmatpush1.bf16.msra.mxu0 0
        %3213 = vmatprep.subr.bf16.mxu0 0
        %3214 = vmatpush1.bf16.msra.mxu0 0
        %3215 = vmatprep.subr.bf16.mxu0 0
        %3216 = vmatpush1.bf16.msra.mxu0 0
        %3217 = vmatprep.subr.bf16.mxu0 0
        %3218 = vmatpush1.bf16.msra.mxu0 0
        %3219 = vmatprep.subr.bf16.mxu0 0
        %3220 = vmatpush1.bf16.msra.mxu0 0
        %3221 = vmatprep.subr.bf16.mxu0 0
        %3222 = vmatpush1.bf16.msra.mxu0 0
        %3223 = vmatprep.subr.bf16.mxu0 0
        %3224 = vmatpush1.bf16.msra.mxu0 0
        %3225 = vmatprep.subr.bf16.mxu0 0
        %3226 = vmatpush1.bf16.msra.mxu0 0
        %3227 = vmatprep.subr.bf16.mxu0 0
        %3228 = vmatpush1.bf16.msra.mxu0 0
        %3229 = vmatprep.subr.bf16.mxu0 0
        %3230 = vmatpush1.bf16.msra.mxu0 0
        %3231 = vmatprep.subr.bf16.mxu0 0
        %3232 = vmatpush1.bf16.msra.mxu0 0
        %3233 = vmatprep.mubr.bf16.mxu0 0
        %3234 = vmatmul.mubr.bf16.gmra.mrb[0].mxu0 %v3196
        %v3235 = vpop.f32.mrb[0].mxu0
        %v3236 = vadd.f32 0.0, %v3235
        %v3237 = vpop.f32.mrb[0].mxu0
        %v3238 = vpop.f32.mrb[0].mxu0
        %v3239 = vpop.f32.mrb[0].mxu0
        %3240 = vdwg.mxu0
        %v3241 = vsel %vm538, %v3098, 0.0
        %v3242 = vsel %vm538, %v3144, 0.0
        %v3243 = vadd.f32 %v3241, %v3242
        %v3244 = vsel %vm538, %v3190, 0.0
        %v3245 = vadd.f32 %v3243, %v3244
        %v3246 = vsel %vm538, %v3236, 0.0
        %v3247 = vadd.f32 %v3245, %v3246
        %v3248 = vlaneseq
        %v3249 = vshrl.u32 %v3248, 7
        %v3250 = vsub.s32 3, %v3249
        %v3251 = vrot.slane %v429, %v3250
        %v3252 = vadd.f32 %v3247, %v3251
        %v3253 = vadd.f32 %v3252, %v1856
        %v3254 = vsel %vm538, %v3253, 0.0
        %3255 = vadd.xlane.f32.xlu0 %v3254
        %v3256 = vpop.xlane.xlu0 %3255
        %v3257 = vmul.f32 %v3256, %v1836
        %v3258 = vsub.f32 %v3253, %v3257
        %v3259 = vmul.f32 %v3258, %v3258
        %v3260 = vsel %vm538, %v3259, 0.0
        %3261 = vadd.xlane.f32.xlu0 %v3260
        %v3262 = vpop.xlane.xlu0 %3261
        %v3263 = vmul.f32 %v3262, %v1836
        %v3264 = vadd.f32 %v3263, 1e-05
        %v3265 = vrsqrt.pop %v3264
        %v3266 = vmul.f32 %v3258, %v3265
        %v3267 = vlaneseq
        %v3268 = vshrl.u32 %v3267, 7
        %v3269 = vsub.s32 4, %v3268
        %v3270 = vrot.slane %v429, %v3269
        %v3271 = vmul.f32 %v3266, %v3270
        %v3272 = vlaneseq
        %v3273 = vshrl.u32 %v3272, 7
        %v3274 = vsub.s32 5, %v3273
        %v3275 = vrot.slane %v429, %v3274
        %v3276 = vadd.f32 %v3271, %v3275
        %v3277 = vpack.c.bf16 %v3276, %v3276
        %v3278 = vld [vmem:[%s8] sm:$0xff]
        %v3279 = vld [vmem:[%s8 + $0x8] sm:$0xff]
        %v3280 = vld [vmem:[%s8 + $0x10] sm:$0xff]
        %v3281 = vld [vmem:[%s8 + $0x18] sm:$0xff]
        %v3282 = vld [vmem:[%s8 + $0x20] sm:$0xff]
        %v3283 = vld [vmem:[%s8 + $0x28] sm:$0xff]
        %v3284 = vld [vmem:[%s8 + $0x30] sm:$0xff]
        %v3285 = vld [vmem:[%s8 + $0x38] sm:$0xff]
        %v3286 = vld [vmem:[%s8 + $0x40] sm:$0xff]
        %v3287 = vld [vmem:[%s8 + $0x48] sm:$0xff]
        %v3288 = vld [vmem:[%s8 + $0x50] sm:$0xff]
        %v3289 = vld [vmem:[%s8 + $0x58] sm:$0xff]
        %v3290 = vld [vmem:[%s8 + $0x60] sm:$0xff]
        %v3291 = vld [vmem:[%s8 + $0x68] sm:$0xff]
        %v3292 = vld [vmem:[%s8 + $0x70] sm:$0xff]
        %v3293 = vld [vmem:[%s8 + $0x78] sm:$0xff]
        %v3294 = vld [vmem:[%s8 + $0x80] sm:$0xff]
        %v3295 = vld [vmem:[%s8 + $0x88] sm:$0xff]
        %v3296 = vld [vmem:[%s8 + $0x90] sm:$0xff]
        %v3297 = vld [vmem:[%s8 + $0x98] sm:$0xff]
        %v3298 = vld [vmem:[%s8 + $0xa0] sm:$0xff]
        %v3299 = vld [vmem:[%s8 + $0xa8] sm:$0xff]
        %v3300 = vld [vmem:[%s8 + $0xb0] sm:$0xff]
        %v3301 = vld [vmem:[%s8 + $0xb8] sm:$0xff]
        %v3302 = vld [vmem:[%s8 + $0xc0] sm:$0xff]
        %v3303 = vld [vmem:[%s8 + $0xc8] sm:$0xff]
        %v3304 = vld [vmem:[%s8 + $0xd0] sm:$0xff]
        %v3305 = vld [vmem:[%s8 + $0xd8] sm:$0xff]
        %v3306 = vld [vmem:[%s8 + $0xe0] sm:$0xff]
        %v3307 = vld [vmem:[%s8 + $0xe8] sm:$0xff]
        %v3308 = vld [vmem:[%s8 + $0xf0] sm:$0xff]
        %v3309 = vld [vmem:[%s8 + $0xf8] sm:$0xff]
        %v3310 = vld [vmem:[%s9] sm:$0xff]
        %v3311 = vld [vmem:[%s9 + $0x8] sm:$0xff]
        %v3314 = vlaneseq
        %v3315 = vshrl.u32 %v3314, 7
        %v3316 = vsub.s32 0, %v3315
        %v3317 = vrot.slane %v3310, %v3316
        %v3318 = vlaneseq
        %v3319 = vshrl.u32 %v3318, 7
        %v3320 = vsub.s32 1, %v3319
        %v3321 = vrot.slane %v3310, %v3320
        %v3322 = vlaneseq
        %v3323 = vshrl.u32 %v3322, 7
        %v3324 = vsub.s32 2, %v3323
        %v3325 = vrot.slane %v3310, %v3324
        %v3326 = vlaneseq
        %v3327 = vshrl.u32 %v3326, 7
        %v3328 = vsub.s32 3, %v3327
        %v3329 = vrot.slane %v3310, %v3328
        %v3330 = vlaneseq
        %v3331 = vshrl.u32 %v3330, 7
        %v3332 = vsub.s32 4, %v3331
        %v3333 = vrot.slane %v3310, %v3332
        %v3334 = vlaneseq
        %v3335 = vshrl.u32 %v3334, 7
        %v3336 = vsub.s32 5, %v3335
        %v3337 = vrot.slane %v3310, %v3336
        %v3338 = vlaneseq
        %v3339 = vshrl.u32 %v3338, 7
        %v3340 = vsub.s32 6, %v3339
        %v3341 = vrot.slane %v3310, %v3340
        %v3342 = vlaneseq
        %v3343 = vshrl.u32 %v3342, 7
        %v3344 = vsub.s32 7, %v3343
        %v3345 = vrot.slane %v3310, %v3344
        %v3346 = vlaneseq
        %v3347 = vshrl.u32 %v3346, 7
        %v3348 = vsub.s32 0, %v3347
        %v3349 = vrot.slane %v3311, %v3348
        %v3350 = vlaneseq
        %v3351 = vshrl.u32 %v3350, 7
        %v3352 = vsub.s32 1, %v3351
        %v3353 = vrot.slane %v3311, %v3352
        %v3354 = vlaneseq
        %v3355 = vshrl.u32 %v3354, 7
        %v3356 = vsub.s32 2, %v3355
        %v3357 = vrot.slane %v3311, %v3356
        %v3358 = vlaneseq
        %v3359 = vshrl.u32 %v3358, 7
        %v3360 = vsub.s32 3, %v3359
        %v3361 = vrot.slane %v3311, %v3360
        %v3362 = vlaneseq
        %v3363 = vshrl.u32 %v3362, 7
        %v3364 = vsub.s32 4, %v3363
        %v3365 = vrot.slane %v3311, %v3364
        %v3366 = vlaneseq
        %v3367 = vshrl.u32 %v3366, 7
        %v3368 = vsub.s32 5, %v3367
        %v3369 = vrot.slane %v3311, %v3368
        %v3370 = vlaneseq
        %v3371 = vshrl.u32 %v3370, 7
        %v3372 = vsub.s32 6, %v3371
        %v3373 = vrot.slane %v3311, %v3372
        %v3374 = vlaneseq
        %v3375 = vshrl.u32 %v3374, 7
        %v3376 = vsub.s32 7, %v3375
        %v3377 = vrot.slane %v3311, %v3376
        %v3426 = vunpack.c.l.b16 %v3278
        %v3427 = vunpack.c.h.b16 %v3278
        %v3428 = vunpack.c.l.b16 %v3279
        %v3429 = vunpack.c.h.b16 %v3279
        %v3430 = vunpack.c.l.b16 %v3280
        %v3431 = vunpack.c.h.b16 %v3280
        %v3432 = vunpack.c.l.b16 %v3281
        %v3433 = vunpack.c.h.b16 %v3281
        %v3434 = vunpack.c.l.b16 %v3282
        %v3435 = vunpack.c.h.b16 %v3282
        %v3436 = vunpack.c.l.b16 %v3283
        %v3437 = vunpack.c.h.b16 %v3283
        %v3438 = vunpack.c.l.b16 %v3284
        %v3439 = vunpack.c.h.b16 %v3284
        %v3440 = vunpack.c.l.b16 %v3285
        %v3441 = vunpack.c.h.b16 %v3285
        %v3442 = vunpack.c.l.b16 %v3286
        %v3443 = vunpack.c.h.b16 %v3286
        %v3444 = vunpack.c.l.b16 %v3287
        %v3445 = vunpack.c.h.b16 %v3287
        %v3446 = vunpack.c.l.b16 %v3288
        %v3447 = vunpack.c.h.b16 %v3288
        %v3448 = vunpack.c.l.b16 %v3289
        %v3449 = vunpack.c.h.b16 %v3289
        %v3450 = vunpack.c.l.b16 %v3290
        %v3451 = vunpack.c.h.b16 %v3290
        %v3452 = vunpack.c.l.b16 %v3291
        %v3453 = vunpack.c.h.b16 %v3291
        %v3454 = vunpack.c.l.b16 %v3292
        %v3455 = vunpack.c.h.b16 %v3292
        %v3456 = vunpack.c.l.b16 %v3293
        %v3457 = vunpack.c.h.b16 %v3293
        %v3458 = vunpack.c.l.b16 %v3294
        %v3459 = vunpack.c.h.b16 %v3294
        %v3460 = vunpack.c.l.b16 %v3295
        %v3461 = vunpack.c.h.b16 %v3295
        %v3462 = vunpack.c.l.b16 %v3296
        %v3463 = vunpack.c.h.b16 %v3296
        %v3464 = vunpack.c.l.b16 %v3297
        %v3465 = vunpack.c.h.b16 %v3297
        %v3466 = vunpack.c.l.b16 %v3298
        %v3467 = vunpack.c.h.b16 %v3298
        %v3468 = vunpack.c.l.b16 %v3299
        %v3469 = vunpack.c.h.b16 %v3299
        %v3470 = vunpack.c.l.b16 %v3300
        %v3471 = vunpack.c.h.b16 %v3300
        %v3472 = vunpack.c.l.b16 %v3301
        %v3473 = vunpack.c.h.b16 %v3301
        %v3474 = vunpack.c.l.b16 %v3302
        %v3475 = vunpack.c.h.b16 %v3302
        %v3476 = vunpack.c.l.b16 %v3303
        %v3477 = vunpack.c.h.b16 %v3303
        %v3478 = vunpack.c.l.b16 %v3304
        %v3479 = vunpack.c.h.b16 %v3304
        %v3480 = vunpack.c.l.b16 %v3305
        %v3481 = vunpack.c.h.b16 %v3305
        %v3482 = vunpack.c.l.b16 %v3306
        %v3483 = vunpack.c.h.b16 %v3306
        %v3484 = vunpack.c.l.b16 %v3307
        %v3485 = vunpack.c.h.b16 %v3307
        %v3486 = vunpack.c.l.b16 %v3308
        %v3487 = vunpack.c.h.b16 %v3308
        %v3488 = vunpack.c.l.b16 %v3309
        %v3489 = vunpack.c.h.b16 %v3309
        %v3490 = vpack.c.b16 %v3442, %v3426
        %v3491 = vpack.c.b16 %v3443, %v3427
        %v3492 = vpack.c.b16 %v3444, %v3428
        %v3493 = vpack.c.b16 %v3445, %v3429
        %v3494 = vpack.c.b16 %v3446, %v3430
        %v3495 = vpack.c.b16 %v3447, %v3431
        %v3496 = vpack.c.b16 %v3448, %v3432
        %v3497 = vpack.c.b16 %v3449, %v3433
        %v3498 = vpack.c.b16 %v3450, %v3434
        %v3499 = vpack.c.b16 %v3451, %v3435
        %v3500 = vpack.c.b16 %v3452, %v3436
        %v3501 = vpack.c.b16 %v3453, %v3437
        %v3502 = vpack.c.b16 %v3454, %v3438
        %v3503 = vpack.c.b16 %v3455, %v3439
        %v3504 = vpack.c.b16 %v3456, %v3440
        %v3505 = vpack.c.b16 %v3457, %v3441
        %v3506 = vpack.c.b16 %v3474, %v3458
        %v3507 = vpack.c.b16 %v3475, %v3459
        %v3508 = vpack.c.b16 %v3476, %v3460
        %v3509 = vpack.c.b16 %v3477, %v3461
        %v3510 = vpack.c.b16 %v3478, %v3462
        %v3511 = vpack.c.b16 %v3479, %v3463
        %v3512 = vpack.c.b16 %v3480, %v3464
        %v3513 = vpack.c.b16 %v3481, %v3465
        %v3514 = vpack.c.b16 %v3482, %v3466
        %v3515 = vpack.c.b16 %v3483, %v3467
        %v3516 = vpack.c.b16 %v3484, %v3468
        %v3517 = vpack.c.b16 %v3485, %v3469
        %v3518 = vpack.c.b16 %v3486, %v3470
        %v3519 = vpack.c.b16 %v3487, %v3471
        %v3520 = vpack.c.b16 %v3488, %v3472
        %v3521 = vpack.c.b16 %v3489, %v3473
        %v3555 = vsel %vm538, %v3277, 0
        %3557 = vmatprep.subr.bf16.mxu0 %v3491
        %3558 = vmatpush1.bf16.msra.mxu0 %v3490
        %3559 = vmatprep.subr.bf16.mxu0 %v3507
        %3560 = vmatpush1.bf16.msra.mxu0 %v3506
        %3561 = vmatprep.subr.bf16.mxu0 0
        %3562 = vmatpush1.bf16.msra.mxu0 0
        %3563 = vmatprep.subr.bf16.mxu0 0
        %3564 = vmatpush1.bf16.msra.mxu0 0
        %3565 = vmatprep.subr.bf16.mxu0 0
        %3566 = vmatpush1.bf16.msra.mxu0 0
        %3567 = vmatprep.subr.bf16.mxu0 0
        %3568 = vmatpush1.bf16.msra.mxu0 0
        %3569 = vmatprep.subr.bf16.mxu0 0
        %3570 = vmatpush1.bf16.msra.mxu0 0
        %3571 = vmatprep.subr.bf16.mxu0 0
        %3572 = vmatpush1.bf16.msra.mxu0 0
        %3573 = vmatprep.subr.bf16.mxu0 0
        %3574 = vmatpush1.bf16.msra.mxu0 0
        %3575 = vmatprep.subr.bf16.mxu0 0
        %3576 = vmatpush1.bf16.msra.mxu0 0
        %3577 = vmatprep.subr.bf16.mxu0 0
        %3578 = vmatpush1.bf16.msra.mxu0 0
        %3579 = vmatprep.subr.bf16.mxu0 0
        %3580 = vmatpush1.bf16.msra.mxu0 0
        %3581 = vmatprep.subr.bf16.mxu0 0
        %3582 = vmatpush1.bf16.msra.mxu0 0
        %3583 = vmatprep.subr.bf16.mxu0 0
        %3584 = vmatpush1.bf16.msra.mxu0 0
        %3585 = vmatprep.subr.bf16.mxu0 0
        %3586 = vmatpush1.bf16.msra.mxu0 0
        %3587 = vmatprep.subr.bf16.mxu0 0
        %3588 = vmatpush1.bf16.msra.mxu0 0
        %3589 = vmatprep.mubr.bf16.mxu0 0
        %3590 = vmatmul.mubr.bf16.gmra.mrb[0].mxu0 %v3555
        %v3591 = vpop.f32.mrb[0].mxu0
        %v3592 = vadd.f32 %v3317, %v3591
        %v3593 = vpop.f32.mrb[0].mxu0
        %v3594 = vadd.f32 %v3321, %v3593
        %v3595 = vpop.f32.mrb[0].mxu0
        %v3596 = vpop.f32.mrb[0].mxu0
        %3597 = vdwg.mxu0
        %3598 = vmatprep.subr.bf16.mxu0 %v3493
        %3599 = vmatpush1.bf16.msra.mxu0 %v3492
        %3600 = vmatprep.subr.bf16.mxu0 %v3509
        %3601 = vmatpush1.bf16.msra.mxu0 %v3508
        %3602 = vmatprep.subr.bf16.mxu0 0
        %3603 = vmatpush1.bf16.msra.mxu0 0
        %3604 = vmatprep.subr.bf16.mxu0 0
        %3605 = vmatpush1.bf16.msra.mxu0 0
        %3606 = vmatprep.subr.bf16.mxu0 0
        %3607 = vmatpush1.bf16.msra.mxu0 0
        %3608 = vmatprep.subr.bf16.mxu0 0
        %3609 = vmatpush1.bf16.msra.mxu0 0
        %3610 = vmatprep.subr.bf16.mxu0 0
        %3611 = vmatpush1.bf16.msra.mxu0 0
        %3612 = vmatprep.subr.bf16.mxu0 0
        %3613 = vmatpush1.bf16.msra.mxu0 0
        %3614 = vmatprep.subr.bf16.mxu0 0
        %3615 = vmatpush1.bf16.msra.mxu0 0
        %3616 = vmatprep.subr.bf16.mxu0 0
        %3617 = vmatpush1.bf16.msra.mxu0 0
        %3618 = vmatprep.subr.bf16.mxu0 0
        %3619 = vmatpush1.bf16.msra.mxu0 0
        %3620 = vmatprep.subr.bf16.mxu0 0
        %3621 = vmatpush1.bf16.msra.mxu0 0
        %3622 = vmatprep.subr.bf16.mxu0 0
        %3623 = vmatpush1.bf16.msra.mxu0 0
        %3624 = vmatprep.subr.bf16.mxu0 0
        %3625 = vmatpush1.bf16.msra.mxu0 0
        %3626 = vmatprep.subr.bf16.mxu0 0
        %3627 = vmatpush1.bf16.msra.mxu0 0
        %3628 = vmatprep.subr.bf16.mxu0 0
        %3629 = vmatpush1.bf16.msra.mxu0 0
        %3630 = vmatprep.mubr.bf16.mxu0 0
        %3631 = vmatmul.mubr.bf16.gmra.mrb[0].mxu0 %v3555
        %v3632 = vpop.f32.mrb[0].mxu0
        %v3633 = vadd.f32 %v3325, %v3632
        %v3634 = vpop.f32.mrb[0].mxu0
        %v3635 = vadd.f32 %v3329, %v3634
        %v3636 = vpop.f32.mrb[0].mxu0
        %v3637 = vpop.f32.mrb[0].mxu0
        %3638 = vdwg.mxu0
        %3639 = vmatprep.subr.bf16.mxu0 %v3495
        %3640 = vmatpush1.bf16.msra.mxu0 %v3494
        %3641 = vmatprep.subr.bf16.mxu0 %v3511
        %3642 = vmatpush1.bf16.msra.mxu0 %v3510
        %3643 = vmatprep.subr.bf16.mxu0 0
        %3644 = vmatpush1.bf16.msra.mxu0 0
        %3645 = vmatprep.subr.bf16.mxu0 0
        %3646 = vmatpush1.bf16.msra.mxu0 0
        %3647 = vmatprep.subr.bf16.mxu0 0
        %3648 = vmatpush1.bf16.msra.mxu0 0
        %3649 = vmatprep.subr.bf16.mxu0 0
        %3650 = vmatpush1.bf16.msra.mxu0 0
        %3651 = vmatprep.subr.bf16.mxu0 0
        %3652 = vmatpush1.bf16.msra.mxu0 0
        %3653 = vmatprep.subr.bf16.mxu0 0
        %3654 = vmatpush1.bf16.msra.mxu0 0
        %3655 = vmatprep.subr.bf16.mxu0 0
        %3656 = vmatpush1.bf16.msra.mxu0 0
        %3657 = vmatprep.subr.bf16.mxu0 0
        %3658 = vmatpush1.bf16.msra.mxu0 0
        %3659 = vmatprep.subr.bf16.mxu0 0
        %3660 = vmatpush1.bf16.msra.mxu0 0
        %3661 = vmatprep.subr.bf16.mxu0 0
        %3662 = vmatpush1.bf16.msra.mxu0 0
        %3663 = vmatprep.subr.bf16.mxu0 0
        %3664 = vmatpush1.bf16.msra.mxu0 0
        %3665 = vmatprep.subr.bf16.mxu0 0
        %3666 = vmatpush1.bf16.msra.mxu0 0
        %3667 = vmatprep.subr.bf16.mxu0 0
        %3668 = vmatpush1.bf16.msra.mxu0 0
        %3669 = vmatprep.subr.bf16.mxu0 0
        %3670 = vmatpush1.bf16.msra.mxu0 0
        %3671 = vmatprep.mubr.bf16.mxu0 0
        %3672 = vmatmul.mubr.bf16.gmra.mrb[0].mxu0 %v3555
        %v3673 = vpop.f32.mrb[0].mxu0
        %v3674 = vadd.f32 %v3333, %v3673
        %v3675 = vpop.f32.mrb[0].mxu0
        %v3676 = vadd.f32 %v3337, %v3675
        %v3677 = vpop.f32.mrb[0].mxu0
        %v3678 = vpop.f32.mrb[0].mxu0
        %3679 = vdwg.mxu0
        %3680 = vmatprep.subr.bf16.mxu0 %v3497
        %3681 = vmatpush1.bf16.msra.mxu0 %v3496
        %3682 = vmatprep.subr.bf16.mxu0 %v3513
        %3683 = vmatpush1.bf16.msra.mxu0 %v3512
        %3684 = vmatprep.subr.bf16.mxu0 0
        %3685 = vmatpush1.bf16.msra.mxu0 0
        %3686 = vmatprep.subr.bf16.mxu0 0
        %3687 = vmatpush1.bf16.msra.mxu0 0
        %3688 = vmatprep.subr.bf16.mxu0 0
        %3689 = vmatpush1.bf16.msra.mxu0 0
        %3690 = vmatprep.subr.bf16.mxu0 0
        %3691 = vmatpush1.bf16.msra.mxu0 0
        %3692 = vmatprep.subr.bf16.mxu0 0
        %3693 = vmatpush1.bf16.msra.mxu0 0
        %3694 = vmatprep.subr.bf16.mxu0 0
        %3695 = vmatpush1.bf16.msra.mxu0 0
        %3696 = vmatprep.subr.bf16.mxu0 0
        %3697 = vmatpush1.bf16.msra.mxu0 0
        %3698 = vmatprep.subr.bf16.mxu0 0
        %3699 = vmatpush1.bf16.msra.mxu0 0
        %3700 = vmatprep.subr.bf16.mxu0 0
        %3701 = vmatpush1.bf16.msra.mxu0 0
        %3702 = vmatprep.subr.bf16.mxu0 0
        %3703 = vmatpush1.bf16.msra.mxu0 0
        %3704 = vmatprep.subr.bf16.mxu0 0
        %3705 = vmatpush1.bf16.msra.mxu0 0
        %3706 = vmatprep.subr.bf16.mxu0 0
        %3707 = vmatpush1.bf16.msra.mxu0 0
        %3708 = vmatprep.subr.bf16.mxu0 0
        %3709 = vmatpush1.bf16.msra.mxu0 0
        %3710 = vmatprep.subr.bf16.mxu0 0
        %3711 = vmatpush1.bf16.msra.mxu0 0
        %3712 = vmatprep.mubr.bf16.mxu0 0
        %3713 = vmatmul.mubr.bf16.gmra.mrb[0].mxu0 %v3555
        %v3714 = vpop.f32.mrb[0].mxu0
        %v3715 = vadd.f32 %v3341, %v3714
        %v3716 = vpop.f32.mrb[0].mxu0
        %v3717 = vadd.f32 %v3345, %v3716
        %v3718 = vpop.f32.mrb[0].mxu0
        %v3719 = vpop.f32.mrb[0].mxu0
        %3720 = vdwg.mxu0
        %3721 = vmatprep.subr.bf16.mxu0 %v3499
        %3722 = vmatpush1.bf16.msra.mxu0 %v3498
        %3723 = vmatprep.subr.bf16.mxu0 %v3515
        %3724 = vmatpush1.bf16.msra.mxu0 %v3514
        %3725 = vmatprep.subr.bf16.mxu0 0
        %3726 = vmatpush1.bf16.msra.mxu0 0
        %3727 = vmatprep.subr.bf16.mxu0 0
        %3728 = vmatpush1.bf16.msra.mxu0 0
        %3729 = vmatprep.subr.bf16.mxu0 0
        %3730 = vmatpush1.bf16.msra.mxu0 0
        %3731 = vmatprep.subr.bf16.mxu0 0
        %3732 = vmatpush1.bf16.msra.mxu0 0
        %3733 = vmatprep.subr.bf16.mxu0 0
        %3734 = vmatpush1.bf16.msra.mxu0 0
        %3735 = vmatprep.subr.bf16.mxu0 0
        %3736 = vmatpush1.bf16.msra.mxu0 0
        %3737 = vmatprep.subr.bf16.mxu0 0
        %3738 = vmatpush1.bf16.msra.mxu0 0
        %3739 = vmatprep.subr.bf16.mxu0 0
        %3740 = vmatpush1.bf16.msra.mxu0 0
        %3741 = vmatprep.subr.bf16.mxu0 0
        %3742 = vmatpush1.bf16.msra.mxu0 0
        %3743 = vmatprep.subr.bf16.mxu0 0
        %3744 = vmatpush1.bf16.msra.mxu0 0
        %3745 = vmatprep.subr.bf16.mxu0 0
        %3746 = vmatpush1.bf16.msra.mxu0 0
        %3747 = vmatprep.subr.bf16.mxu0 0
        %3748 = vmatpush1.bf16.msra.mxu0 0
        %3749 = vmatprep.subr.bf16.mxu0 0
        %3750 = vmatpush1.bf16.msra.mxu0 0
        %3751 = vmatprep.subr.bf16.mxu0 0
        %3752 = vmatpush1.bf16.msra.mxu0 0
        %3753 = vmatprep.mubr.bf16.mxu0 0
        %3754 = vmatmul.mubr.bf16.gmra.mrb[0].mxu0 %v3555
        %v3755 = vpop.f32.mrb[0].mxu0
        %v3756 = vadd.f32 %v3349, %v3755
        %v3757 = vpop.f32.mrb[0].mxu0
        %v3758 = vadd.f32 %v3353, %v3757
        %v3759 = vpop.f32.mrb[0].mxu0
        %v3760 = vpop.f32.mrb[0].mxu0
        %3761 = vdwg.mxu0
        %3762 = vmatprep.subr.bf16.mxu0 %v3501
        %3763 = vmatpush1.bf16.msra.mxu0 %v3500
        %3764 = vmatprep.subr.bf16.mxu0 %v3517
        %3765 = vmatpush1.bf16.msra.mxu0 %v3516
        %3766 = vmatprep.subr.bf16.mxu0 0
        %3767 = vmatpush1.bf16.msra.mxu0 0
        %3768 = vmatprep.subr.bf16.mxu0 0
        %3769 = vmatpush1.bf16.msra.mxu0 0
        %3770 = vmatprep.subr.bf16.mxu0 0
        %3771 = vmatpush1.bf16.msra.mxu0 0
        %3772 = vmatprep.subr.bf16.mxu0 0
        %3773 = vmatpush1.bf16.msra.mxu0 0
        %3774 = vmatprep.subr.bf16.mxu0 0
        %3775 = vmatpush1.bf16.msra.mxu0 0
        %3776 = vmatprep.subr.bf16.mxu0 0
        %3777 = vmatpush1.bf16.msra.mxu0 0
        %3778 = vmatprep.subr.bf16.mxu0 0
        %3779 = vmatpush1.bf16.msra.mxu0 0
        %3780 = vmatprep.subr.bf16.mxu0 0
        %3781 = vmatpush1.bf16.msra.mxu0 0
        %3782 = vmatprep.subr.bf16.mxu0 0
        %3783 = vmatpush1.bf16.msra.mxu0 0
        %3784 = vmatprep.subr.bf16.mxu0 0
        %3785 = vmatpush1.bf16.msra.mxu0 0
        %3786 = vmatprep.subr.bf16.mxu0 0
        %3787 = vmatpush1.bf16.msra.mxu0 0
        %3788 = vmatprep.subr.bf16.mxu0 0
        %3789 = vmatpush1.bf16.msra.mxu0 0
        %3790 = vmatprep.subr.bf16.mxu0 0
        %3791 = vmatpush1.bf16.msra.mxu0 0
        %3792 = vmatprep.subr.bf16.mxu0 0
        %3793 = vmatpush1.bf16.msra.mxu0 0
        %3794 = vmatprep.mubr.bf16.mxu0 0
        %3795 = vmatmul.mubr.bf16.gmra.mrb[0].mxu0 %v3555
        %v3796 = vpop.f32.mrb[0].mxu0
        %v3797 = vadd.f32 %v3357, %v3796
        %v3798 = vpop.f32.mrb[0].mxu0
        %v3799 = vadd.f32 %v3361, %v3798
        %v3800 = vpop.f32.mrb[0].mxu0
        %v3801 = vpop.f32.mrb[0].mxu0
        %3802 = vdwg.mxu0
        %3803 = vmatprep.subr.bf16.mxu0 %v3503
        %3804 = vmatpush1.bf16.msra.mxu0 %v3502
        %3805 = vmatprep.subr.bf16.mxu0 %v3519
        %3806 = vmatpush1.bf16.msra.mxu0 %v3518
        %3807 = vmatprep.subr.bf16.mxu0 0
        %3808 = vmatpush1.bf16.msra.mxu0 0
        %3809 = vmatprep.subr.bf16.mxu0 0
        %3810 = vmatpush1.bf16.msra.mxu0 0
        %3811 = vmatprep.subr.bf16.mxu0 0
        %3812 = vmatpush1.bf16.msra.mxu0 0
        %3813 = vmatprep.subr.bf16.mxu0 0
        %3814 = vmatpush1.bf16.msra.mxu0 0
        %3815 = vmatprep.subr.bf16.mxu0 0
        %3816 = vmatpush1.bf16.msra.mxu0 0
        %3817 = vmatprep.subr.bf16.mxu0 0
        %3818 = vmatpush1.bf16.msra.mxu0 0
        %3819 = vmatprep.subr.bf16.mxu0 0
        %3820 = vmatpush1.bf16.msra.mxu0 0
        %3821 = vmatprep.subr.bf16.mxu0 0
        %3822 = vmatpush1.bf16.msra.mxu0 0
        %3823 = vmatprep.subr.bf16.mxu0 0
        %3824 = vmatpush1.bf16.msra.mxu0 0
        %3825 = vmatprep.subr.bf16.mxu0 0
        %3826 = vmatpush1.bf16.msra.mxu0 0
        %3827 = vmatprep.subr.bf16.mxu0 0
        %3828 = vmatpush1.bf16.msra.mxu0 0
        %3829 = vmatprep.subr.bf16.mxu0 0
        %3830 = vmatpush1.bf16.msra.mxu0 0
        %3831 = vmatprep.subr.bf16.mxu0 0
        %3832 = vmatpush1.bf16.msra.mxu0 0
        %3833 = vmatprep.subr.bf16.mxu0 0
        %3834 = vmatpush1.bf16.msra.mxu0 0
        %3835 = vmatprep.mubr.bf16.mxu0 0
        %3836 = vmatmul.mubr.bf16.gmra.mrb[0].mxu0 %v3555
        %v3837 = vpop.f32.mrb[0].mxu0
        %v3838 = vadd.f32 %v3365, %v3837
        %v3839 = vpop.f32.mrb[0].mxu0
        %v3840 = vadd.f32 %v3369, %v3839
        %v3841 = vpop.f32.mrb[0].mxu0
        %v3842 = vpop.f32.mrb[0].mxu0
        %3843 = vdwg.mxu0
        %3844 = vmatprep.subr.bf16.mxu0 %v3505
        %3845 = vmatpush1.bf16.msra.mxu0 %v3504
        %3846 = vmatprep.subr.bf16.mxu0 %v3521
        %3847 = vmatpush1.bf16.msra.mxu0 %v3520
        %3848 = vmatprep.subr.bf16.mxu0 0
        %3849 = vmatpush1.bf16.msra.mxu0 0
        %3850 = vmatprep.subr.bf16.mxu0 0
        %3851 = vmatpush1.bf16.msra.mxu0 0
        %3852 = vmatprep.subr.bf16.mxu0 0
        %3853 = vmatpush1.bf16.msra.mxu0 0
        %3854 = vmatprep.subr.bf16.mxu0 0
        %3855 = vmatpush1.bf16.msra.mxu0 0
        %3856 = vmatprep.subr.bf16.mxu0 0
        %3857 = vmatpush1.bf16.msra.mxu0 0
        %3858 = vmatprep.subr.bf16.mxu0 0
        %3859 = vmatpush1.bf16.msra.mxu0 0
        %3860 = vmatprep.subr.bf16.mxu0 0
        %3861 = vmatpush1.bf16.msra.mxu0 0
        %3862 = vmatprep.subr.bf16.mxu0 0
        %3863 = vmatpush1.bf16.msra.mxu0 0
        %3864 = vmatprep.subr.bf16.mxu0 0
        %3865 = vmatpush1.bf16.msra.mxu0 0
        %3866 = vmatprep.subr.bf16.mxu0 0
        %3867 = vmatpush1.bf16.msra.mxu0 0
        %3868 = vmatprep.subr.bf16.mxu0 0
        %3869 = vmatpush1.bf16.msra.mxu0 0
        %3870 = vmatprep.subr.bf16.mxu0 0
        %3871 = vmatpush1.bf16.msra.mxu0 0
        %3872 = vmatprep.subr.bf16.mxu0 0
        %3873 = vmatpush1.bf16.msra.mxu0 0
        %3874 = vmatprep.subr.bf16.mxu0 0
        %3875 = vmatpush1.bf16.msra.mxu0 0
        %3876 = vmatprep.mubr.bf16.mxu0 0
        %3877 = vmatmul.mubr.bf16.gmra.mrb[0].mxu0 %v3555
        %v3878 = vpop.f32.mrb[0].mxu0
        %v3879 = vadd.f32 %v3373, %v3878
        %v3880 = vpop.f32.mrb[0].mxu0
        %v3881 = vadd.f32 %v3377, %v3880
        %v3882 = vpop.f32.mrb[0].mxu0
        %v3883 = vpop.f32.mrb[0].mxu0
        %3884 = vdwg.mxu0
        %v3885 = vmax.f32 %v3592, 0.0
        %v3886 = vmax.f32 %v3594, 0.0
        %v3887 = vmax.f32 %v3633, 0.0
        %v3888 = vmax.f32 %v3635, 0.0
        %v3889 = vmax.f32 %v3674, 0.0
        %v3890 = vmax.f32 %v3676, 0.0
        %v3891 = vmax.f32 %v3715, 0.0
        %v3892 = vmax.f32 %v3717, 0.0
        %v3893 = vmax.f32 %v3756, 0.0
        %v3894 = vmax.f32 %v3758, 0.0
        %v3895 = vmax.f32 %v3797, 0.0
        %v3896 = vmax.f32 %v3799, 0.0
        %v3897 = vmax.f32 %v3838, 0.0
        %v3898 = vmax.f32 %v3840, 0.0
        %v3899 = vmax.f32 %v3879, 0.0
        %v3900 = vmax.f32 %v3881, 0.0
        %v3901 = vpack.c.bf16 %v3885, %v3885
        %v3902 = vpack.c.bf16 %v3886, %v3886
        %v3903 = vpack.c.bf16 %v3887, %v3887
        %v3904 = vpack.c.bf16 %v3888, %v3888
        %v3905 = vpack.c.bf16 %v3889, %v3889
        %v3906 = vpack.c.bf16 %v3890, %v3890
        %v3907 = vpack.c.bf16 %v3891, %v3891
        %v3908 = vpack.c.bf16 %v3892, %v3892
        %v3909 = vpack.c.bf16 %v3893, %v3893
        %v3910 = vpack.c.bf16 %v3894, %v3894
        %v3911 = vpack.c.bf16 %v3895, %v3895
        %v3912 = vpack.c.bf16 %v3896, %v3896
        %v3913 = vpack.c.bf16 %v3897, %v3897
        %v3914 = vpack.c.bf16 %v3898, %v3898
        %v3915 = vpack.c.bf16 %v3899, %v3899
        %v3916 = vpack.c.bf16 %v3900, %v3900
        %v3917 = vld [vmem:[%s10] sm:$0xf]
        %v3918 = vld [vmem:[%s10 + $0x4] sm:$0xf]
        %v3919 = vld [vmem:[%s10 + $0x8] sm:$0xf]
        %v3920 = vld [vmem:[%s10 + $0xc] sm:$0xf]
        %v3921 = vld [vmem:[%s10 + $0x10] sm:$0xf]
        %v3922 = vld [vmem:[%s10 + $0x14] sm:$0xf]
        %v3923 = vld [vmem:[%s10 + $0x18] sm:$0xf]
        %v3924 = vld [vmem:[%s10 + $0x1c] sm:$0xf]
        %v3925 = vld [vmem:[%s10 + $0x20] sm:$0xf]
        %v3926 = vld [vmem:[%s10 + $0x24] sm:$0xf]
        %v3927 = vld [vmem:[%s10 + $0x28] sm:$0xf]
        %v3928 = vld [vmem:[%s10 + $0x2c] sm:$0xf]
        %v3929 = vld [vmem:[%s10 + $0x30] sm:$0xf]
        %v3930 = vld [vmem:[%s10 + $0x34] sm:$0xf]
        %v3931 = vld [vmem:[%s10 + $0x38] sm:$0xf]
        %v3932 = vld [vmem:[%s10 + $0x3c] sm:$0xf]
        %v3933 = vld [vmem:[%s10 + $0x40] sm:$0xf]
        %v3934 = vld [vmem:[%s10 + $0x44] sm:$0xf]
        %v3935 = vld [vmem:[%s10 + $0x48] sm:$0xf]
        %v3936 = vld [vmem:[%s10 + $0x4c] sm:$0xf]
        %v3937 = vld [vmem:[%s10 + $0x50] sm:$0xf]
        %v3938 = vld [vmem:[%s10 + $0x54] sm:$0xf]
        %v3939 = vld [vmem:[%s10 + $0x58] sm:$0xf]
        %v3940 = vld [vmem:[%s10 + $0x5c] sm:$0xf]
        %v3941 = vld [vmem:[%s10 + $0x60] sm:$0xf]
        %v3942 = vld [vmem:[%s10 + $0x64] sm:$0xf]
        %v3943 = vld [vmem:[%s10 + $0x68] sm:$0xf]
        %v3944 = vld [vmem:[%s10 + $0x6c] sm:$0xf]
        %v3945 = vld [vmem:[%s10 + $0x70] sm:$0xf]
        %v3946 = vld [vmem:[%s10 + $0x74] sm:$0xf]
        %v3947 = vld [vmem:[%s10 + $0x78] sm:$0xf]
        %v3948 = vld [vmem:[%s10 + $0x7c] sm:$0xf]
        %v3949 = vld [vmem:[%s10 + $0x80] sm:$0xf]
        %v3950 = vld [vmem:[%s10 + $0x84] sm:$0xf]
        %v3951 = vld [vmem:[%s10 + $0x88] sm:$0xf]
        %v3952 = vld [vmem:[%s10 + $0x8c] sm:$0xf]
        %v3953 = vld [vmem:[%s10 + $0x90] sm:$0xf]
        %v3954 = vld [vmem:[%s10 + $0x94] sm:$0xf]
        %v3955 = vld [vmem:[%s10 + $0x98] sm:$0xf]
        %v3956 = vld [vmem:[%s10 + $0x9c] sm:$0xf]
        %v3957 = vld [vmem:[%s10 + $0xa0] sm:$0xf]
        %v3958 = vld [vmem:[%s10 + $0xa4] sm:$0xf]
        %v3959 = vld [vmem:[%s10 + $0xa8] sm:$0xf]
        %v3960 = vld [vmem:[%s10 + $0xac] sm:$0xf]
        %v3961 = vld [vmem:[%s10 + $0xb0] sm:$0xf]
        %v3962 = vld [vmem:[%s10 + $0xb4] sm:$0xf]
        %v3963 = vld [vmem:[%s10 + $0xb8] sm:$0xf]
        %v3964 = vld [vmem:[%s10 + $0xbc] sm:$0xf]
        %v3965 = vld [vmem:[%s10 + $0xc0] sm:$0xf]
        %v3966 = vld [vmem:[%s10 + $0xc4] sm:$0xf]
        %v3967 = vld [vmem:[%s10 + $0xc8] sm:$0xf]
        %v3968 = vld [vmem:[%s10 + $0xcc] sm:$0xf]
        %v3969 = vld [vmem:[%s10 + $0xd0] sm:$0xf]
        %v3970 = vld [vmem:[%s10 + $0xd4] sm:$0xf]
        %v3971 = vld [vmem:[%s10 + $0xd8] sm:$0xf]
        %v3972 = vld [vmem:[%s10 + $0xdc] sm:$0xf]
        %v3973 = vld [vmem:[%s10 + $0xe0] sm:$0xf]
        %v3974 = vld [vmem:[%s10 + $0xe4] sm:$0xf]
        %v3975 = vld [vmem:[%s10 + $0xe8] sm:$0xf]
        %v3976 = vld [vmem:[%s10 + $0xec] sm:$0xf]
        %v3977 = vld [vmem:[%s10 + $0xf0] sm:$0xf]
        %v3978 = vld [vmem:[%s10 + $0xf4] sm:$0xf]
        %v3979 = vld [vmem:[%s10 + $0xf8] sm:$0xf]
        %v3980 = vld [vmem:[%s10 + $0xfc] sm:$0xf]
        %v3981 = vld [vmem:[%s10 + $0x100] sm:$0xf]
        %v3982 = vld [vmem:[%s10 + $0x104] sm:$0xf]
        %v3983 = vld [vmem:[%s10 + $0x108] sm:$0xf]
        %v3984 = vld [vmem:[%s10 + $0x10c] sm:$0xf]
        %v3985 = vld [vmem:[%s10 + $0x110] sm:$0xf]
        %v3986 = vld [vmem:[%s10 + $0x114] sm:$0xf]
        %v3987 = vld [vmem:[%s10 + $0x118] sm:$0xf]
        %v3988 = vld [vmem:[%s10 + $0x11c] sm:$0xf]
        %v3989 = vld [vmem:[%s10 + $0x120] sm:$0xf]
        %v3990 = vld [vmem:[%s10 + $0x124] sm:$0xf]
        %v3991 = vld [vmem:[%s10 + $0x128] sm:$0xf]
        %v3992 = vld [vmem:[%s10 + $0x12c] sm:$0xf]
        %v3993 = vld [vmem:[%s10 + $0x130] sm:$0xf]
        %v3994 = vld [vmem:[%s10 + $0x134] sm:$0xf]
        %v3995 = vld [vmem:[%s10 + $0x138] sm:$0xf]
        %v3996 = vld [vmem:[%s10 + $0x13c] sm:$0xf]
        %v3997 = vld [vmem:[%s10 + $0x140] sm:$0xf]
        %v3998 = vld [vmem:[%s10 + $0x144] sm:$0xf]
        %v3999 = vld [vmem:[%s10 + $0x148] sm:$0xf]
        %v4000 = vld [vmem:[%s10 + $0x14c] sm:$0xf]
        %v4001 = vld [vmem:[%s10 + $0x150] sm:$0xf]
        %v4002 = vld [vmem:[%s10 + $0x154] sm:$0xf]
        %v4003 = vld [vmem:[%s10 + $0x158] sm:$0xf]
        %v4004 = vld [vmem:[%s10 + $0x15c] sm:$0xf]
        %v4005 = vld [vmem:[%s10 + $0x160] sm:$0xf]
        %v4006 = vld [vmem:[%s10 + $0x164] sm:$0xf]
        %v4007 = vld [vmem:[%s10 + $0x168] sm:$0xf]
        %v4008 = vld [vmem:[%s10 + $0x16c] sm:$0xf]
        %v4009 = vld [vmem:[%s10 + $0x170] sm:$0xf]
        %v4010 = vld [vmem:[%s10 + $0x174] sm:$0xf]
        %v4011 = vld [vmem:[%s10 + $0x178] sm:$0xf]
        %v4012 = vld [vmem:[%s10 + $0x17c] sm:$0xf]
        %v4013 = vld [vmem:[%s10 + $0x180] sm:$0xf]
        %v4014 = vld [vmem:[%s10 + $0x184] sm:$0xf]
        %v4015 = vld [vmem:[%s10 + $0x188] sm:$0xf]
        %v4016 = vld [vmem:[%s10 + $0x18c] sm:$0xf]
        %v4017 = vld [vmem:[%s10 + $0x190] sm:$0xf]
        %v4018 = vld [vmem:[%s10 + $0x194] sm:$0xf]
        %v4019 = vld [vmem:[%s10 + $0x198] sm:$0xf]
        %v4020 = vld [vmem:[%s10 + $0x19c] sm:$0xf]
        %v4021 = vld [vmem:[%s10 + $0x1a0] sm:$0xf]
        %v4022 = vld [vmem:[%s10 + $0x1a4] sm:$0xf]
        %v4023 = vld [vmem:[%s10 + $0x1a8] sm:$0xf]
        %v4024 = vld [vmem:[%s10 + $0x1ac] sm:$0xf]
        %v4025 = vld [vmem:[%s10 + $0x1b0] sm:$0xf]
        %v4026 = vld [vmem:[%s10 + $0x1b4] sm:$0xf]
        %v4027 = vld [vmem:[%s10 + $0x1b8] sm:$0xf]
        %v4028 = vld [vmem:[%s10 + $0x1bc] sm:$0xf]
        %v4029 = vld [vmem:[%s10 + $0x1c0] sm:$0xf]
        %v4030 = vld [vmem:[%s10 + $0x1c4] sm:$0xf]
        %v4031 = vld [vmem:[%s10 + $0x1c8] sm:$0xf]
        %v4032 = vld [vmem:[%s10 + $0x1cc] sm:$0xf]
        %v4033 = vld [vmem:[%s10 + $0x1d0] sm:$0xf]
        %v4034 = vld [vmem:[%s10 + $0x1d4] sm:$0xf]
        %v4035 = vld [vmem:[%s10 + $0x1d8] sm:$0xf]
        %v4036 = vld [vmem:[%s10 + $0x1dc] sm:$0xf]
        %v4037 = vld [vmem:[%s10 + $0x1e0] sm:$0xf]
        %v4038 = vld [vmem:[%s10 + $0x1e4] sm:$0xf]
        %v4039 = vld [vmem:[%s10 + $0x1e8] sm:$0xf]
        %v4040 = vld [vmem:[%s10 + $0x1ec] sm:$0xf]
        %v4041 = vld [vmem:[%s10 + $0x1f0] sm:$0xf]
        %v4042 = vld [vmem:[%s10 + $0x1f4] sm:$0xf]
        %v4043 = vld [vmem:[%s10 + $0x1f8] sm:$0xf]
        %v4044 = vld [vmem:[%s10 + $0x1fc] sm:$0xf]
        %v4045 = vld [vmem:[%s10 + $0x200] sm:$0xf]
        %v4046 = vld [vmem:[%s10 + $0x204] sm:$0xf]
        %v4047 = vld [vmem:[%s10 + $0x208] sm:$0xf]
        %v4048 = vld [vmem:[%s10 + $0x20c] sm:$0xf]
        %v4049 = vld [vmem:[%s10 + $0x210] sm:$0xf]
        %v4050 = vld [vmem:[%s10 + $0x214] sm:$0xf]
        %v4051 = vld [vmem:[%s10 + $0x218] sm:$0xf]
        %v4052 = vld [vmem:[%s10 + $0x21c] sm:$0xf]
        %v4053 = vld [vmem:[%s10 + $0x220] sm:$0xf]
        %v4054 = vld [vmem:[%s10 + $0x224] sm:$0xf]
        %v4055 = vld [vmem:[%s10 + $0x228] sm:$0xf]
        %v4056 = vld [vmem:[%s10 + $0x22c] sm:$0xf]
        %v4057 = vld [vmem:[%s10 + $0x230] sm:$0xf]
        %v4058 = vld [vmem:[%s10 + $0x234] sm:$0xf]
        %v4059 = vld [vmem:[%s10 + $0x238] sm:$0xf]
        %v4060 = vld [vmem:[%s10 + $0x23c] sm:$0xf]
        %v4061 = vld [vmem:[%s10 + $0x240] sm:$0xf]
        %v4062 = vld [vmem:[%s10 + $0x244] sm:$0xf]
        %v4063 = vld [vmem:[%s10 + $0x248] sm:$0xf]
        %v4064 = vld [vmem:[%s10 + $0x24c] sm:$0xf]
        %v4065 = vld [vmem:[%s10 + $0x250] sm:$0xf]
        %v4066 = vld [vmem:[%s10 + $0x254] sm:$0xf]
        %v4067 = vld [vmem:[%s10 + $0x258] sm:$0xf]
        %v4068 = vld [vmem:[%s10 + $0x25c] sm:$0xf]
        %v4069 = vld [vmem:[%s10 + $0x260] sm:$0xf]
        %v4070 = vld [vmem:[%s10 + $0x264] sm:$0xf]
        %v4071 = vld [vmem:[%s10 + $0x268] sm:$0xf]
        %v4072 = vld [vmem:[%s10 + $0x26c] sm:$0xf]
        %v4073 = vld [vmem:[%s10 + $0x270] sm:$0xf]
        %v4074 = vld [vmem:[%s10 + $0x274] sm:$0xf]
        %v4075 = vld [vmem:[%s10 + $0x278] sm:$0xf]
        %v4076 = vld [vmem:[%s10 + $0x27c] sm:$0xf]
        %v4077 = vld [vmem:[%s10 + $0x280] sm:$0xf]
        %v4078 = vld [vmem:[%s10 + $0x284] sm:$0xf]
        %v4079 = vld [vmem:[%s10 + $0x288] sm:$0xf]
        %v4080 = vld [vmem:[%s10 + $0x28c] sm:$0xf]
        %v4081 = vld [vmem:[%s10 + $0x290] sm:$0xf]
        %v4082 = vld [vmem:[%s10 + $0x294] sm:$0xf]
        %v4083 = vld [vmem:[%s10 + $0x298] sm:$0xf]
        %v4084 = vld [vmem:[%s10 + $0x29c] sm:$0xf]
        %v4085 = vld [vmem:[%s10 + $0x2a0] sm:$0xf]
        %v4086 = vld [vmem:[%s10 + $0x2a4] sm:$0xf]
        %v4087 = vld [vmem:[%s10 + $0x2a8] sm:$0xf]
        %v4088 = vld [vmem:[%s10 + $0x2ac] sm:$0xf]
        %v4089 = vld [vmem:[%s10 + $0x2b0] sm:$0xf]
        %v4090 = vld [vmem:[%s10 + $0x2b4] sm:$0xf]
        %v4091 = vld [vmem:[%s10 + $0x2b8] sm:$0xf]
        %v4092 = vld [vmem:[%s10 + $0x2bc] sm:$0xf]
        %v4093 = vld [vmem:[%s10 + $0x2c0] sm:$0xf]
        %v4094 = vld [vmem:[%s10 + $0x2c4] sm:$0xf]
        %v4095 = vld [vmem:[%s10 + $0x2c8] sm:$0xf]
        %v4096 = vld [vmem:[%s10 + $0x2cc] sm:$0xf]
        %v4097 = vld [vmem:[%s10 + $0x2d0] sm:$0xf]
        %v4098 = vld [vmem:[%s10 + $0x2d4] sm:$0xf]
        %v4099 = vld [vmem:[%s10 + $0x2d8] sm:$0xf]
        %v4100 = vld [vmem:[%s10 + $0x2dc] sm:$0xf]
        %v4101 = vld [vmem:[%s10 + $0x2e0] sm:$0xf]
        %v4102 = vld [vmem:[%s10 + $0x2e4] sm:$0xf]
        %v4103 = vld [vmem:[%s10 + $0x2e8] sm:$0xf]
        %v4104 = vld [vmem:[%s10 + $0x2ec] sm:$0xf]
        %v4105 = vld [vmem:[%s10 + $0x2f0] sm:$0xf]
        %v4106 = vld [vmem:[%s10 + $0x2f4] sm:$0xf]
        %v4107 = vld [vmem:[%s10 + $0x2f8] sm:$0xf]
        %v4108 = vld [vmem:[%s10 + $0x2fc] sm:$0xf]
        %v4109 = vld [vmem:[%s10 + $0x300] sm:$0xf]
        %v4110 = vld [vmem:[%s10 + $0x304] sm:$0xf]
        %v4111 = vld [vmem:[%s10 + $0x308] sm:$0xf]
        %v4112 = vld [vmem:[%s10 + $0x30c] sm:$0xf]
        %v4113 = vld [vmem:[%s10 + $0x310] sm:$0xf]
        %v4114 = vld [vmem:[%s10 + $0x314] sm:$0xf]
        %v4115 = vld [vmem:[%s10 + $0x318] sm:$0xf]
        %v4116 = vld [vmem:[%s10 + $0x31c] sm:$0xf]
        %v4117 = vld [vmem:[%s10 + $0x320] sm:$0xf]
        %v4118 = vld [vmem:[%s10 + $0x324] sm:$0xf]
        %v4119 = vld [vmem:[%s10 + $0x328] sm:$0xf]
        %v4120 = vld [vmem:[%s10 + $0x32c] sm:$0xf]
        %v4121 = vld [vmem:[%s10 + $0x330] sm:$0xf]
        %v4122 = vld [vmem:[%s10 + $0x334] sm:$0xf]
        %v4123 = vld [vmem:[%s10 + $0x338] sm:$0xf]
        %v4124 = vld [vmem:[%s10 + $0x33c] sm:$0xf]
        %v4125 = vld [vmem:[%s10 + $0x340] sm:$0xf]
        %v4126 = vld [vmem:[%s10 + $0x344] sm:$0xf]
        %v4127 = vld [vmem:[%s10 + $0x348] sm:$0xf]
        %v4128 = vld [vmem:[%s10 + $0x34c] sm:$0xf]
        %v4129 = vld [vmem:[%s10 + $0x350] sm:$0xf]
        %v4130 = vld [vmem:[%s10 + $0x354] sm:$0xf]
        %v4131 = vld [vmem:[%s10 + $0x358] sm:$0xf]
        %v4132 = vld [vmem:[%s10 + $0x35c] sm:$0xf]
        %v4133 = vld [vmem:[%s10 + $0x360] sm:$0xf]
        %v4134 = vld [vmem:[%s10 + $0x364] sm:$0xf]
        %v4135 = vld [vmem:[%s10 + $0x368] sm:$0xf]
        %v4136 = vld [vmem:[%s10 + $0x36c] sm:$0xf]
        %v4137 = vld [vmem:[%s10 + $0x370] sm:$0xf]
        %v4138 = vld [vmem:[%s10 + $0x374] sm:$0xf]
        %v4139 = vld [vmem:[%s10 + $0x378] sm:$0xf]
        %v4140 = vld [vmem:[%s10 + $0x37c] sm:$0xf]
        %v4141 = vld [vmem:[%s10 + $0x380] sm:$0xf]
        %v4142 = vld [vmem:[%s10 + $0x384] sm:$0xf]
        %v4143 = vld [vmem:[%s10 + $0x388] sm:$0xf]
        %v4144 = vld [vmem:[%s10 + $0x38c] sm:$0xf]
        %v4145 = vld [vmem:[%s10 + $0x390] sm:$0xf]
        %v4146 = vld [vmem:[%s10 + $0x394] sm:$0xf]
        %v4147 = vld [vmem:[%s10 + $0x398] sm:$0xf]
        %v4148 = vld [vmem:[%s10 + $0x39c] sm:$0xf]
        %v4149 = vld [vmem:[%s10 + $0x3a0] sm:$0xf]
        %v4150 = vld [vmem:[%s10 + $0x3a4] sm:$0xf]
        %v4151 = vld [vmem:[%s10 + $0x3a8] sm:$0xf]
        %v4152 = vld [vmem:[%s10 + $0x3ac] sm:$0xf]
        %v4153 = vld [vmem:[%s10 + $0x3b0] sm:$0xf]
        %v4154 = vld [vmem:[%s10 + $0x3b4] sm:$0xf]
        %v4155 = vld [vmem:[%s10 + $0x3b8] sm:$0xf]
        %v4156 = vld [vmem:[%s10 + $0x3bc] sm:$0xf]
        %v4157 = vld [vmem:[%s10 + $0x3c0] sm:$0xf]
        %v4158 = vld [vmem:[%s10 + $0x3c4] sm:$0xf]
        %v4159 = vld [vmem:[%s10 + $0x3c8] sm:$0xf]
        %v4160 = vld [vmem:[%s10 + $0x3cc] sm:$0xf]
        %v4161 = vld [vmem:[%s10 + $0x3d0] sm:$0xf]
        %v4162 = vld [vmem:[%s10 + $0x3d4] sm:$0xf]
        %v4163 = vld [vmem:[%s10 + $0x3d8] sm:$0xf]
        %v4164 = vld [vmem:[%s10 + $0x3dc] sm:$0xf]
        %v4165 = vld [vmem:[%s10 + $0x3e0] sm:$0xf]
        %v4166 = vld [vmem:[%s10 + $0x3e4] sm:$0xf]
        %v4167 = vld [vmem:[%s10 + $0x3e8] sm:$0xf]
        %v4168 = vld [vmem:[%s10 + $0x3ec] sm:$0xf]
        %v4169 = vld [vmem:[%s10 + $0x3f0] sm:$0xf]
        %v4170 = vld [vmem:[%s10 + $0x3f4] sm:$0xf]
        %v4171 = vld [vmem:[%s10 + $0x3f8] sm:$0xf]
        %v4172 = vld [vmem:[%s10 + $0x3fc] sm:$0xf]
        %v4173 = vlaneseq
        %v4174 = vshrl.u32 %v4173, 7
        %v4175 = vsub.s32 6, %v4174
        %v4176 = vrot.slane %v429, %v4175
        %v4433 = vunpack.c.l.b16 %v3917
        %v4434 = vunpack.c.l.b16 %v3918
        %v4435 = vunpack.c.l.b16 %v3919
        %v4436 = vunpack.c.l.b16 %v3920
        %v4437 = vunpack.c.l.b16 %v3921
        %v4438 = vunpack.c.l.b16 %v3922
        %v4439 = vunpack.c.l.b16 %v3923
        %v4440 = vunpack.c.l.b16 %v3924
        %v4441 = vunpack.c.l.b16 %v3925
        %v4442 = vunpack.c.l.b16 %v3926
        %v4443 = vunpack.c.l.b16 %v3927
        %v4444 = vunpack.c.l.b16 %v3928
        %v4445 = vunpack.c.l.b16 %v3929
        %v4446 = vunpack.c.l.b16 %v3930
        %v4447 = vunpack.c.l.b16 %v3931
        %v4448 = vunpack.c.l.b16 %v3932
        %v4449 = vunpack.c.l.b16 %v3933
        %v4450 = vunpack.c.l.b16 %v3934
        %v4451 = vunpack.c.l.b16 %v3935
        %v4452 = vunpack.c.l.b16 %v3936
        %v4453 = vunpack.c.l.b16 %v3937
        %v4454 = vunpack.c.l.b16 %v3938
        %v4455 = vunpack.c.l.b16 %v3939
        %v4456 = vunpack.c.l.b16 %v3940
        %v4457 = vunpack.c.l.b16 %v3941
        %v4458 = vunpack.c.l.b16 %v3942
        %v4459 = vunpack.c.l.b16 %v3943
        %v4460 = vunpack.c.l.b16 %v3944
        %v4461 = vunpack.c.l.b16 %v3945
        %v4462 = vunpack.c.l.b16 %v3946
        %v4463 = vunpack.c.l.b16 %v3947
        %v4464 = vunpack.c.l.b16 %v3948
        %v4465 = vunpack.c.l.b16 %v3949
        %v4466 = vunpack.c.l.b16 %v3950
        %v4467 = vunpack.c.l.b16 %v3951
        %v4468 = vunpack.c.l.b16 %v3952
        %v4469 = vunpack.c.l.b16 %v3953
        %v4470 = vunpack.c.l.b16 %v3954
        %v4471 = vunpack.c.l.b16 %v3955
        %v4472 = vunpack.c.l.b16 %v3956
        %v4473 = vunpack.c.l.b16 %v3957
        %v4474 = vunpack.c.l.b16 %v3958
        %v4475 = vunpack.c.l.b16 %v3959
        %v4476 = vunpack.c.l.b16 %v3960
        %v4477 = vunpack.c.l.b16 %v3961
        %v4478 = vunpack.c.l.b16 %v3962
        %v4479 = vunpack.c.l.b16 %v3963
        %v4480 = vunpack.c.l.b16 %v3964
        %v4481 = vunpack.c.l.b16 %v3965
        %v4482 = vunpack.c.l.b16 %v3966
        %v4483 = vunpack.c.l.b16 %v3967
        %v4484 = vunpack.c.l.b16 %v3968
        %v4485 = vunpack.c.l.b16 %v3969
        %v4486 = vunpack.c.l.b16 %v3970
        %v4487 = vunpack.c.l.b16 %v3971
        %v4488 = vunpack.c.l.b16 %v3972
        %v4489 = vunpack.c.l.b16 %v3973
        %v4490 = vunpack.c.l.b16 %v3974
        %v4491 = vunpack.c.l.b16 %v3975
        %v4492 = vunpack.c.l.b16 %v3976
        %v4493 = vunpack.c.l.b16 %v3977
        %v4494 = vunpack.c.l.b16 %v3978
        %v4495 = vunpack.c.l.b16 %v3979
        %v4496 = vunpack.c.l.b16 %v3980
        %v4497 = vunpack.c.l.b16 %v3981
        %v4498 = vunpack.c.l.b16 %v3982
        %v4499 = vunpack.c.l.b16 %v3983
        %v4500 = vunpack.c.l.b16 %v3984
        %v4501 = vunpack.c.l.b16 %v3985
        %v4502 = vunpack.c.l.b16 %v3986
        %v4503 = vunpack.c.l.b16 %v3987
        %v4504 = vunpack.c.l.b16 %v3988
        %v4505 = vunpack.c.l.b16 %v3989
        %v4506 = vunpack.c.l.b16 %v3990
        %v4507 = vunpack.c.l.b16 %v3991
        %v4508 = vunpack.c.l.b16 %v3992
        %v4509 = vunpack.c.l.b16 %v3993
        %v4510 = vunpack.c.l.b16 %v3994
        %v4511 = vunpack.c.l.b16 %v3995
        %v4512 = vunpack.c.l.b16 %v3996
        %v4513 = vunpack.c.l.b16 %v3997
        %v4514 = vunpack.c.l.b16 %v3998
        %v4515 = vunpack.c.l.b16 %v3999
        %v4516 = vunpack.c.l.b16 %v4000
        %v4517 = vunpack.c.l.b16 %v4001
        %v4518 = vunpack.c.l.b16 %v4002
        %v4519 = vunpack.c.l.b16 %v4003
        %v4520 = vunpack.c.l.b16 %v4004
        %v4521 = vunpack.c.l.b16 %v4005
        %v4522 = vunpack.c.l.b16 %v4006
        %v4523 = vunpack.c.l.b16 %v4007
        %v4524 = vunpack.c.l.b16 %v4008
        %v4525 = vunpack.c.l.b16 %v4009
        %v4526 = vunpack.c.l.b16 %v4010
        %v4527 = vunpack.c.l.b16 %v4011
        %v4528 = vunpack.c.l.b16 %v4012
        %v4529 = vunpack.c.l.b16 %v4013
        %v4530 = vunpack.c.l.b16 %v4014
        %v4531 = vunpack.c.l.b16 %v4015
        %v4532 = vunpack.c.l.b16 %v4016
        %v4533 = vunpack.c.l.b16 %v4017
        %v4534 = vunpack.c.l.b16 %v4018
        %v4535 = vunpack.c.l.b16 %v4019
        %v4536 = vunpack.c.l.b16 %v4020
        %v4537 = vunpack.c.l.b16 %v4021
        %v4538 = vunpack.c.l.b16 %v4022
        %v4539 = vunpack.c.l.b16 %v4023
        %v4540 = vunpack.c.l.b16 %v4024
        %v4541 = vunpack.c.l.b16 %v4025
        %v4542 = vunpack.c.l.b16 %v4026
        %v4543 = vunpack.c.l.b16 %v4027
        %v4544 = vunpack.c.l.b16 %v4028
        %v4545 = vunpack.c.l.b16 %v4029
        %v4546 = vunpack.c.l.b16 %v4030
        %v4547 = vunpack.c.l.b16 %v4031
        %v4548 = vunpack.c.l.b16 %v4032
        %v4549 = vunpack.c.l.b16 %v4033
        %v4550 = vunpack.c.l.b16 %v4034
        %v4551 = vunpack.c.l.b16 %v4035
        %v4552 = vunpack.c.l.b16 %v4036
        %v4553 = vunpack.c.l.b16 %v4037
        %v4554 = vunpack.c.l.b16 %v4038
        %v4555 = vunpack.c.l.b16 %v4039
        %v4556 = vunpack.c.l.b16 %v4040
        %v4557 = vunpack.c.l.b16 %v4041
        %v4558 = vunpack.c.l.b16 %v4042
        %v4559 = vunpack.c.l.b16 %v4043
        %v4560 = vunpack.c.l.b16 %v4044
        %v4561 = vunpack.c.l.b16 %v4045
        %v4562 = vunpack.c.l.b16 %v4046
        %v4563 = vunpack.c.l.b16 %v4047
        %v4564 = vunpack.c.l.b16 %v4048
        %v4565 = vunpack.c.l.b16 %v4049
        %v4566 = vunpack.c.l.b16 %v4050
        %v4567 = vunpack.c.l.b16 %v4051
        %v4568 = vunpack.c.l.b16 %v4052
        %v4569 = vunpack.c.l.b16 %v4053
        %v4570 = vunpack.c.l.b16 %v4054
        %v4571 = vunpack.c.l.b16 %v4055
        %v4572 = vunpack.c.l.b16 %v4056
        %v4573 = vunpack.c.l.b16 %v4057
        %v4574 = vunpack.c.l.b16 %v4058
        %v4575 = vunpack.c.l.b16 %v4059
        %v4576 = vunpack.c.l.b16 %v4060
        %v4577 = vunpack.c.l.b16 %v4061
        %v4578 = vunpack.c.l.b16 %v4062
        %v4579 = vunpack.c.l.b16 %v4063
        %v4580 = vunpack.c.l.b16 %v4064
        %v4581 = vunpack.c.l.b16 %v4065
        %v4582 = vunpack.c.l.b16 %v4066
        %v4583 = vunpack.c.l.b16 %v4067
        %v4584 = vunpack.c.l.b16 %v4068
        %v4585 = vunpack.c.l.b16 %v4069
        %v4586 = vunpack.c.l.b16 %v4070
        %v4587 = vunpack.c.l.b16 %v4071
        %v4588 = vunpack.c.l.b16 %v4072
        %v4589 = vunpack.c.l.b16 %v4073
        %v4590 = vunpack.c.l.b16 %v4074
        %v4591 = vunpack.c.l.b16 %v4075
        %v4592 = vunpack.c.l.b16 %v4076
        %v4593 = vunpack.c.l.b16 %v4077
        %v4594 = vunpack.c.l.b16 %v4078
        %v4595 = vunpack.c.l.b16 %v4079
        %v4596 = vunpack.c.l.b16 %v4080
        %v4597 = vunpack.c.l.b16 %v4081
        %v4598 = vunpack.c.l.b16 %v4082
        %v4599 = vunpack.c.l.b16 %v4083
        %v4600 = vunpack.c.l.b16 %v4084
        %v4601 = vunpack.c.l.b16 %v4085
        %v4602 = vunpack.c.l.b16 %v4086
        %v4603 = vunpack.c.l.b16 %v4087
        %v4604 = vunpack.c.l.b16 %v4088
        %v4605 = vunpack.c.l.b16 %v4089
        %v4606 = vunpack.c.l.b16 %v4090
        %v4607 = vunpack.c.l.b16 %v4091
        %v4608 = vunpack.c.l.b16 %v4092
        %v4609 = vunpack.c.l.b16 %v4093
        %v4610 = vunpack.c.l.b16 %v4094
        %v4611 = vunpack.c.l.b16 %v4095
        %v4612 = vunpack.c.l.b16 %v4096
        %v4613 = vunpack.c.l.b16 %v4097
        %v4614 = vunpack.c.l.b16 %v4098
        %v4615 = vunpack.c.l.b16 %v4099
        %v4616 = vunpack.c.l.b16 %v4100
        %v4617 = vunpack.c.l.b16 %v4101
        %v4618 = vunpack.c.l.b16 %v4102
        %v4619 = vunpack.c.l.b16 %v4103
        %v4620 = vunpack.c.l.b16 %v4104
        %v4621 = vunpack.c.l.b16 %v4105
        %v4622 = vunpack.c.l.b16 %v4106
        %v4623 = vunpack.c.l.b16 %v4107
        %v4624 = vunpack.c.l.b16 %v4108
        %v4625 = vunpack.c.l.b16 %v4109
        %v4626 = vunpack.c.l.b16 %v4110
        %v4627 = vunpack.c.l.b16 %v4111
        %v4628 = vunpack.c.l.b16 %v4112
        %v4629 = vunpack.c.l.b16 %v4113
        %v4630 = vunpack.c.l.b16 %v4114
        %v4631 = vunpack.c.l.b16 %v4115
        %v4632 = vunpack.c.l.b16 %v4116
        %v4633 = vunpack.c.l.b16 %v4117
        %v4634 = vunpack.c.l.b16 %v4118
        %v4635 = vunpack.c.l.b16 %v4119
        %v4636 = vunpack.c.l.b16 %v4120
        %v4637 = vunpack.c.l.b16 %v4121
        %v4638 = vunpack.c.l.b16 %v4122
        %v4639 = vunpack.c.l.b16 %v4123
        %v4640 = vunpack.c.l.b16 %v4124
        %v4641 = vunpack.c.l.b16 %v4125
        %v4642 = vunpack.c.l.b16 %v4126
        %v4643 = vunpack.c.l.b16 %v4127
        %v4644 = vunpack.c.l.b16 %v4128
        %v4645 = vunpack.c.l.b16 %v4129
        %v4646 = vunpack.c.l.b16 %v4130
        %v4647 = vunpack.c.l.b16 %v4131
        %v4648 = vunpack.c.l.b16 %v4132
        %v4649 = vunpack.c.l.b16 %v4133
        %v4650 = vunpack.c.l.b16 %v4134
        %v4651 = vunpack.c.l.b16 %v4135
        %v4652 = vunpack.c.l.b16 %v4136
        %v4653 = vunpack.c.l.b16 %v4137
        %v4654 = vunpack.c.l.b16 %v4138
        %v4655 = vunpack.c.l.b16 %v4139
        %v4656 = vunpack.c.l.b16 %v4140
        %v4657 = vunpack.c.l.b16 %v4141
        %v4658 = vunpack.c.l.b16 %v4142
        %v4659 = vunpack.c.l.b16 %v4143
        %v4660 = vunpack.c.l.b16 %v4144
        %v4661 = vunpack.c.l.b16 %v4145
        %v4662 = vunpack.c.l.b16 %v4146
        %v4663 = vunpack.c.l.b16 %v4147
        %v4664 = vunpack.c.l.b16 %v4148
        %v4665 = vunpack.c.l.b16 %v4149
        %v4666 = vunpack.c.l.b16 %v4150
        %v4667 = vunpack.c.l.b16 %v4151
        %v4668 = vunpack.c.l.b16 %v4152
        %v4669 = vunpack.c.l.b16 %v4153
        %v4670 = vunpack.c.l.b16 %v4154
        %v4671 = vunpack.c.l.b16 %v4155
        %v4672 = vunpack.c.l.b16 %v4156
        %v4673 = vunpack.c.l.b16 %v4157
        %v4674 = vunpack.c.l.b16 %v4158
        %v4675 = vunpack.c.l.b16 %v4159
        %v4676 = vunpack.c.l.b16 %v4160
        %v4677 = vunpack.c.l.b16 %v4161
        %v4678 = vunpack.c.l.b16 %v4162
        %v4679 = vunpack.c.l.b16 %v4163
        %v4680 = vunpack.c.l.b16 %v4164
        %v4681 = vunpack.c.l.b16 %v4165
        %v4682 = vunpack.c.l.b16 %v4166
        %v4683 = vunpack.c.l.b16 %v4167
        %v4684 = vunpack.c.l.b16 %v4168
        %v4685 = vunpack.c.l.b16 %v4169
        %v4686 = vunpack.c.l.b16 %v4170
        %v4687 = vunpack.c.l.b16 %v4171
        %v4688 = vunpack.c.l.b16 %v4172
        %v4689 = vpack.c.b16 %v4434, %v4433
        %v4690 = vpack.c.b16 %v4436, %v4435
        %v4691 = vpack.c.b16 %v4438, %v4437
        %v4692 = vpack.c.b16 %v4440, %v4439
        %v4693 = vpack.c.b16 %v4442, %v4441
        %v4694 = vpack.c.b16 %v4444, %v4443
        %v4695 = vpack.c.b16 %v4446, %v4445
        %v4696 = vpack.c.b16 %v4448, %v4447
        %v4697 = vpack.c.b16 %v4450, %v4449
        %v4698 = vpack.c.b16 %v4452, %v4451
        %v4699 = vpack.c.b16 %v4454, %v4453
        %v4700 = vpack.c.b16 %v4456, %v4455
        %v4701 = vpack.c.b16 %v4458, %v4457
        %v4702 = vpack.c.b16 %v4460, %v4459
        %v4703 = vpack.c.b16 %v4462, %v4461
        %v4704 = vpack.c.b16 %v4464, %v4463
        %v4705 = vpack.c.b16 %v4466, %v4465
        %v4706 = vpack.c.b16 %v4468, %v4467
        %v4707 = vpack.c.b16 %v4470, %v4469
        %v4708 = vpack.c.b16 %v4472, %v4471
        %v4709 = vpack.c.b16 %v4474, %v4473
        %v4710 = vpack.c.b16 %v4476, %v4475
        %v4711 = vpack.c.b16 %v4478, %v4477
        %v4712 = vpack.c.b16 %v4480, %v4479
        %v4713 = vpack.c.b16 %v4482, %v4481
        %v4714 = vpack.c.b16 %v4484, %v4483
        %v4715 = vpack.c.b16 %v4486, %v4485
        %v4716 = vpack.c.b16 %v4488, %v4487
        %v4717 = vpack.c.b16 %v4490, %v4489
        %v4718 = vpack.c.b16 %v4492, %v4491
        %v4719 = vpack.c.b16 %v4494, %v4493
        %v4720 = vpack.c.b16 %v4496, %v4495
        %v4721 = vpack.c.b16 %v4498, %v4497
        %v4722 = vpack.c.b16 %v4500, %v4499
        %v4723 = vpack.c.b16 %v4502, %v4501
        %v4724 = vpack.c.b16 %v4504, %v4503
        %v4725 = vpack.c.b16 %v4506, %v4505
        %v4726 = vpack.c.b16 %v4508, %v4507
        %v4727 = vpack.c.b16 %v4510, %v4509
        %v4728 = vpack.c.b16 %v4512, %v4511
        %v4729 = vpack.c.b16 %v4514, %v4513
        %v4730 = vpack.c.b16 %v4516, %v4515
        %v4731 = vpack.c.b16 %v4518, %v4517
        %v4732 = vpack.c.b16 %v4520, %v4519
        %v4733 = vpack.c.b16 %v4522, %v4521
        %v4734 = vpack.c.b16 %v4524, %v4523
        %v4735 = vpack.c.b16 %v4526, %v4525
        %v4736 = vpack.c.b16 %v4528, %v4527
        %v4737 = vpack.c.b16 %v4530, %v4529
        %v4738 = vpack.c.b16 %v4532, %v4531
        %v4739 = vpack.c.b16 %v4534, %v4533
        %v4740 = vpack.c.b16 %v4536, %v4535
        %v4741 = vpack.c.b16 %v4538, %v4537
        %v4742 = vpack.c.b16 %v4540, %v4539
        %v4743 = vpack.c.b16 %v4542, %v4541
        %v4744 = vpack.c.b16 %v4544, %v4543
        %v4745 = vpack.c.b16 %v4546, %v4545
        %v4746 = vpack.c.b16 %v4548, %v4547
        %v4747 = vpack.c.b16 %v4550, %v4549
        %v4748 = vpack.c.b16 %v4552, %v4551
        %v4749 = vpack.c.b16 %v4554, %v4553
        %v4750 = vpack.c.b16 %v4556, %v4555
        %v4751 = vpack.c.b16 %v4558, %v4557
        %v4752 = vpack.c.b16 %v4560, %v4559
        %v4753 = vpack.c.b16 %v4562, %v4561
        %v4754 = vpack.c.b16 %v4564, %v4563
        %v4755 = vpack.c.b16 %v4566, %v4565
        %v4756 = vpack.c.b16 %v4568, %v4567
        %v4757 = vpack.c.b16 %v4570, %v4569
        %v4758 = vpack.c.b16 %v4572, %v4571
        %v4759 = vpack.c.b16 %v4574, %v4573
        %v4760 = vpack.c.b16 %v4576, %v4575
        %v4761 = vpack.c.b16 %v4578, %v4577
        %v4762 = vpack.c.b16 %v4580, %v4579
        %v4763 = vpack.c.b16 %v4582, %v4581
        %v4764 = vpack.c.b16 %v4584, %v4583
        %v4765 = vpack.c.b16 %v4586, %v4585
        %v4766 = vpack.c.b16 %v4588, %v4587
        %v4767 = vpack.c.b16 %v4590, %v4589
        %v4768 = vpack.c.b16 %v4592, %v4591
        %v4769 = vpack.c.b16 %v4594, %v4593
        %v4770 = vpack.c.b16 %v4596, %v4595
        %v4771 = vpack.c.b16 %v4598, %v4597
        %v4772 = vpack.c.b16 %v4600, %v4599
        %v4773 = vpack.c.b16 %v4602, %v4601
        %v4774 = vpack.c.b16 %v4604, %v4603
        %v4775 = vpack.c.b16 %v4606, %v4605
        %v4776 = vpack.c.b16 %v4608, %v4607
        %v4777 = vpack.c.b16 %v4610, %v4609
        %v4778 = vpack.c.b16 %v4612, %v4611
        %v4779 = vpack.c.b16 %v4614, %v4613
        %v4780 = vpack.c.b16 %v4616, %v4615
        %v4781 = vpack.c.b16 %v4618, %v4617
        %v4782 = vpack.c.b16 %v4620, %v4619
        %v4783 = vpack.c.b16 %v4622, %v4621
        %v4784 = vpack.c.b16 %v4624, %v4623
        %v4785 = vpack.c.b16 %v4626, %v4625
        %v4786 = vpack.c.b16 %v4628, %v4627
        %v4787 = vpack.c.b16 %v4630, %v4629
        %v4788 = vpack.c.b16 %v4632, %v4631
        %v4789 = vpack.c.b16 %v4634, %v4633
        %v4790 = vpack.c.b16 %v4636, %v4635
        %v4791 = vpack.c.b16 %v4638, %v4637
        %v4792 = vpack.c.b16 %v4640, %v4639
        %v4793 = vpack.c.b16 %v4642, %v4641
        %v4794 = vpack.c.b16 %v4644, %v4643
        %v4795 = vpack.c.b16 %v4646, %v4645
        %v4796 = vpack.c.b16 %v4648, %v4647
        %v4797 = vpack.c.b16 %v4650, %v4649
        %v4798 = vpack.c.b16 %v4652, %v4651
        %v4799 = vpack.c.b16 %v4654, %v4653
        %v4800 = vpack.c.b16 %v4656, %v4655
        %v4801 = vpack.c.b16 %v4658, %v4657
        %v4802 = vpack.c.b16 %v4660, %v4659
        %v4803 = vpack.c.b16 %v4662, %v4661
        %v4804 = vpack.c.b16 %v4664, %v4663
        %v4805 = vpack.c.b16 %v4666, %v4665
        %v4806 = vpack.c.b16 %v4668, %v4667
        %v4807 = vpack.c.b16 %v4670, %v4669
        %v4808 = vpack.c.b16 %v4672, %v4671
        %v4809 = vpack.c.b16 %v4674, %v4673
        %v4810 = vpack.c.b16 %v4676, %v4675
        %v4811 = vpack.c.b16 %v4678, %v4677
        %v4812 = vpack.c.b16 %v4680, %v4679
        %v4813 = vpack.c.b16 %v4682, %v4681
        %v4814 = vpack.c.b16 %v4684, %v4683
        %v4815 = vpack.c.b16 %v4686, %v4685
        %v4816 = vpack.c.b16 %v4688, %v4687
        %4945 = vmatprep.subr.bf16.mxu0 0
        %4946 = vmatpush1.bf16.msra.mxu0 %v4689
        %4947 = vmatprep.subr.bf16.mxu0 0
        %4948 = vmatpush1.bf16.msra.mxu0 %v4690
        %4949 = vmatprep.subr.bf16.mxu0 0
        %4950 = vmatpush1.bf16.msra.mxu0 %v4691
        %4951 = vmatprep.subr.bf16.mxu0 0
        %4952 = vmatpush1.bf16.msra.mxu0 %v4692
        %4953 = vmatprep.subr.bf16.mxu0 0
        %4954 = vmatpush1.bf16.msra.mxu0 %v4693
        %4955 = vmatprep.subr.bf16.mxu0 0
        %4956 = vmatpush1.bf16.msra.mxu0 %v4694
        %4957 = vmatprep.subr.bf16.mxu0 0
        %4958 = vmatpush1.bf16.msra.mxu0 %v4695
        %4959 = vmatprep.subr.bf16.mxu0 0
        %4960 = vmatpush1.bf16.msra.mxu0 %v4696
        %4961 = vmatprep.subr.bf16.mxu0 0
        %4962 = vmatpush1.bf16.msra.mxu0 %v4697
        %4963 = vmatprep.subr.bf16.mxu0 0
        %4964 = vmatpush1.bf16.msra.mxu0 %v4698
        %4965 = vmatprep.subr.bf16.mxu0 0
        %4966 = vmatpush1.bf16.msra.mxu0 %v4699
        %4967 = vmatprep.subr.bf16.mxu0 0
        %4968 = vmatpush1.bf16.msra.mxu0 %v4700
        %4969 = vmatprep.subr.bf16.mxu0 0
        %4970 = vmatpush1.bf16.msra.mxu0 %v4701
        %4971 = vmatprep.subr.bf16.mxu0 0
        %4972 = vmatpush1.bf16.msra.mxu0 %v4702
        %4973 = vmatprep.subr.bf16.mxu0 0
        %4974 = vmatpush1.bf16.msra.mxu0 %v4703
        %4975 = vmatprep.subr.bf16.mxu0 0
        %4976 = vmatpush1.bf16.msra.mxu0 %v4704
        %4977 = vmatprep.mubr.bf16.mxu0 %v3902
        %4978 = vmatmul.mubr.bf16.gmra.mrb[0].mxu0 %v3901
        %v4979 = vpop.f32.mrb[0].mxu0
        %v4980 = vadd.f32 %v4176, %v4979
        %v4981 = vpop.f32.mrb[0].mxu0
        %v4982 = vpop.f32.mrb[0].mxu0
        %v4983 = vpop.f32.mrb[0].mxu0
        %4984 = vdwg.mxu0
        %4985 = vmatprep.subr.bf16.mxu0 0
        %4986 = vmatpush1.bf16.msra.mxu0 %v4705
        %4987 = vmatprep.subr.bf16.mxu0 0
        %4988 = vmatpush1.bf16.msra.mxu0 %v4706
        %4989 = vmatprep.subr.bf16.mxu0 0
        %4990 = vmatpush1.bf16.msra.mxu0 %v4707
        %4991 = vmatprep.subr.bf16.mxu0 0
        %4992 = vmatpush1.bf16.msra.mxu0 %v4708
        %4993 = vmatprep.subr.bf16.mxu0 0
        %4994 = vmatpush1.bf16.msra.mxu0 %v4709
        %4995 = vmatprep.subr.bf16.mxu0 0
        %4996 = vmatpush1.bf16.msra.mxu0 %v4710
        %4997 = vmatprep.subr.bf16.mxu0 0
        %4998 = vmatpush1.bf16.msra.mxu0 %v4711
        %4999 = vmatprep.subr.bf16.mxu0 0
        %5000 = vmatpush1.bf16.msra.mxu0 %v4712
        %5001 = vmatprep.subr.bf16.mxu0 0
        %5002 = vmatpush1.bf16.msra.mxu0 %v4713
        %5003 = vmatprep.subr.bf16.mxu0 0
        %5004 = vmatpush1.bf16.msra.mxu0 %v4714
        %5005 = vmatprep.subr.bf16.mxu0 0
        %5006 = vmatpush1.bf16.msra.mxu0 %v4715
        %5007 = vmatprep.subr.bf16.mxu0 0
        %5008 = vmatpush1.bf16.msra.mxu0 %v4716
        %5009 = vmatprep.subr.bf16.mxu0 0
        %5010 = vmatpush1.bf16.msra.mxu0 %v4717
        %5011 = vmatprep.subr.bf16.mxu0 0
        %5012 = vmatpush1.bf16.msra.mxu0 %v4718
        %5013 = vmatprep.subr.bf16.mxu0 0
        %5014 = vmatpush1.bf16.msra.mxu0 %v4719
        %5015 = vmatprep.subr.bf16.mxu0 0
        %5016 = vmatpush1.bf16.msra.mxu0 %v4720
        %5017 = vmatprep.mubr.bf16.mxu0 %v3904
        %5018 = vmatmul.mubr.bf16.gmra.mrb[0].mxu0 %v3903
        %v5019 = vpop.f32.mrb[0].mxu0
        %v5020 = vadd.f32 %v4980, %v5019
        %v5021 = vpop.f32.mrb[0].mxu0
        %v5022 = vpop.f32.mrb[0].mxu0
        %v5023 = vpop.f32.mrb[0].mxu0
        %5024 = vdwg.mxu0
        %5025 = vmatprep.subr.bf16.mxu0 0
        %5026 = vmatpush1.bf16.msra.mxu0 %v4721
        %5027 = vmatprep.subr.bf16.mxu0 0
        %5028 = vmatpush1.bf16.msra.mxu0 %v4722
        %5029 = vmatprep.subr.bf16.mxu0 0
        %5030 = vmatpush1.bf16.msra.mxu0 %v4723
        %5031 = vmatprep.subr.bf16.mxu0 0
        %5032 = vmatpush1.bf16.msra.mxu0 %v4724
        %5033 = vmatprep.subr.bf16.mxu0 0
        %5034 = vmatpush1.bf16.msra.mxu0 %v4725
        %5035 = vmatprep.subr.bf16.mxu0 0
        %5036 = vmatpush1.bf16.msra.mxu0 %v4726
        %5037 = vmatprep.subr.bf16.mxu0 0
        %5038 = vmatpush1.bf16.msra.mxu0 %v4727
        %5039 = vmatprep.subr.bf16.mxu0 0
        %5040 = vmatpush1.bf16.msra.mxu0 %v4728
        %5041 = vmatprep.subr.bf16.mxu0 0
        %5042 = vmatpush1.bf16.msra.mxu0 %v4729
        %5043 = vmatprep.subr.bf16.mxu0 0
        %5044 = vmatpush1.bf16.msra.mxu0 %v4730
        %5045 = vmatprep.subr.bf16.mxu0 0
        %5046 = vmatpush1.bf16.msra.mxu0 %v4731
        %5047 = vmatprep.subr.bf16.mxu0 0
        %5048 = vmatpush1.bf16.msra.mxu0 %v4732
        %5049 = vmatprep.subr.bf16.mxu0 0
        %5050 = vmatpush1.bf16.msra.mxu0 %v4733
        %5051 = vmatprep.subr.bf16.mxu0 0
        %5052 = vmatpush1.bf16.msra.mxu0 %v4734
        %5053 = vmatprep.subr.bf16.mxu0 0
        %5054 = vmatpush1.bf16.msra.mxu0 %v4735
        %5055 = vmatprep.subr.bf16.mxu0 0
        %5056 = vmatpush1.bf16.msra.mxu0 %v4736
        %5057 = vmatprep.mubr.bf16.mxu0 %v3906
        %5058 = vmatmul.mubr.bf16.gmra.mrb[0].mxu0 %v3905
        %v5059 = vpop.f32.mrb[0].mxu0
        %v5060 = vadd.f32 %v5020, %v5059
        %v5061 = vpop.f32.mrb[0].mxu0
        %v5062 = vpop.f32.mrb[0].mxu0
        %v5063 = vpop.f32.mrb[0].mxu0
        %5064 = vdwg.mxu0
        %5065 = vmatprep.subr.bf16.mxu0 0
        %5066 = vmatpush1.bf16.msra.mxu0 %v4737
        %5067 = vmatprep.subr.bf16.mxu0 0
        %5068 = vmatpush1.bf16.msra.mxu0 %v4738
        %5069 = vmatprep.subr.bf16.mxu0 0
        %5070 = vmatpush1.bf16.msra.mxu0 %v4739
        %5071 = vmatprep.subr.bf16.mxu0 0
        %5072 = vmatpush1.bf16.msra.mxu0 %v4740
        %5073 = vmatprep.subr.bf16.mxu0 0
        %5074 = vmatpush1.bf16.msra.mxu0 %v4741
        %5075 = vmatprep.subr.bf16.mxu0 0
        %5076 = vmatpush1.bf16.msra.mxu0 %v4742
        %5077 = vmatprep.subr.bf16.mxu0 0
        %5078 = vmatpush1.bf16.msra.mxu0 %v4743
        %5079 = vmatprep.subr.bf16.mxu0 0
        %5080 = vmatpush1.bf16.msra.mxu0 %v4744
        %5081 = vmatprep.subr.bf16.mxu0 0
        %5082 = vmatpush1.bf16.msra.mxu0 %v4745
        %5083 = vmatprep.subr.bf16.mxu0 0
        %5084 = vmatpush1.bf16.msra.mxu0 %v4746
        %5085 = vmatprep.subr.bf16.mxu0 0
        %5086 = vmatpush1.bf16.msra.mxu0 %v4747
        %5087 = vmatprep.subr.bf16.mxu0 0
        %5088 = vmatpush1.bf16.msra.mxu0 %v4748
        %5089 = vmatprep.subr.bf16.mxu0 0
        %5090 = vmatpush1.bf16.msra.mxu0 %v4749
        %5091 = vmatprep.subr.bf16.mxu0 0
        %5092 = vmatpush1.bf16.msra.mxu0 %v4750
        %5093 = vmatprep.subr.bf16.mxu0 0
        %5094 = vmatpush1.bf16.msra.mxu0 %v4751
        %5095 = vmatprep.subr.bf16.mxu0 0
        %5096 = vmatpush1.bf16.msra.mxu0 %v4752
        %5097 = vmatprep.mubr.bf16.mxu0 %v3908
        %5098 = vmatmul.mubr.bf16.gmra.mrb[0].mxu0 %v3907
        %v5099 = vpop.f32.mrb[0].mxu0
        %v5100 = vadd.f32 %v5060, %v5099
        %v5101 = vpop.f32.mrb[0].mxu0
        %v5102 = vpop.f32.mrb[0].mxu0
        %v5103 = vpop.f32.mrb[0].mxu0
        %5104 = vdwg.mxu0
        %5105 = vmatprep.subr.bf16.mxu0 0
        %5106 = vmatpush1.bf16.msra.mxu0 %v4753
        %5107 = vmatprep.subr.bf16.mxu0 0
        %5108 = vmatpush1.bf16.msra.mxu0 %v4754
        %5109 = vmatprep.subr.bf16.mxu0 0
        %5110 = vmatpush1.bf16.msra.mxu0 %v4755
        %5111 = vmatprep.subr.bf16.mxu0 0
        %5112 = vmatpush1.bf16.msra.mxu0 %v4756
        %5113 = vmatprep.subr.bf16.mxu0 0
        %5114 = vmatpush1.bf16.msra.mxu0 %v4757
        %5115 = vmatprep.subr.bf16.mxu0 0
        %5116 = vmatpush1.bf16.msra.mxu0 %v4758
        %5117 = vmatprep.subr.bf16.mxu0 0
        %5118 = vmatpush1.bf16.msra.mxu0 %v4759
        %5119 = vmatprep.subr.bf16.mxu0 0
        %5120 = vmatpush1.bf16.msra.mxu0 %v4760
        %5121 = vmatprep.subr.bf16.mxu0 0
        %5122 = vmatpush1.bf16.msra.mxu0 %v4761
        %5123 = vmatprep.subr.bf16.mxu0 0
        %5124 = vmatpush1.bf16.msra.mxu0 %v4762
        %5125 = vmatprep.subr.bf16.mxu0 0
        %5126 = vmatpush1.bf16.msra.mxu0 %v4763
        %5127 = vmatprep.subr.bf16.mxu0 0
        %5128 = vmatpush1.bf16.msra.mxu0 %v4764
        %5129 = vmatprep.subr.bf16.mxu0 0
        %5130 = vmatpush1.bf16.msra.mxu0 %v4765
        %5131 = vmatprep.subr.bf16.mxu0 0
        %5132 = vmatpush1.bf16.msra.mxu0 %v4766
        %5133 = vmatprep.subr.bf16.mxu0 0
        %5134 = vmatpush1.bf16.msra.mxu0 %v4767
        %5135 = vmatprep.subr.bf16.mxu0 0
        %5136 = vmatpush1.bf16.msra.mxu0 %v4768
        %5137 = vmatprep.mubr.bf16.mxu0 %v3910
        %5138 = vmatmul.mubr.bf16.gmra.mrb[0].mxu0 %v3909
        %v5139 = vpop.f32.mrb[0].mxu0
        %v5140 = vadd.f32 %v5100, %v5139
        %v5141 = vpop.f32.mrb[0].mxu0
        %v5142 = vpop.f32.mrb[0].mxu0
        %v5143 = vpop.f32.mrb[0].mxu0
        %5144 = vdwg.mxu0
        %5145 = vmatprep.subr.bf16.mxu0 0
        %5146 = vmatpush1.bf16.msra.mxu0 %v4769
        %5147 = vmatprep.subr.bf16.mxu0 0
        %5148 = vmatpush1.bf16.msra.mxu0 %v4770
        %5149 = vmatprep.subr.bf16.mxu0 0
        %5150 = vmatpush1.bf16.msra.mxu0 %v4771
        %5151 = vmatprep.subr.bf16.mxu0 0
        %5152 = vmatpush1.bf16.msra.mxu0 %v4772
        %5153 = vmatprep.subr.bf16.mxu0 0
        %5154 = vmatpush1.bf16.msra.mxu0 %v4773
        %5155 = vmatprep.subr.bf16.mxu0 0
        %5156 = vmatpush1.bf16.msra.mxu0 %v4774
        %5157 = vmatprep.subr.bf16.mxu0 0
        %5158 = vmatpush1.bf16.msra.mxu0 %v4775
        %5159 = vmatprep.subr.bf16.mxu0 0
        %5160 = vmatpush1.bf16.msra.mxu0 %v4776
        %5161 = vmatprep.subr.bf16.mxu0 0
        %5162 = vmatpush1.bf16.msra.mxu0 %v4777
        %5163 = vmatprep.subr.bf16.mxu0 0
        %5164 = vmatpush1.bf16.msra.mxu0 %v4778
        %5165 = vmatprep.subr.bf16.mxu0 0
        %5166 = vmatpush1.bf16.msra.mxu0 %v4779
        %5167 = vmatprep.subr.bf16.mxu0 0
        %5168 = vmatpush1.bf16.msra.mxu0 %v4780
        %5169 = vmatprep.subr.bf16.mxu0 0
        %5170 = vmatpush1.bf16.msra.mxu0 %v4781
        %5171 = vmatprep.subr.bf16.mxu0 0
        %5172 = vmatpush1.bf16.msra.mxu0 %v4782
        %5173 = vmatprep.subr.bf16.mxu0 0
        %5174 = vmatpush1.bf16.msra.mxu0 %v4783
        %5175 = vmatprep.subr.bf16.mxu0 0
        %5176 = vmatpush1.bf16.msra.mxu0 %v4784
        %5177 = vmatprep.mubr.bf16.mxu0 %v3912
        %5178 = vmatmul.mubr.bf16.gmra.mrb[0].mxu0 %v3911
        %v5179 = vpop.f32.mrb[0].mxu0
        %v5180 = vadd.f32 %v5140, %v5179
        %v5181 = vpop.f32.mrb[0].mxu0
        %v5182 = vpop.f32.mrb[0].mxu0
        %v5183 = vpop.f32.mrb[0].mxu0
        %5184 = vdwg.mxu0
        %5185 = vmatprep.subr.bf16.mxu0 0
        %5186 = vmatpush1.bf16.msra.mxu0 %v4785
        %5187 = vmatprep.subr.bf16.mxu0 0
        %5188 = vmatpush1.bf16.msra.mxu0 %v4786
        %5189 = vmatprep.subr.bf16.mxu0 0
        %5190 = vmatpush1.bf16.msra.mxu0 %v4787
        %5191 = vmatprep.subr.bf16.mxu0 0
        %5192 = vmatpush1.bf16.msra.mxu0 %v4788
        %5193 = vmatprep.subr.bf16.mxu0 0
        %5194 = vmatpush1.bf16.msra.mxu0 %v4789
        %5195 = vmatprep.subr.bf16.mxu0 0
        %5196 = vmatpush1.bf16.msra.mxu0 %v4790
        %5197 = vmatprep.subr.bf16.mxu0 0
        %5198 = vmatpush1.bf16.msra.mxu0 %v4791
        %5199 = vmatprep.subr.bf16.mxu0 0
        %5200 = vmatpush1.bf16.msra.mxu0 %v4792
        %5201 = vmatprep.subr.bf16.mxu0 0
        %5202 = vmatpush1.bf16.msra.mxu0 %v4793
        %5203 = vmatprep.subr.bf16.mxu0 0
        %5204 = vmatpush1.bf16.msra.mxu0 %v4794
        %5205 = vmatprep.subr.bf16.mxu0 0
        %5206 = vmatpush1.bf16.msra.mxu0 %v4795
        %5207 = vmatprep.subr.bf16.mxu0 0
        %5208 = vmatpush1.bf16.msra.mxu0 %v4796
        %5209 = vmatprep.subr.bf16.mxu0 0
        %5210 = vmatpush1.bf16.msra.mxu0 %v4797
        %5211 = vmatprep.subr.bf16.mxu0 0
        %5212 = vmatpush1.bf16.msra.mxu0 %v4798
        %5213 = vmatprep.subr.bf16.mxu0 0
        %5214 = vmatpush1.bf16.msra.mxu0 %v4799
        %5215 = vmatprep.subr.bf16.mxu0 0
        %5216 = vmatpush1.bf16.msra.mxu0 %v4800
        %5217 = vmatprep.mubr.bf16.mxu0 %v3914
        %5218 = vmatmul.mubr.bf16.gmra.mrb[0].mxu0 %v3913
        %v5219 = vpop.f32.mrb[0].mxu0
        %v5220 = vadd.f32 %v5180, %v5219
        %v5221 = vpop.f32.mrb[0].mxu0
        %v5222 = vpop.f32.mrb[0].mxu0
        %v5223 = vpop.f32.mrb[0].mxu0
        %5224 = vdwg.mxu0
        %5225 = vmatprep.subr.bf16.mxu0 0
        %5226 = vmatpush1.bf16.msra.mxu0 %v4801
        %5227 = vmatprep.subr.bf16.mxu0 0
        %5228 = vmatpush1.bf16.msra.mxu0 %v4802
        %5229 = vmatprep.subr.bf16.mxu0 0
        %5230 = vmatpush1.bf16.msra.mxu0 %v4803
        %5231 = vmatprep.subr.bf16.mxu0 0
        %5232 = vmatpush1.bf16.msra.mxu0 %v4804
        %5233 = vmatprep.subr.bf16.mxu0 0
        %5234 = vmatpush1.bf16.msra.mxu0 %v4805
        %5235 = vmatprep.subr.bf16.mxu0 0
        %5236 = vmatpush1.bf16.msra.mxu0 %v4806
        %5237 = vmatprep.subr.bf16.mxu0 0
        %5238 = vmatpush1.bf16.msra.mxu0 %v4807
        %5239 = vmatprep.subr.bf16.mxu0 0
        %5240 = vmatpush1.bf16.msra.mxu0 %v4808
        %5241 = vmatprep.subr.bf16.mxu0 0
        %5242 = vmatpush1.bf16.msra.mxu0 %v4809
        %5243 = vmatprep.subr.bf16.mxu0 0
        %5244 = vmatpush1.bf16.msra.mxu0 %v4810
        %5245 = vmatprep.subr.bf16.mxu0 0
        %5246 = vmatpush1.bf16.msra.mxu0 %v4811
        %5247 = vmatprep.subr.bf16.mxu0 0
        %5248 = vmatpush1.bf16.msra.mxu0 %v4812
        %5249 = vmatprep.subr.bf16.mxu0 0
        %5250 = vmatpush1.bf16.msra.mxu0 %v4813
        %5251 = vmatprep.subr.bf16.mxu0 0
        %5252 = vmatpush1.bf16.msra.mxu0 %v4814
        %5253 = vmatprep.subr.bf16.mxu0 0
        %5254 = vmatpush1.bf16.msra.mxu0 %v4815
        %5255 = vmatprep.subr.bf16.mxu0 0
        %5256 = vmatpush1.bf16.msra.mxu0 %v4816
        %5257 = vmatprep.mubr.bf16.mxu0 %v3916
        %5258 = vmatmul.mubr.bf16.gmra.mrb[0].mxu0 %v3915
        %v5259 = vpop.f32.mrb[0].mxu0
        %v5260 = vadd.f32 %v5220, %v5259
        %v5261 = vpop.f32.mrb[0].mxu0
        %v5262 = vpop.f32.mrb[0].mxu0
        %v5263 = vpop.f32.mrb[0].mxu0
        %5264 = vdwg.mxu0
        %v5265 = vadd.f32 %v5260, %v3276
        %v5266 = vsel %vm538, %v5265, 0.0
        %5267 = vadd.xlane.f32.xlu0 %v5266
        %v5268 = vpop.xlane.xlu0 %5267
        %v5269 = vmul.f32 %v5268, %v1836
        %v5270 = vsub.f32 %v5265, %v5269
        %v5271 = vmul.f32 %v5270, %v5270
        %v5272 = vsel %vm538, %v5271, 0.0
        %5273 = vadd.xlane.f32.xlu0 %v5272
        %v5274 = vpop.xlane.xlu0 %5273
        %v5275 = vmul.f32 %v5274, %v1836
        %v5276 = vadd.f32 %v5275, 1e-05
        %v5277 = vrsqrt.pop %v5276
        %v5278 = vmul.f32 %v5270, %v5277
        %v5279 = vlaneseq
        %v5280 = vshrl.u32 %v5279, 7
        %v5281 = vsub.s32 7, %v5280
        %v5282 = vrot.slane %v429, %v5281
        %v5283 = vmul.f32 %v5278, %v5282
        %v5284 = vlaneseq
        %v5285 = vshrl.u32 %v5284, 7
        %v5286 = vsub.s32 0, %v5285
        %v5287 = vrot.slane %v430, %v5286
        %v5288 = vadd.f32 %v5283, %v5287
        %5289 = vst.msk [vmem:[%s417] sm:$0xff] %vm538, %v5288
        %s5290 = sand.u32 %s296, 1
        %s5291 = scalar_lea.sflag [#allocation3], %s5290
        %s5292 = sand.u32 %s296, 1
        %s5293 = smul.addr %s5292, 8
        %s5294 = scalar_lea.vmem [#allocation2], %s5293
        // Predicated region
        $region69: #{tpu_custom_call.1} parent=67 // pred_check
          %p5295 = pneg %p306
        $region70: #{tpu_custom_call.1} parent=67 // pred_check_branch
          %5297 = sbr.rel (%p5295) target = $region72
        $region71: #{tpu_custom_call.1} parent=67 // pred_region
          %s5299 = ssub.s32 128, 128
          %5300 = vsyncadd %s5291, %s5299
          %s5301 = smul.addr %s26, 128
          %s5302 = scalar_lea.hbm %s12, %s5301
          %s5304 = sshll.u32 %s5294, 4
          %s5305 = int_to_ptr.vmem [resolvable:$true] %s5304
          %5307 = dma.vmem_to_hbm [thread:$0]  %s5305, 128, %s5302, %s5291
        $region72: #{tpu_custom_call.1} parent=67 // pred_fallthru
          _
      $region68: #{tpu_custom_call.1} parent=5 // pred_fallthru
        _
      %p5308 = scmp.le.s32.totalorder 2, %s21
      // Predicated region
      $region73: #{tpu_custom_call.1} parent=5 // pred_check
        %p5309 = pneg %p5308
      $region74: #{tpu_custom_call.1} parent=5 // pred_check_branch
        %5311 = sbr.rel (%p5309) target = $region76
      $region75: #{tpu_custom_call.1} parent=5 // pred_region
        %s5312 = ssub.s32 %s21, 2
        // Predicated region
        $region77: #{tpu_custom_call.1} parent=75 // pred_check
          %p5313 = pneg %p312
        $region78: #{tpu_custom_call.1} parent=75 // pred_check_branch
          %5315 = sbr.rel (%p5313) target = $region80
        $region79: #{tpu_custom_call.1} parent=75 // pred_region
          %s5316 = sand.u32 %s297, 1
          %s5317 = scalar_lea.sflag [#allocation3], %s5316
          %s5318 = sand.u32 %s297, 1
          %s5319 = smul.addr %s5318, 8
          %s5320 = scalar_lea.vmem [#allocation2], %s5319
          %5321 = dma.done %s5317, 128
        $region80: #{tpu_custom_call.1} parent=75 // pred_fallthru
          _
      $region76: #{tpu_custom_call.1} parent=5 // pred_fallthru
        _
    $region6: #{tpu_custom_call.1} parent=1 // loop_footer
      %s25 = sadd.s32 1, %s21
    $region7: #{tpu_custom_call.1} parent=1 // loop_footer_branch
      %20 = sbr.rel target = $region3
    $region8: #{tpu_custom_call.1} parent=1 // loop_exit
      _
    %5322 = vsyncpa [#allocation3], 1
    %s5323 = scalar_lea.sflag [#allocation3], 1
    %5324 = vsyncpa %s5323, 1

</llo_original>
